<compile_context>
chip_gen: v7x
topology: tpu7x:2x2x1
jax: 0.10.0
libtpu: 0.0.40
codegen_flags: <defaults>
</compile_context>

<pallas_src>
import functools
import math

import jax
import jax.numpy as jnp
from jax.experimental import pallas as pl
from jax.experimental.pallas import tpu as pltpu


# ----------------------------------------------------------------------------
# Helpers
# ----------------------------------------------------------------------------
def _round_up(x, m):
    return ((x + m - 1) // m) * m


def _pick_block(dim, target, align):
    """Largest divisor of `dim` that is <= target and a multiple of `align`.

    Falls back to the full dimension (always legal for a BlockSpec)."""
    if dim <= target:
        return dim
    t = (min(target, dim) // align) * align
    while t >= align:
        if dim % t == 0:
            return t
        t -= align
    return dim


@functools.lru_cache(maxsize=None)
def _vmem_limit_bytes():
    """Generation-aware per-kernel VMEM budget (~60% of physical, capped)."""
    cap = 128 * 1024 * 1024
    try:
        cap = int(getattr(pltpu.get_tpu_info(), "vmem_capacity_bytes", cap))
    except Exception:
        pass
    return int(max(32 * 1024 * 1024, min(int(0.6 * cap), 96 * 1024 * 1024)))


# ----------------------------------------------------------------------------
# Tiled linear:  o = act(x @ w + b)
# ----------------------------------------------------------------------------
def _linear_kernel(x_ref, w_ref, b_ref, o_ref, acc_ref, *, activation):
    @pl.when(pl.program_id(2) == 0)
    def _():
        acc_ref[...] = jnp.zeros_like(acc_ref)

    acc_ref[...] += jnp.dot(
        x_ref[...].astype(jnp.bfloat16),
        w_ref[...].astype(jnp.bfloat16),
        preferred_element_type=jnp.float32,
    )

    @pl.when(pl.program_id(2) == pl.num_programs(2) - 1)
    def _():
        y = acc_ref[...] + b_ref[...].astype(jnp.float32)
        if activation == "relu":
            y = jnp.maximum(y, 0.0)
        o_ref[...] = y.astype(o_ref.dtype)


def pallas_linear(x, w, b, activation=None, out_dtype=None,
                  tm=512, tn=256, tk=512):
    M, K = x.shape
    K2, N = w.shape
    assert K == K2, (x.shape, w.shape)
    out_dtype = out_dtype or x.dtype
    bm = _pick_block(M, tm, 8)
    bn = _pick_block(N, tn, 128)
    bk = _pick_block(K, tk, 128)
    grid = (M // bm, N // bn, K // bk)
    kernel = functools.partial(_linear_kernel, activation=activation)
    return pl.pallas_call(
        kernel,
        out_shape=jax.ShapeDtypeStruct((M, N), out_dtype),
        grid=grid,
        in_specs=[
            pl.BlockSpec((bm, bk), lambda i, j, k: (i, k)),
            pl.BlockSpec((bk, bn), lambda i, j, k: (k, j)),
            pl.BlockSpec((1, bn), lambda i, j, k: (0, j)),
        ],
        out_specs=pl.BlockSpec((bm, bn), lambda i, j, k: (i, j)),
        scratch_shapes=[pltpu.VMEM((bm, bn), jnp.float32)],
        compiler_params=pltpu.CompilerParams(
            dimension_semantics=("parallel", "parallel", "arbitrary"),
            vmem_limit_bytes=_vmem_limit_bytes(),
        ),
    )(x, w, b.reshape(1, N))


# ----------------------------------------------------------------------------
# Fused linear + bias + residual + LayerNorm  (used for out_proj + LN1)
# Grid: (row tiles, K reduction blocks); full E width kept per row tile so the
# LayerNorm statistics can be computed in the finalize branch.
# ----------------------------------------------------------------------------
def _linear_add_ln_kernel(x_ref, w_ref, b_ref, r_ref, g_ref, bb_ref,
                          o_ref, acc_ref, *, eps):
    k = pl.program_id(1)

    @pl.when(k == 0)
    def _():
        acc_ref[...] = jnp.zeros_like(acc_ref)

    acc_ref[...] += jnp.dot(
        x_ref[...].astype(jnp.bfloat16),
        w_ref[...].astype(jnp.bfloat16),
        preferred_element_type=jnp.float32,
    )

    @pl.when(k == pl.num_programs(1) - 1)
    def _():
        y = (acc_ref[...] + b_ref[...].astype(jnp.float32)
             + r_ref[...].astype(jnp.float32))                 # residual
        mu = jnp.mean(y, axis=-1, keepdims=True)
        var = jnp.mean((y - mu) ** 2, axis=-1, keepdims=True)
        y = (y - mu) * jax.lax.rsqrt(var + eps)
        o_ref[...] = (y * g_ref[...].astype(jnp.float32)
                      + bb_ref[...].astype(jnp.float32)).astype(o_ref.dtype)


def pallas_linear_add_layernorm(x, w, b, res, gamma, beta, eps=1e-5,
                                tm=256, tk=512, out_dtype=jnp.bfloat16):
    M, K = x.shape
    K2, N = w.shape
    assert K == K2 and res.shape == (M, N)
    bm = _pick_block(M, tm, 8)
    bk = _pick_block(K, tk, 128)
    grid = (M // bm, K // bk)
    return pl.pallas_call(
        functools.partial(_linear_add_ln_kernel, eps=eps),
        out_shape=jax.ShapeDtypeStruct((M, N), out_dtype),
        grid=grid,
        in_specs=[
            pl.BlockSpec((bm, bk), lambda i, k: (i, k)),
            pl.BlockSpec((bk, N), lambda i, k: (k, 0)),
            pl.BlockSpec((1, N), lambda i, k: (0, 0)),
            pl.BlockSpec((bm, N), lambda i, k: (i, 0)),    # residual
            pl.BlockSpec((1, N), lambda i, k: (0, 0)),
            pl.BlockSpec((1, N), lambda i, k: (0, 0)),
        ],
        out_specs=pl.BlockSpec((bm, N), lambda i, k: (i, 0)),
        scratch_shapes=[pltpu.VMEM((bm, N), jnp.float32)],
        compiler_params=pltpu.CompilerParams(
            dimension_semantics=("parallel", "arbitrary"),
            vmem_limit_bytes=_vmem_limit_bytes(),
        ),
    )(x, w, b.reshape(1, N), res, gamma.reshape(1, N), beta.reshape(1, N))


# ----------------------------------------------------------------------------
# Fused FFN (lin1 + ReLU + lin2) + residual + LayerNorm2
# Grid: (row tiles, FF reduction blocks); hidden activation never hits HBM.
# ----------------------------------------------------------------------------
def _ffn_ln_kernel(x_ref, w1_ref, b1_ref, w2_ref, b2_ref, g_ref, bb_ref,
                   o_ref, acc_ref, *, eps):
    f = pl.program_id(1)

    @pl.when(f == 0)
    def _():
        acc_ref[...] = jnp.zeros_like(acc_ref)

    xb = x_ref[...]
    h = jnp.dot(xb.astype(jnp.bfloat16), w1_ref[...],
                preferred_element_type=jnp.float32)
    h = jnp.maximum(h + b1_ref[...].astype(jnp.float32), 0.0)
    acc_ref[...] += jnp.dot(h.astype(jnp.bfloat16), w2_ref[...],
                            preferred_element_type=jnp.float32)

    @pl.when(f == pl.num_programs(1) - 1)
    def _():
        y = acc_ref[...] + b2_ref[...].astype(jnp.float32) \
            + xb.astype(jnp.float32)                       # residual (post-norm)
        mu = jnp.mean(y, axis=-1, keepdims=True)
        var = jnp.mean((y - mu) ** 2, axis=-1, keepdims=True)
        y = (y - mu) * jax.lax.rsqrt(var + eps)
        o_ref[...] = (y * g_ref[...].astype(jnp.float32)
                      + bb_ref[...].astype(jnp.float32)).astype(o_ref.dtype)


def pallas_ffn_layernorm(x, w1, b1, w2, b2, gamma, beta, eps=1e-5,
                         tm=256, tf=512, out_dtype=jnp.bfloat16):
    M, E = x.shape
    E2, F = w1.shape
    assert E == E2
    bm = _pick_block(M, tm, 8)
    bf = _pick_block(F, tf, 128)
    grid = (M // bm, F // bf)
    return pl.pallas_call(
        functools.partial(_ffn_ln_kernel, eps=eps),
        out_shape=jax.ShapeDtypeStruct((M, E), out_dtype),
        grid=grid,
        in_specs=[
            pl.BlockSpec((bm, E), lambda i, f: (i, 0)),
            pl.BlockSpec((E, bf), lambda i, f: (0, f)),
            pl.BlockSpec((1, bf), lambda i, f: (0, f)),
            pl.BlockSpec((bf, E), lambda i, f: (f, 0)),
            pl.BlockSpec((1, E), lambda i, f: (0, 0)),
            pl.BlockSpec((1, E), lambda i, f: (0, 0)),
            pl.BlockSpec((1, E), lambda i, f: (0, 0)),
        ],
        out_specs=pl.BlockSpec((bm, E), lambda i, f: (i, 0)),
        scratch_shapes=[pltpu.VMEM((bm, E), jnp.float32)],
        compiler_params=pltpu.CompilerParams(
            dimension_semantics=("parallel", "arbitrary"),
            vmem_limit_bytes=_vmem_limit_bytes(),
        ),
    )(x, w1, b1.reshape(1, F), w2, b2.reshape(1, E),
      gamma.reshape(1, E), beta.reshape(1, E))


# ----------------------------------------------------------------------------
# Flash-style attention.
# qkv5 has layout (3, B, H, S_att, D), bf16, q already scaled by 1/sqrt(D).
# Grid = (B, H, q_tiles, kv_tiles); kv axis is the online-softmax reduction.
# Padded key positions (>= s_real) are masked out of the softmax.
# ----------------------------------------------------------------------------
def _flash_attn_kernel(q_ref, k_ref, v_ref, o_ref, m_sc, l_sc, acc_sc,
                       *, s_real, s_att, tkv):
    ki = pl.program_id(3)

    @pl.when(ki == 0)
    def _():
        m_sc[...] = jnp.full_like(m_sc, -jnp.inf)
        l_sc[...] = jnp.zeros_like(l_sc)
        acc_sc[...] = jnp.zeros_like(acc_sc)

    q = q_ref[...]                                   # (tq, D) bf16, pre-scaled
    k = k_ref[...]                                   # (tkv, D) bf16
    s = jax.lax.dot_general(q, k, (((1,), (1,)), ((), ())),
                            preferred_element_type=jnp.float32)   # (tq, tkv) f32
    if s_real < s_att:
        col = ki * tkv + jax.lax.broadcasted_iota(jnp.int32, (1, tkv), 1)
        s = jnp.where(col < s_real, s, -1e30)

    m_prev = m_sc[...]
    m_new = jnp.maximum(m_prev, jnp.max(s, axis=-1, keepdims=True))
    alpha = jnp.exp(m_prev - m_new)
    p = jnp.exp(s - m_new)
    l_sc[...] = alpha * l_sc[...] + jnp.sum(p, axis=-1, keepdims=True)
    acc_sc[...] = alpha * acc_sc[...] + jnp.dot(
        p.astype(jnp.bfloat16), v_ref[...], preferred_element_type=jnp.float32)
    m_sc[...] = m_new

    @pl.when(ki == pl.num_programs(3) - 1)
    def _():
        o_ref[...] = (acc_sc[...] *
                      pl.reciprocal(l_sc[...], approx=True)).astype(o_ref.dtype)


def pallas_flash_attention(qkv5, num_heads, s_real, out_dtype=jnp.bfloat16,
                           tq_target=256, tkv_target=128):
    three, B, H, S_att, D = qkv5.shape
    assert three == 3 and H == num_heads
    tq = _pick_block(S_att, tq_target, 8)
    tkv = _pick_block(S_att, tkv_target, 8)
    grid = (B, H, S_att // tq, S_att // tkv)
    kernel = functools.partial(_flash_attn_kernel,
                               s_real=s_real, s_att=S_att, tkv=tkv)
    return pl.pallas_call(
        kernel,
        out_shape=jax.ShapeDtypeStruct((B, H, S_att, D), out_dtype),
        grid=grid,
        in_specs=[
            pl.BlockSpec((None, None, None, tq, D),
                         lambda b, h, qi, ki: (0, b, h, qi, 0)),
            pl.BlockSpec((None, None, None, tkv, D),
                         lambda b, h, qi, ki: (1, b, h, ki, 0)),
            pl.BlockSpec((None, None, None, tkv, D),
                         lambda b, h, qi, ki: (2, b, h, ki, 0)),
        ],
        out_specs=pl.BlockSpec((None, None, tq, D),
                               lambda b, h, qi, ki: (b, h, qi, 0)),
        scratch_shapes=[
            pltpu.VMEM((tq, 1), jnp.float32),      # running max m
            pltpu.VMEM((tq, 1), jnp.float32),      # running denom l
            pltpu.VMEM((tq, D), jnp.float32),      # output accumulator
        ],
        compiler_params=pltpu.CompilerParams(
            dimension_semantics=("parallel", "parallel", "parallel", "arbitrary"),
            vmem_limit_bytes=_vmem_limit_bytes(),
        ),
    )(qkv5, qkv5, qkv5)


# ----------------------------------------------------------------------------
# Transformer encoder layer (PyTorch TransformerEncoderLayer, norm_first=False,
# activation=relu; eval mode => dropout is identity)
# ----------------------------------------------------------------------------
def transformer_layer(x2d, p, num_heads, B, s_pad, s_att, s_real):
    E = x2d.shape[1]
    H = num_heads
    D = E // H

    # --- self-attention block ------------------------------------------------
    qkv = pallas_linear(x2d, p["in_proj_w"], p["in_proj_b"],
                        out_dtype=jnp.bfloat16, tn=512)        # (B*S_pad, 3E)
    qkv = qkv.reshape(B, s_pad, 3, H, D)
    if s_att > s_pad:                                          # attention-only pad
        qkv = jnp.pad(qkv, ((0, 0), (0, s_att - s_pad), (0, 0), (0, 0), (0, 0)))
    qkv = qkv.transpose(2, 0, 3, 1, 4)                         # (3, B, H, S_att, D)

    attn = pallas_flash_attention(qkv, H, s_real)              # (B, H, S_att, D)
    attn = (attn[:, :, :s_pad, :]
            .transpose(0, 2, 1, 3)
            .reshape(B * s_pad, E))

    # --- out_proj + residual + LayerNorm1 (fused) ----------------------------
    # TODO(synk): dropout1/dropout2/dropout of nn.TransformerEncoderLayer are
    # identity at inference and are intentionally omitted.
    x1 = pallas_linear_add_layernorm(attn, p["out_proj_w"], p["out_proj_b"],
                                     x2d, p["ln1_g"], p["ln1_b"])

    # --- feed-forward + residual + LayerNorm2 (fused) -------------------------
    x2 = pallas_ffn_layernorm(x1, p["lin1_w"], p["lin1_b"],
                              p["lin2_w"], p["lin2_b"],
                              p["ln2_g"], p["ln2_b"])
    return x2


# ----------------------------------------------------------------------------
# Full ViTBottleneck forward
# ----------------------------------------------------------------------------
def vit_bottleneck_forward(x, params, *, patch_size, emb_dim, num_heads):
    B, C, H, W = x.shape
    P, E = patch_size, emb_dim
    Hp, Wp = H // P, W // P
    Np = Hp * Wp
    S_real = Np + 1
    assert S_real <= params["pos_embed"].shape[1], "pos_embed too small"
    S_pad = _round_up(S_real, 8)                 # linear/FFN/LN path (rows)
    S_att = S_pad if S_pad <= 128 else _round_up(S_real, 128)  # attention only

    # --- proj: Conv2d(C, E, P, stride=P)  ==  per-patch matmul --------------
    patches = (
        x.reshape(B, C, Hp, P, Wp, P)
        .transpose(0, 2, 4, 1, 3, 5)
        .reshape(B * Np, C * P * P)
        .astype(jnp.bfloat16)
    )
    tokens = pallas_linear(patches, params["proj_w"], params["proj_b"],
                           out_dtype=jnp.bfloat16)
    tokens = tokens.reshape(B, Np, E)

    # --- cls token + positional embedding + pad to S_pad --------------------
    cls = jnp.broadcast_to(params["cls_token"].astype(jnp.float32), (B, 1, E))
    xseq = jnp.concatenate([cls, tokens.astype(jnp.float32)], axis=1)
    xseq = xseq + params["pos_embed"][:, :S_real, :]
    xseq = jnp.pad(xseq, ((0, 0), (0, S_pad - S_real), (0, 0)))
    xseq = xseq.astype(jnp.bfloat16)             # bf16 activation stream

    # --- transformer encoder -------------------------------------------------
    x2d = xseq.reshape(B * S_pad, E)
    for lp in params["layers"]:
        x2d = transformer_layer(x2d, lp, num_heads, B, S_pad, S_att, S_real)
    xseq = x2d.reshape(B, S_pad, E)

    # --- drop cls + padding, reconstruct: ConvTranspose2d(E, C, P, stride=P) -
    tok = xseq[:, 1:S_real, :].reshape(B * Np, E)
    y = pallas_linear(tok, params["rec_w"], params["rec_b"],
                      out_dtype=jnp.float32)     # (B*Np, C*P*P)
    y = (
        y.reshape(B, Hp, Wp, C, P, P)
        .transpose(0, 3, 1, 4, 2, 5)
        .reshape(B, C, H, W)
    )
    return y


# ----------------------------------------------------------------------------
# Deterministic parameter initialization.
# Weights are stored pre-transposed / pre-flattened into the layouts the Pallas
# matmul kernels consume and cast to bf16 for the MXU (biases / LN stay f32).
# The 1/sqrt(head_dim) attention scale is baked into the q columns of
# in_proj_w / in_proj_b so the attention kernel never scales scores.
# ----------------------------------------------------------------------------
def init_params(key, *, in_channels, patch_size, emb_dim, ff_dim, depth,
                num_heads, max_seq=1025):
    C, P, E = in_channels, patch_size, emb_dim
    CPP = C * P * P
    D = E // num_heads
    q_scale = 1.0 / math.sqrt(D)
    keys = jax.random.split(key, 4 + depth)

    def nrm(k, shape, scale=0.02):
        return (scale * jax.random.normal(k, shape)).astype(jnp.float32)

    proj_w = nrm(keys[0], (E, C, P, P))      # PyTorch Conv2d weight layout
    rec_w = nrm(keys[3], (E, C, P, P))       # PyTorch ConvTranspose2d weight
    rec_b = jnp.zeros((C,), jnp.float32)

    params = {
        "proj_w": proj_w.reshape(E, CPP).T.astype(jnp.bfloat16),  # (CPP, E)
        "proj_b": jnp.zeros((E,), jnp.float32),
        "cls_token": nrm(keys[1], (1, 1, E), scale=1.0),
        "pos_embed": nrm(keys[2], (1, max_seq, E), scale=1.0),
        "rec_w": rec_w.reshape(E, CPP).astype(jnp.bfloat16),      # (E, CPP)
        "rec_b": jnp.repeat(rec_b, P * P),                        # (CPP,)
        "layers": [],
    }
    for d in range(depth):
        lk = jax.random.split(keys[4 + d], 4)
        in_proj_w = nrm(lk[0], (3 * E, E)).T                      # (E, 3E)
        in_proj_w = in_proj_w.at[:, :E].multiply(q_scale)         # bake q scale
        in_proj_b = jnp.zeros((3 * E,), jnp.float32)
        in_proj_b = in_proj_b.at[:E].multiply(q_scale)
        params["layers"].append({
            "in_proj_w": in_proj_w.astype(jnp.bfloat16),                 # (E,3E)
            "in_proj_b": in_proj_b,
            "out_proj_w": nrm(lk[1], (E, E)).T.astype(jnp.bfloat16),     # (E,E)
            "out_proj_b": jnp.zeros((E,), jnp.float32),
            "ln1_g": jnp.ones((E,), jnp.float32),
            "ln1_b": jnp.zeros((E,), jnp.float32),
            "ln2_g": jnp.ones((E,), jnp.float32),
            "ln2_b": jnp.zeros((E,), jnp.float32),
            "lin1_w": nrm(lk[2], (ff_dim, E)).T.astype(jnp.bfloat16),    # (E,FF)
            "lin1_b": jnp.zeros((ff_dim,), jnp.float32),
            "lin2_w": nrm(lk[3], (E, ff_dim)).T.astype(jnp.bfloat16),    # (FF,E)
            "lin2_b": jnp.zeros((E,), jnp.float32),
        })
    return params


# ----------------------------------------------------------------------------
if __name__ == "__main__":
    # Small synthetic configuration (module defaults 512/8/1024/8/4 scaled
    # down; dim_feedforward scaled from PyTorch's default 2048 accordingly).
    B, C, H, W = 2, 4, 16, 16
    PATCH = 4
    EMB = 32
    HEADS = 4
    DEPTH = 2
    FF = 64

    key = jax.random.PRNGKey(0)
    pkey, xkey = jax.random.split(key)
    params = init_params(pkey, in_channels=C, patch_size=PATCH, emb_dim=EMB,
                         ff_dim=FF, depth=DEPTH, num_heads=HEADS)
    x = jax.random.normal(xkey, (B, C, H, W), dtype=jnp.float32)

    fwd = jax.jit(functools.partial(vit_bottleneck_forward,
                                    patch_size=PATCH, emb_dim=EMB,
                                    num_heads=HEADS))
    out = fwd(x, params)
    jax.block_until_ready(out)
    assert out.shape == (B, C, H, W), out.shape
    assert bool(jnp.all(jnp.isfinite(out)))
    print("KERNEL_OK")
</pallas_src>

<mosaic_0001>
module attributes {stable_mosaic.version = 11 : i64} {
  func.func @_linear_kernel(%arg0: i32, %arg1: i32, %arg2: i32, %arg3: memref<32x64xbf16, #tpu.memory_space<vmem>>, %arg4: memref<64x32xbf16, #tpu.memory_space<vmem>>, %arg5: memref<1x32xf32, #tpu.memory_space<vmem>>, %arg6: memref<32x32xbf16, #tpu.memory_space<vmem>>, %arg7: memref<32x32xf32, #tpu.memory_space<vmem>>) attributes {dimension_semantics = [#tpu.dimension_semantics<parallel>, #tpu.dimension_semantics<parallel>, #tpu.dimension_semantics<arbitrary>], iteration_bounds = array<i64: 1, 1, 1>, scalar_prefetch = 0 : i64, scratch_operands = 1 : i64, tpu.core_type = #tpu.core_type<tc>, window_params = [{transform_indices = @transform_0, window_bounds = array<i64: 32, 64>}, {transform_indices = @transform_1, window_bounds = array<i64: 64, 32>}, {transform_indices = @transform_2, window_bounds = array<i64: 1, 32>}, {transform_indices = @transform_3, window_bounds = array<i64: 32, 32>}]} {
    %c0_i32 = arith.constant 0 : i32
    %0 = arith.cmpi eq, %arg2, %c0_i32 : i32
    %1 = arith.extui %0 : i1 to i32
    %c0_i32_0 = arith.constant 0 : i32
    %2 = arith.cmpi ne, %1, %c0_i32_0 : i32
    scf.if %2 {
      %cst_10 = arith.constant 0.000000e+00 : f32
      %12 = vector.broadcast %cst_10 : f32 to vector<32x32xf32>
      %c0_11 = arith.constant 0 : index
      %c0_12 = arith.constant 0 : index
      %13 = vector.load %arg7[%c0_11, %c0_12] : memref<32x32xf32, #tpu.memory_space<vmem>>, vector<32x32xf32>
      tpu.vector_store %arg7[%c0_11, %c0_12], %12 {strides = array<i32>} : memref<32x32xf32, #tpu.memory_space<vmem>>, vector<32x32xf32>,
    } else {
    }
    %c0 = arith.constant 0 : index
    %c0_1 = arith.constant 0 : index
    %3 = vector.load %arg7[%c0, %c0_1] : memref<32x32xf32, #tpu.memory_space<vmem>>, vector<32x32xf32>
    %c0_2 = arith.constant 0 : index
    %c0_3 = arith.constant 0 : index
    %4 = vector.load %arg3[%c0_2, %c0_3] : memref<32x64xbf16, #tpu.memory_space<vmem>>, vector<32x64xbf16>
    %c0_4 = arith.constant 0 : index
    %c0_5 = arith.constant 0 : index
    %5 = vector.load %arg4[%c0_4, %c0_5] : memref<64x32xbf16, #tpu.memory_space<vmem>>, vector<64x32xbf16>
    %cst = arith.constant dense<0.000000e+00> : vector<32x32xf32>
    %6 = tpu.matmul %4, %5, %cst {dimension_numbers = #tpu.dot_dimension_numbers<[1], [0], [0], [1], [0, 0, 1, 1], [], []>} : vector<32x64xbf16>, vector<64x32xbf16>, vector<32x32xf32> -> vector<32x32xf32>
    %7 = arith.addf %3, %6 : vector<32x32xf32>
    %c0_6 = arith.constant 0 : index
    %c0_7 = arith.constant 0 : index
    %8 = vector.load %arg7[%c0_6, %c0_7] : memref<32x32xf32, #tpu.memory_space<vmem>>, vector<32x32xf32>
    tpu.vector_store %arg7[%c0_6, %c0_7], %7 {strides = array<i32>} : memref<32x32xf32, #tpu.memory_space<vmem>>, vector<32x32xf32>,
    %c0_i32_8 = arith.constant 0 : i32
    %9 = arith.cmpi eq, %arg2, %c0_i32_8 : i32
    %10 = arith.extui %9 : i1 to i32
    %c0_i32_9 = arith.constant 0 : i32
    %11 = arith.cmpi ne, %10, %c0_i32_9 : i32
    scf.if %11 {
      %c0_10 = arith.constant 0 : index
      %c0_11 = arith.constant 0 : index
      %12 = vector.load %arg7[%c0_10, %c0_11] : memref<32x32xf32, #tpu.memory_space<vmem>>, vector<32x32xf32>
      %c0_12 = arith.constant 0 : index
      %c0_13 = arith.constant 0 : index
      %13 = vector.load %arg5[%c0_12, %c0_13] : memref<1x32xf32, #tpu.memory_space<vmem>>, vector<1x32xf32>
      %14 = vector.broadcast %13 : vector<1x32xf32> to vector<32x32xf32>
      %15 = arith.addf %12, %14 : vector<32x32xf32>
      %16 = arith.truncf %15 : vector<32x32xf32> to vector<32x32xbf16>
      %c0_14 = arith.constant 0 : index
      %c0_15 = arith.constant 0 : index
      %17 = vector.load %arg6[%c0_14, %c0_15] : memref<32x32xbf16, #tpu.memory_space<vmem>>, vector<32x32xbf16>
      tpu.vector_store %arg6[%c0_14, %c0_15], %16 {strides = array<i32>} : memref<32x32xbf16, #tpu.memory_space<vmem>>, vector<32x32xbf16>,
    } else {
    }
    return
  }
  func.func @transform_0(%arg0: i32, %arg1: i32, %arg2: i32) -> (i32, i32) {
    %c0_i32 = arith.constant 0 : i32
    return %arg0, %arg2 : i32, i32
  }
  func.func @transform_1(%arg0: i32, %arg1: i32, %arg2: i32) -> (i32, i32) {
    %c0_i32 = arith.constant 0 : i32
    return %arg2, %arg1 : i32, i32
  }
  func.func @transform_2(%arg0: i32, %arg1: i32, %arg2: i32) -> (i32, i32) {
    %c0_i32 = arith.constant 0 : i32
    %c0_i32_0 = arith.constant 0 : i32
    return %c0_i32, %arg1 : i32, i32
  }
  func.func @transform_3(%arg0: i32, %arg1: i32, %arg2: i32) -> (i32, i32) {
    %c0_i32 = arith.constant 0 : i32
    return %arg0, %arg1 : i32, i32
  }
}

module attributes {stable_mosaic.version = 11 : i64} {
  func.func @_linear_kernel(%arg0: i32, %arg1: i32, %arg2: i32, %arg3: memref<48x32xbf16, #tpu.memory_space<vmem>>, %arg4: memref<32x96xbf16, #tpu.memory_space<vmem>>, %arg5: memref<1x96xf32, #tpu.memory_space<vmem>>, %arg6: memref<48x96xbf16, #tpu.memory_space<vmem>>, %arg7: memref<48x96xf32, #tpu.memory_space<vmem>>) attributes {dimension_semantics = [#tpu.dimension_semantics<parallel>, #tpu.dimension_semantics<parallel>, #tpu.dimension_semantics<arbitrary>], iteration_bounds = array<i64: 1, 1, 1>, scalar_prefetch = 0 : i64, scratch_operands = 1 : i64, tpu.core_type = #tpu.core_type<tc>, window_params = [{transform_indices = @transform_0, window_bounds = array<i64: 48, 32>}, {transform_indices = @transform_1, window_bounds = array<i64: 32, 96>}, {transform_indices = @transform_2, window_bounds = array<i64: 1, 96>}, {transform_indices = @transform_3, window_bounds = array<i64: 48, 96>}]} {
    %c0_i32 = arith.constant 0 : i32
    %0 = arith.cmpi eq, %arg2, %c0_i32 : i32
    %1 = arith.extui %0 : i1 to i32
    %c0_i32_0 = arith.constant 0 : i32
    %2 = arith.cmpi ne, %1, %c0_i32_0 : i32
    scf.if %2 {
      %cst_10 = arith.constant 0.000000e+00 : f32
      %12 = vector.broadcast %cst_10 : f32 to vector<48x96xf32>
      %c0_11 = arith.constant 0 : index
      %c0_12 = arith.constant 0 : index
      %13 = vector.load %arg7[%c0_11, %c0_12] : memref<48x96xf32, #tpu.memory_space<vmem>>, vector<48x96xf32>
      tpu.vector_store %arg7[%c0_11, %c0_12], %12 {strides = array<i32>} : memref<48x96xf32, #tpu.memory_space<vmem>>, vector<48x96xf32>,
    } else {
    }
    %c0 = arith.constant 0 : index
    %c0_1 = arith.constant 0 : index
    %3 = vector.load %arg7[%c0, %c0_1] : memref<48x96xf32, #tpu.memory_space<vmem>>, vector<48x96xf32>
    %c0_2 = arith.constant 0 : index
    %c0_3 = arith.constant 0 : index
    %4 = vector.load %arg3[%c0_2, %c0_3] : memref<48x32xbf16, #tpu.memory_space<vmem>>, vector<48x32xbf16>
    %c0_4 = arith.constant 0 : index
    %c0_5 = arith.constant 0 : index
    %5 = vector.load %arg4[%c0_4, %c0_5] : memref<32x96xbf16, #tpu.memory_space<vmem>>, vector<32x96xbf16>
    %cst = arith.constant dense<0.000000e+00> : vector<48x96xf32>
    %6 = tpu.matmul %4, %5, %cst {dimension_numbers = #tpu.dot_dimension_numbers<[1], [0], [0], [1], [0, 0, 1, 1], [], []>} : vector<48x32xbf16>, vector<32x96xbf16>, vector<48x96xf32> -> vector<48x96xf32>
    %7 = arith.addf %3, %6 : vector<48x96xf32>
    %c0_6 = arith.constant 0 : index
    %c0_7 = arith.constant 0 : index
    %8 = vector.load %arg7[%c0_6, %c0_7] : memref<48x96xf32, #tpu.memory_space<vmem>>, vector<48x96xf32>
    tpu.vector_store %arg7[%c0_6, %c0_7], %7 {strides = array<i32>} : memref<48x96xf32, #tpu.memory_space<vmem>>, vector<48x96xf32>,
    %c0_i32_8 = arith.constant 0 : i32
    %9 = arith.cmpi eq, %arg2, %c0_i32_8 : i32
    %10 = arith.extui %9 : i1 to i32
    %c0_i32_9 = arith.constant 0 : i32
    %11 = arith.cmpi ne, %10, %c0_i32_9 : i32
    scf.if %11 {
      %c0_10 = arith.constant 0 : index
      %c0_11 = arith.constant 0 : index
      %12 = vector.load %arg7[%c0_10, %c0_11] : memref<48x96xf32, #tpu.memory_space<vmem>>, vector<48x96xf32>
      %c0_12 = arith.constant 0 : index
      %c0_13 = arith.constant 0 : index
      %13 = vector.load %arg5[%c0_12, %c0_13] : memref<1x96xf32, #tpu.memory_space<vmem>>, vector<1x96xf32>
      %14 = vector.broadcast %13 : vector<1x96xf32> to vector<48x96xf32>
      %15 = arith.addf %12, %14 : vector<48x96xf32>
      %16 = arith.truncf %15 : vector<48x96xf32> to vector<48x96xbf16>
      %c0_14 = arith.constant 0 : index
      %c0_15 = arith.constant 0 : index
      %17 = vector.load %arg6[%c0_14, %c0_15] : memref<48x96xbf16, #tpu.memory_space<vmem>>, vector<48x96xbf16>
      tpu.vector_store %arg6[%c0_14, %c0_15], %16 {strides = array<i32>} : memref<48x96xbf16, #tpu.memory_space<vmem>>, vector<48x96xbf16>,
    } else {
    }
    return
  }
  func.func @transform_0(%arg0: i32, %arg1: i32, %arg2: i32) -> (i32, i32) {
    %c0_i32 = arith.constant 0 : i32
    return %arg0, %arg2 : i32, i32
  }
  func.func @transform_1(%arg0: i32, %arg1: i32, %arg2: i32) -> (i32, i32) {
    %c0_i32 = arith.constant 0 : i32
    return %arg2, %arg1 : i32, i32
  }
  func.func @transform_2(%arg0: i32, %arg1: i32, %arg2: i32) -> (i32, i32) {
    %c0_i32 = arith.constant 0 : i32
    %c0_i32_0 = arith.constant 0 : i32
    return %c0_i32, %arg1 : i32, i32
  }
  func.func @transform_3(%arg0: i32, %arg1: i32, %arg2: i32) -> (i32, i32) {
    %c0_i32 = arith.constant 0 : i32
    return %arg0, %arg1 : i32, i32
  }
}

module attributes {stable_mosaic.version = 11 : i64} {
  func.func @_flash_attn_kernel(%arg0: i32, %arg1: i32, %arg2: i32, %arg3: i32, %arg4: memref<1x1x1x24x8xbf16, #tpu.memory_space<vmem>>, %arg5: memref<1x1x1x24x8xbf16, #tpu.memory_space<vmem>>, %arg6: memref<1x1x1x24x8xbf16, #tpu.memory_space<vmem>>, %arg7: memref<1x1x24x8xbf16, #tpu.memory_space<vmem>>, %arg8: memref<24x1xf32, #tpu.memory_space<vmem>>, %arg9: memref<24x1xf32, #tpu.memory_space<vmem>>, %arg10: memref<24x8xf32, #tpu.memory_space<vmem>>) attributes {dimension_semantics = [#tpu.dimension_semantics<parallel>, #tpu.dimension_semantics<parallel>, #tpu.dimension_semantics<parallel>, #tpu.dimension_semantics<arbitrary>], iteration_bounds = array<i64: 2, 4, 1, 1>, scalar_prefetch = 0 : i64, scratch_operands = 3 : i64, tpu.core_type = #tpu.core_type<tc>, window_params = [{transform_indices = @transform_0, window_bounds = array<i64: 1, 1, 1, 24, 8>}, {transform_indices = @transform_1, window_bounds = array<i64: 1, 1, 1, 24, 8>}, {transform_indices = @transform_2, window_bounds = array<i64: 1, 1, 1, 24, 8>}, {transform_indices = @transform_3, window_bounds = array<i64: 1, 1, 24, 8>}]} {
    %c0_i32 = arith.constant 0 : i32
    %0 = arith.cmpi eq, %arg3, %c0_i32 : i32
    %1 = arith.extui %0 : i1 to i32
    %c0_i32_0 = arith.constant 0 : i32
    %2 = arith.cmpi ne, %1, %c0_i32_0 : i32
    scf.if %2 {
      %cst_33 = arith.constant 0xFF800000 : f32
      %46 = vector.broadcast %cst_33 : f32 to vector<24x1xf32>
      %c0_34 = arith.constant 0 : index
      %c0_35 = arith.constant 0 : index
      %47 = vector.load %arg8[%c0_34, %c0_35] : memref<24x1xf32, #tpu.memory_space<vmem>>, vector<24x1xf32>
      tpu.vector_store %arg8[%c0_34, %c0_35], %46 {strides = array<i32>} : memref<24x1xf32, #tpu.memory_space<vmem>>, vector<24x1xf32>,
      %cst_36 = arith.constant 0.000000e+00 : f32
      %48 = vector.broadcast %cst_36 : f32 to vector<24x1xf32>
      %c0_37 = arith.constant 0 : index
      %c0_38 = arith.constant 0 : index
      %49 = vector.load %arg9[%c0_37, %c0_38] : memref<24x1xf32, #tpu.memory_space<vmem>>, vector<24x1xf32>
      tpu.vector_store %arg9[%c0_37, %c0_38], %48 {strides = array<i32>} : memref<24x1xf32, #tpu.memory_space<vmem>>, vector<24x1xf32>,
      %cst_39 = arith.constant 0.000000e+00 : f32
      %50 = vector.broadcast %cst_39 : f32 to vector<24x8xf32>
      %c0_40 = arith.constant 0 : index
      %c0_41 = arith.constant 0 : index
      %51 = vector.load %arg10[%c0_40, %c0_41] : memref<24x8xf32, #tpu.memory_space<vmem>>, vector<24x8xf32>
      tpu.vector_store %arg10[%c0_40, %c0_41], %50 {strides = array<i32>} : memref<24x8xf32, #tpu.memory_space<vmem>>, vector<24x8xf32>,
    } else {
    }
    %c0 = arith.constant 0 : index
    %c0_1 = arith.constant 0 : index
    %c0_2 = arith.constant 0 : index
    %c0_3 = arith.constant 0 : index
    %c0_4 = arith.constant 0 : index
    %3 = vector.load %arg4[%c0, %c0_1, %c0_2, %c0_3, %c0_4] : memref<1x1x1x24x8xbf16, #tpu.memory_space<vmem>>, vector<1x1x1x24x8xbf16>
    %4 = vector.shape_cast %3 : vector<1x1x1x24x8xbf16> to vector<24x8xbf16>
    %c0_5 = arith.constant 0 : index
    %c0_6 = arith.constant 0 : index
    %c0_7 = arith.constant 0 : index
    %c0_8 = arith.constant 0 : index
    %c0_9 = arith.constant 0 : index
    %5 = vector.load %arg5[%c0_5, %c0_6, %c0_7, %c0_8, %c0_9] : memref<1x1x1x24x8xbf16, #tpu.memory_space<vmem>>, vector<1x1x1x24x8xbf16>
    %6 = vector.shape_cast %5 : vector<1x1x1x24x8xbf16> to vector<24x8xbf16>
    %cst = arith.constant dense<0.000000e+00> : vector<24x24xf32>
    %7 = tpu.matmul %4, %6, %cst {dimension_numbers = #tpu.dot_dimension_numbers<[1], [1], [0], [0], [0, 0, 1, 0], [], []>} : vector<24x8xbf16>, vector<24x8xbf16>, vector<24x24xf32> -> vector<24x24xf32>
    %c24_i32 = arith.constant 24 : i32
    %8 = arith.muli %arg3, %c24_i32 : i32
    %9 = tpu.iota {dimensions = array<i32: 1>} : vector<1x24xi32>
    %10 = vector.broadcast %8 : i32 to vector<1x24xi32>
    %11 = arith.addi %10, %9 : vector<1x24xi32>
    %c17_i32 = arith.constant 17 : i32
    %12 = vector.broadcast %c17_i32 : i32 to vector<1x24xi32>
    %13 = arith.cmpi slt, %11, %12 : vector<1x24xi32>
    %cst_10 = arith.constant -1.000000e+30 : f32
    %14 = vector.shape_cast %13 : vector<1x24xi1> to vector<1x24xi1>
    %15 = vector.broadcast %14 : vector<1x24xi1> to vector<24x24xi1>
    %16 = vector.broadcast %cst_10 : f32 to vector<24x24xf32>
    %17 = arith.select %15, %7, %16 : vector<24x24xi1>, vector<24x24xf32>
    %c0_11 = arith.constant 0 : index
    %c0_12 = arith.constant 0 : index
    %18 = vector.load %arg8[%c0_11, %c0_12] : memref<24x1xf32, #tpu.memory_space<vmem>>, vector<24x1xf32>
    %cst_13 = arith.constant dense<0xFF800000> : vector<24xf32>
    %19 = vector.multi_reduction <maximumf>, %17, %cst_13 [1] : vector<24x24xf32> to vector<24xf32>
    %20 = vector.shape_cast %19 : vector<24xf32> to vector<24x1xf32>
    %21 = arith.maximumf %18, %20 : vector<24x1xf32>
    %22 = arith.subf %18, %21 : vector<24x1xf32>
    %23 = math.exp %22 : vector<24x1xf32>
    %24 = vector.broadcast %21 : vector<24x1xf32> to vector<24x24xf32>
    %25 = arith.subf %17, %24 : vector<24x24xf32>
    %26 = math.exp %25 : vector<24x24xf32>
    %c0_14 = arith.constant 0 : index
    %c0_15 = arith.constant 0 : index
    %27 = vector.load %arg9[%c0_14, %c0_15] : memref<24x1xf32, #tpu.memory_space<vmem>>, vector<24x1xf32>
    %28 = arith.mulf %23, %27 : vector<24x1xf32>
    %cst_16 = arith.constant dense<0.000000e+00> : vector<24xf32>
    %29 = vector.multi_reduction <add>, %26, %cst_16 [1] : vector<24x24xf32> to vector<24xf32>
    %30 = vector.shape_cast %29 : vector<24xf32> to vector<24x1xf32>
    %31 = arith.addf %28, %30 : vector<24x1xf32>
    %c0_17 = arith.constant 0 : index
    %c0_18 = arith.constant 0 : index
    %32 = vector.load %arg9[%c0_17, %c0_18] : memref<24x1xf32, #tpu.memory_space<vmem>>, vector<24x1xf32>
    tpu.vector_store %arg9[%c0_17, %c0_18], %31 {strides = array<i32>} : memref<24x1xf32, #tpu.memory_space<vmem>>, vector<24x1xf32>,
    %c0_19 = arith.constant 0 : index
    %c0_20 = arith.constant 0 : index
    %33 = vector.load %arg10[%c0_19, %c0_20] : memref<24x8xf32, #tpu.memory_space<vmem>>, vector<24x8xf32>
    %34 = vector.broadcast %23 : vector<24x1xf32> to vector<24x8xf32>
    %35 = arith.mulf %34, %33 : vector<24x8xf32>
    %36 = arith.truncf %26 : vector<24x24xf32> to vector<24x24xbf16>
    %c0_21 = arith.constant 0 : index
    %c0_22 = arith.constant 0 : index
    %c0_23 = arith.constant 0 : index
    %c0_24 = arith.constant 0 : index
    %c0_25 = arith.constant 0 : index
    %37 = vector.load %arg6[%c0_21, %c0_22, %c0_23, %c0_24, %c0_25] : memref<1x1x1x24x8xbf16, #tpu.memory_space<vmem>>, vector<1x1x1x24x8xbf16>
    %38 = vector.shape_cast %37 : vector<1x1x1x24x8xbf16> to vector<24x8xbf16>
    %cst_26 = arith.constant dense<0.000000e+00> : vector<24x8xf32>
    %39 = tpu.matmul %36, %38, %cst_26 {dimension_numbers = #tpu.dot_dimension_numbers<[1], [0], [0], [1], [0, 0, 1, 1], [], []>} : vector<24x24xbf16>, vector<24x8xbf16>, vector<24x8xf32> -> vector<24x8xf32>
    %40 = arith.addf %35, %39 : vector<24x8xf32>
    %c0_27 = arith.constant 0 : index
    %c0_28 = arith.constant 0 : index
    %41 = vector.load %arg10[%c0_27, %c0_28] : memref<24x8xf32, #tpu.memory_space<vmem>>, vector<24x8xf32>
    tpu.vector_store %arg10[%c0_27, %c0_28], %40 {strides = array<i32>} : memref<24x8xf32, #tpu.memory_space<vmem>>, vector<24x8xf32>,
    %c0_29 = arith.constant 0 : index
    %c0_30 = arith.constant 0 : index
    %42 = vector.load %arg8[%c0_29, %c0_30] : memref<24x1xf32, #tpu.memory_space<vmem>>, vector<24x1xf32>
    tpu.vector_store %arg8[%c0_29, %c0_30], %21 {strides = array<i32>} : memref<24x1xf32, #tpu.memory_space<vmem>>, vector<24x1xf32>,
    %c0_i32_31 = arith.constant 0 : i32
    %43 = arith.cmpi eq, %arg3, %c0_i32_31 : i32
    %44 = arith.extui %43 : i1 to i32
    %c0_i32_32 = arith.constant 0 : i32
    %45 = arith.cmpi ne, %44, %c0_i32_32 : i32
    scf.if %45 {
      %c0_33 = arith.constant 0 : index
      %c0_34 = arith.constant 0 : index
      %46 = vector.load %arg10[%c0_33, %c0_34] : memref<24x8xf32, #tpu.memory_space<vmem>>, vector<24x8xf32>
      %c0_35 = arith.constant 0 : index
      %c0_36 = arith.constant 0 : index
      %47 = vector.load %arg9[%c0_35, %c0_36] : memref<24x1xf32, #tpu.memory_space<vmem>>, vector<24x1xf32>
      %48 = tpu.reciprocal %47 {approx = true} : vector<24x1xf32> -> vector<24x1xf32>
      %49 = vector.broadcast %48 : vector<24x1xf32> to vector<24x8xf32>
      %50 = arith.mulf %46, %49 : vector<24x8xf32>
      %51 = arith.truncf %50 : vector<24x8xf32> to vector<24x8xbf16>
      %c0_37 = arith.constant 0 : index
      %c0_38 = arith.constant 0 : index
      %c0_39 = arith.constant 0 : index
      %c0_40 = arith.constant 0 : index
      %52 = vector.load %arg7[%c0_37, %c0_38, %c0_39, %c0_40] : memref<1x1x24x8xbf16, #tpu.memory_space<vmem>>, vector<1x1x24x8xbf16>
      %53 = vector.shape_cast %52 : vector<1x1x24x8xbf16> to vector<24x8xbf16>
      %54 = vector.shape_cast %51 : vector<24x8xbf16> to vector<1x1x24x8xbf16>
      tpu.vector_store %arg7[%c0_37, %c0_38, %c0_39, %c0_40], %54 {strides = array<i32>} : memref<1x1x24x8xbf16, #tpu.memory_space<vmem>>, vector<1x1x24x8xbf16>,
    } else {
    }
    return
  }
  func.func @transform_0(%arg0: i32, %arg1: i32, %arg2: i32, %arg3: i32) -> (i32, i32, i32, i32, i32) {
    %c0_i32 = arith.constant 0 : i32
    %c0_i32_0 = arith.constant 0 : i32
    %c0_i32_1 = arith.constant 0 : i32
    return %c0_i32, %arg0, %arg1, %arg2, %c0_i32_0 : i32, i32, i32, i32, i32
  }
  func.func @transform_1(%arg0: i32, %arg1: i32, %arg2: i32, %arg3: i32) -> (i32, i32, i32, i32, i32) {
    %c1_i32 = arith.constant 1 : i32
    %c0_i32 = arith.constant 0 : i32
    %c0_i32_0 = arith.constant 0 : i32
    return %c1_i32, %arg0, %arg1, %arg3, %c0_i32 : i32, i32, i32, i32, i32
  }
  func.func @transform_2(%arg0: i32, %arg1: i32, %arg2: i32, %arg3: i32) -> (i32, i32, i32, i32, i32) {
    %c2_i32 = arith.constant 2 : i32
    %c0_i32 = arith.constant 0 : i32
    %c0_i32_0 = arith.constant 0 : i32
    return %c2_i32, %arg0, %arg1, %arg3, %c0_i32 : i32, i32, i32, i32, i32
  }
  func.func @transform_3(%arg0: i32, %arg1: i32, %arg2: i32, %arg3: i32) -> (i32, i32, i32, i32) {
    %c0_i32 = arith.constant 0 : i32
    %c0_i32_0 = arith.constant 0 : i32
    return %arg0, %arg1, %arg2, %c0_i32 : i32, i32, i32, i32
  }
}

module attributes {stable_mosaic.version = 11 : i64} {
  func.func @_ffn_ln_kernel(%arg0: i32, %arg1: i32, %arg2: memref<48x32xbf16, #tpu.memory_space<vmem>>, %arg3: memref<32x64xbf16, #tpu.memory_space<vmem>>, %arg4: memref<1x64xf32, #tpu.memory_space<vmem>>, %arg5: memref<64x32xbf16, #tpu.memory_space<vmem>>, %arg6: memref<1x32xf32, #tpu.memory_space<vmem>>, %arg7: memref<1x32xf32, #tpu.memory_space<vmem>>, %arg8: memref<1x32xf32, #tpu.memory_space<vmem>>, %arg9: memref<48x32xbf16, #tpu.memory_space<vmem>>, %arg10: memref<48x32xf32, #tpu.memory_space<vmem>>) attributes {dimension_semantics = [#tpu.dimension_semantics<parallel>, #tpu.dimension_semantics<arbitrary>], iteration_bounds = array<i64: 1, 1>, scalar_prefetch = 0 : i64, scratch_operands = 1 : i64, tpu.core_type = #tpu.core_type<tc>, window_params = [{transform_indices = @transform_0, window_bounds = array<i64: 48, 32>}, {transform_indices = @transform_1, window_bounds = array<i64: 32, 64>}, {transform_indices = @transform_2, window_bounds = array<i64: 1, 64>}, {transform_indices = @transform_3, window_bounds = array<i64: 64, 32>}, {pipeline_mode = #tpu.pipeline_mode<synchronous>, transform_indices = @transform_4, window_bounds = array<i64: 1, 32>}, {pipeline_mode = #tpu.pipeline_mode<synchronous>, transform_indices = @transform_5, window_bounds = array<i64: 1, 32>}, {pipeline_mode = #tpu.pipeline_mode<synchronous>, transform_indices = @transform_6, window_bounds = array<i64: 1, 32>}, {transform_indices = @transform_7, window_bounds = array<i64: 48, 32>}]} {
    %c0_i32 = arith.constant 0 : i32
    %0 = arith.cmpi eq, %arg1, %c0_i32 : i32
    %1 = arith.extui %0 : i1 to i32
    %c0_i32_0 = arith.constant 0 : i32
    %2 = arith.cmpi ne, %1, %c0_i32_0 : i32
    scf.if %2 {
      %cst_16 = arith.constant 0.000000e+00 : f32
      %20 = vector.broadcast %cst_16 : f32 to vector<48x32xf32>
      %c0_17 = arith.constant 0 : index
      %c0_18 = arith.constant 0 : index
      %21 = vector.load %arg10[%c0_17, %c0_18] : memref<48x32xf32, #tpu.memory_space<vmem>>, vector<48x32xf32>
      tpu.vector_store %arg10[%c0_17, %c0_18], %20 {strides = array<i32>} : memref<48x32xf32, #tpu.memory_space<vmem>>, vector<48x32xf32>,
    } else {
    }
    %c0 = arith.constant 0 : index
    %c0_1 = arith.constant 0 : index
    %3 = vector.load %arg2[%c0, %c0_1] : memref<48x32xbf16, #tpu.memory_space<vmem>>, vector<48x32xbf16>
    %c0_2 = arith.constant 0 : index
    %c0_3 = arith.constant 0 : index
    %4 = vector.load %arg3[%c0_2, %c0_3] : memref<32x64xbf16, #tpu.memory_space<vmem>>, vector<32x64xbf16>
    %cst = arith.constant dense<0.000000e+00> : vector<48x64xf32>
    %5 = tpu.matmul %3, %4, %cst {dimension_numbers = #tpu.dot_dimension_numbers<[1], [0], [0], [1], [0, 0, 1, 1], [], []>} : vector<48x32xbf16>, vector<32x64xbf16>, vector<48x64xf32> -> vector<48x64xf32>
    %c0_4 = arith.constant 0 : index
    %c0_5 = arith.constant 0 : index
    %6 = vector.load %arg4[%c0_4, %c0_5] : memref<1x64xf32, #tpu.memory_space<vmem>>, vector<1x64xf32>
    %7 = vector.broadcast %6 : vector<1x64xf32> to vector<48x64xf32>
    %8 = arith.addf %5, %7 : vector<48x64xf32>
    %cst_6 = arith.constant 0.000000e+00 : f32
    %9 = vector.broadcast %cst_6 : f32 to vector<48x64xf32>
    %10 = arith.maximumf %8, %9 : vector<48x64xf32>
    %c0_7 = arith.constant 0 : index
    %c0_8 = arith.constant 0 : index
    %11 = vector.load %arg10[%c0_7, %c0_8] : memref<48x32xf32, #tpu.memory_space<vmem>>, vector<48x32xf32>
    %12 = arith.truncf %10 : vector<48x64xf32> to vector<48x64xbf16>
    %c0_9 = arith.constant 0 : index
    %c0_10 = arith.constant 0 : index
    %13 = vector.load %arg5[%c0_9, %c0_10] : memref<64x32xbf16, #tpu.memory_space<vmem>>, vector<64x32xbf16>
    %cst_11 = arith.constant dense<0.000000e+00> : vector<48x32xf32>
    %14 = tpu.matmul %12, %13, %cst_11 {dimension_numbers = #tpu.dot_dimension_numbers<[1], [0], [0], [1], [0, 0, 1, 1], [], []>} : vector<48x64xbf16>, vector<64x32xbf16>, vector<48x32xf32> -> vector<48x32xf32>
    %15 = arith.addf %11, %14 : vector<48x32xf32>
    %c0_12 = arith.constant 0 : index
    %c0_13 = arith.constant 0 : index
    %16 = vector.load %arg10[%c0_12, %c0_13] : memref<48x32xf32, #tpu.memory_space<vmem>>, vector<48x32xf32>
    tpu.vector_store %arg10[%c0_12, %c0_13], %15 {strides = array<i32>} : memref<48x32xf32, #tpu.memory_space<vmem>>, vector<48x32xf32>,
    %c0_i32_14 = arith.constant 0 : i32
    %17 = arith.cmpi eq, %arg1, %c0_i32_14 : i32
    %18 = arith.extui %17 : i1 to i32
    %c0_i32_15 = arith.constant 0 : i32
    %19 = arith.cmpi ne, %18, %c0_i32_15 : i32
    scf.if %19 {
      %c0_16 = arith.constant 0 : index
      %c0_17 = arith.constant 0 : index
      %20 = vector.load %arg10[%c0_16, %c0_17] : memref<48x32xf32, #tpu.memory_space<vmem>>, vector<48x32xf32>
      %c0_18 = arith.constant 0 : index
      %c0_19 = arith.constant 0 : index
      %21 = vector.load %arg6[%c0_18, %c0_19] : memref<1x32xf32, #tpu.memory_space<vmem>>, vector<1x32xf32>
      %22 = vector.broadcast %21 : vector<1x32xf32> to vector<48x32xf32>
      %23 = arith.addf %20, %22 : vector<48x32xf32>
      %24 = arith.extf %3 : vector<48x32xbf16> to vector<48x32xf32>
      %25 = arith.addf %23, %24 : vector<48x32xf32>
      %cst_20 = arith.constant dense<0.000000e+00> : vector<48xf32>
      %26 = vector.multi_reduction <add>, %25, %cst_20 [1] : vector<48x32xf32> to vector<48xf32>
      %27 = vector.shape_cast %26 : vector<48xf32> to vector<48x1xf32>
      %cst_21 = arith.constant 3.200000e+01 : f32
      %28 = vector.broadcast %cst_21 : f32 to vector<48x1xf32>
      %29 = arith.divf %27, %28 : vector<48x1xf32>
      %30 = vector.broadcast %29 : vector<48x1xf32> to vector<48x32xf32>
      %31 = arith.subf %25, %30 : vector<48x32xf32>
      %32 = arith.mulf %31, %31 : vector<48x32xf32>
      %cst_22 = arith.constant dense<0.000000e+00> : vector<48xf32>
      %33 = vector.multi_reduction <add>, %32, %cst_22 [1] : vector<48x32xf32> to vector<48xf32>
      %34 = vector.shape_cast %33 : vector<48xf32> to vector<48x1xf32>
      %cst_23 = arith.constant 3.200000e+01 : f32
      %35 = vector.broadcast %cst_23 : f32 to vector<48x1xf32>
      %36 = arith.divf %34, %35 : vector<48x1xf32>
      %37 = vector.broadcast %29 : vector<48x1xf32> to vector<48x32xf32>
      %38 = arith.subf %25, %37 : vector<48x32xf32>
      %cst_24 = arith.constant 9.99999974E-6 : f32
      %39 = vector.broadcast %cst_24 : f32 to vector<48x1xf32>
      %40 = arith.addf %36, %39 : vector<48x1xf32>
      %41 = math.rsqrt %40 : vector<48x1xf32>
      %42 = vector.broadcast %41 : vector<48x1xf32> to vector<48x32xf32>
      %43 = arith.mulf %38, %42 : vector<48x32xf32>
      %c0_25 = arith.constant 0 : index
      %c0_26 = arith.constant 0 : index
      %44 = vector.load %arg7[%c0_25, %c0_26] : memref<1x32xf32, #tpu.memory_space<vmem>>, vector<1x32xf32>
      %45 = vector.broadcast %44 : vector<1x32xf32> to vector<48x32xf32>
      %46 = arith.mulf %43, %45 : vector<48x32xf32>
      %c0_27 = arith.constant 0 : index
      %c0_28 = arith.constant 0 : index
      %47 = vector.load %arg8[%c0_27, %c0_28] : memref<1x32xf32, #tpu.memory_space<vmem>>, vector<1x32xf32>
      %48 = vector.broadcast %47 : vector<1x32xf32> to vector<48x32xf32>
      %49 = arith.addf %46, %48 : vector<48x32xf32>
      %50 = arith.truncf %49 : vector<48x32xf32> to vector<48x32xbf16>
      %c0_29 = arith.constant 0 : index
      %c0_30 = arith.constant 0 : index
      %51 = vector.load %arg9[%c0_29, %c0_30] : memref<48x32xbf16, #tpu.memory_space<vmem>>, vector<48x32xbf16>
      tpu.vector_store %arg9[%c0_29, %c0_30], %50 {strides = array<i32>} : memref<48x32xbf16, #tpu.memory_space<vmem>>, vector<48x32xbf16>,
    } else {
    }
    return
  }
  func.func @transform_0(%arg0: i32, %arg1: i32) -> (i32, i32) {
    %c0_i32 = arith.constant 0 : i32
    %c0_i32_0 = arith.constant 0 : i32
    return %arg0, %c0_i32 : i32, i32
  }
  func.func @transform_1(%arg0: i32, %arg1: i32) -> (i32, i32) {
    %c0_i32 = arith.constant 0 : i32
    %c0_i32_0 = arith.constant 0 : i32
    return %c0_i32, %arg1 : i32, i32
  }
  func.func @transform_2(%arg0: i32, %arg1: i32) -> (i32, i32) {
    %c0_i32 = arith.constant 0 : i32
    %c0_i32_0 = arith.constant 0 : i32
    return %c0_i32, %arg1 : i32, i32
  }
  func.func @transform_3(%arg0: i32, %arg1: i32) -> (i32, i32) {
    %c0_i32 = arith.constant 0 : i32
    %c0_i32_0 = arith.constant 0 : i32
    return %arg1, %c0_i32 : i32, i32
  }
  func.func @transform_4(%arg0: i32, %arg1: i32) -> (i32, i32) {
    %c0_i32 = arith.constant 0 : i32
    %c0_i32_0 = arith.constant 0 : i32
    %c0_i32_1 = arith.constant 0 : i32
    return %c0_i32, %c0_i32_0 : i32, i32
  }
  func.func @transform_5(%arg0: i32, %arg1: i32) -> (i32, i32) {
    %c0_i32 = arith.constant 0 : i32
    %c0_i32_0 = arith.constant 0 : i32
    %c0_i32_1 = arith.constant 0 : i32
    return %c0_i32, %c0_i32_0 : i32, i32
  }
  func.func @transform_6(%arg0: i32, %arg1: i32) -> (i32, i32) {
    %c0_i32 = arith.constant 0 : i32
    %c0_i32_0 = arith.constant 0 : i32
    %c0_i32_1 = arith.constant 0 : i32
    return %c0_i32, %c0_i32_0 : i32, i32
  }
  func.func @transform_7(%arg0: i32, %arg1: i32) -> (i32, i32) {
    %c0_i32 = arith.constant 0 : i32
    %c0_i32_0 = arith.constant 0 : i32
    return %arg0, %c0_i32 : i32, i32
  }
}

module attributes {stable_mosaic.version = 11 : i64} {
  func.func @_linear_add_ln_kernel(%arg0: i32, %arg1: i32, %arg2: memref<48x32xbf16, #tpu.memory_space<vmem>>, %arg3: memref<32x32xbf16, #tpu.memory_space<vmem>>, %arg4: memref<1x32xf32, #tpu.memory_space<vmem>>, %arg5: memref<48x32xbf16, #tpu.memory_space<vmem>>, %arg6: memref<1x32xf32, #tpu.memory_space<vmem>>, %arg7: memref<1x32xf32, #tpu.memory_space<vmem>>, %arg8: memref<48x32xbf16, #tpu.memory_space<vmem>>, %arg9: memref<48x32xf32, #tpu.memory_space<vmem>>) attributes {dimension_semantics = [#tpu.dimension_semantics<parallel>, #tpu.dimension_semantics<arbitrary>], iteration_bounds = array<i64: 1, 1>, scalar_prefetch = 0 : i64, scratch_operands = 1 : i64, tpu.core_type = #tpu.core_type<tc>, window_params = [{transform_indices = @transform_0, window_bounds = array<i64: 48, 32>}, {transform_indices = @transform_1, window_bounds = array<i64: 32, 32>}, {pipeline_mode = #tpu.pipeline_mode<synchronous>, transform_indices = @transform_2, window_bounds = array<i64: 1, 32>}, {transform_indices = @transform_3, window_bounds = array<i64: 48, 32>}, {pipeline_mode = #tpu.pipeline_mode<synchronous>, transform_indices = @transform_4, window_bounds = array<i64: 1, 32>}, {pipeline_mode = #tpu.pipeline_mode<synchronous>, transform_indices = @transform_5, window_bounds = array<i64: 1, 32>}, {transform_indices = @transform_6, window_bounds = array<i64: 48, 32>}]} {
    %c0_i32 = arith.constant 0 : i32
    %0 = arith.cmpi eq, %arg1, %c0_i32 : i32
    %1 = arith.extui %0 : i1 to i32
    %c0_i32_0 = arith.constant 0 : i32
    %2 = arith.cmpi ne, %1, %c0_i32_0 : i32
    scf.if %2 {
      %cst_10 = arith.constant 0.000000e+00 : f32
      %12 = vector.broadcast %cst_10 : f32 to vector<48x32xf32>
      %c0_11 = arith.constant 0 : index
      %c0_12 = arith.constant 0 : index
      %13 = vector.load %arg9[%c0_11, %c0_12] : memref<48x32xf32, #tpu.memory_space<vmem>>, vector<48x32xf32>
      tpu.vector_store %arg9[%c0_11, %c0_12], %12 {strides = array<i32>} : memref<48x32xf32, #tpu.memory_space<vmem>>, vector<48x32xf32>,
    } else {
    }
    %c0 = arith.constant 0 : index
    %c0_1 = arith.constant 0 : index
    %3 = vector.load %arg9[%c0, %c0_1] : memref<48x32xf32, #tpu.memory_space<vmem>>, vector<48x32xf32>
    %c0_2 = arith.constant 0 : index
    %c0_3 = arith.constant 0 : index
    %4 = vector.load %arg2[%c0_2, %c0_3] : memref<48x32xbf16, #tpu.memory_space<vmem>>, vector<48x32xbf16>
    %c0_4 = arith.constant 0 : index
    %c0_5 = arith.constant 0 : index
    %5 = vector.load %arg3[%c0_4, %c0_5] : memref<32x32xbf16, #tpu.memory_space<vmem>>, vector<32x32xbf16>
    %cst = arith.constant dense<0.000000e+00> : vector<48x32xf32>
    %6 = tpu.matmul %4, %5, %cst {dimension_numbers = #tpu.dot_dimension_numbers<[1], [0], [0], [1], [0, 0, 1, 1], [], []>} : vector<48x32xbf16>, vector<32x32xbf16>, vector<48x32xf32> -> vector<48x32xf32>
    %7 = arith.addf %3, %6 : vector<48x32xf32>
    %c0_6 = arith.constant 0 : index
    %c0_7 = arith.constant 0 : index
    %8 = vector.load %arg9[%c0_6, %c0_7] : memref<48x32xf32, #tpu.memory_space<vmem>>, vector<48x32xf32>
    tpu.vector_store %arg9[%c0_6, %c0_7], %7 {strides = array<i32>} : memref<48x32xf32, #tpu.memory_space<vmem>>, vector<48x32xf32>,
    %c0_i32_8 = arith.constant 0 : i32
    %9 = arith.cmpi eq, %arg1, %c0_i32_8 : i32
    %10 = arith.extui %9 : i1 to i32
    %c0_i32_9 = arith.constant 0 : i32
    %11 = arith.cmpi ne, %10, %c0_i32_9 : i32
    scf.if %11 {
      %c0_10 = arith.constant 0 : index
      %c0_11 = arith.constant 0 : index
      %12 = vector.load %arg9[%c0_10, %c0_11] : memref<48x32xf32, #tpu.memory_space<vmem>>, vector<48x32xf32>
      %c0_12 = arith.constant 0 : index
      %c0_13 = arith.constant 0 : index
      %13 = vector.load %arg4[%c0_12, %c0_13] : memref<1x32xf32, #tpu.memory_space<vmem>>, vector<1x32xf32>
      %14 = vector.broadcast %13 : vector<1x32xf32> to vector<48x32xf32>
      %15 = arith.addf %12, %14 : vector<48x32xf32>
      %c0_14 = arith.constant 0 : index
      %c0_15 = arith.constant 0 : index
      %16 = vector.load %arg5[%c0_14, %c0_15] : memref<48x32xbf16, #tpu.memory_space<vmem>>, vector<48x32xbf16>
      %17 = arith.extf %16 : vector<48x32xbf16> to vector<48x32xf32>
      %18 = arith.addf %15, %17 : vector<48x32xf32>
      %cst_16 = arith.constant dense<0.000000e+00> : vector<48xf32>
      %19 = vector.multi_reduction <add>, %18, %cst_16 [1] : vector<48x32xf32> to vector<48xf32>
      %20 = vector.shape_cast %19 : vector<48xf32> to vector<48x1xf32>
      %cst_17 = arith.constant 3.200000e+01 : f32
      %21 = vector.broadcast %cst_17 : f32 to vector<48x1xf32>
      %22 = arith.divf %20, %21 : vector<48x1xf32>
      %23 = vector.broadcast %22 : vector<48x1xf32> to vector<48x32xf32>
      %24 = arith.subf %18, %23 : vector<48x32xf32>
      %25 = arith.mulf %24, %24 : vector<48x32xf32>
      %cst_18 = arith.constant dense<0.000000e+00> : vector<48xf32>
      %26 = vector.multi_reduction <add>, %25, %cst_18 [1] : vector<48x32xf32> to vector<48xf32>
      %27 = vector.shape_cast %26 : vector<48xf32> to vector<48x1xf32>
      %cst_19 = arith.constant 3.200000e+01 : f32
      %28 = vector.broadcast %cst_19 : f32 to vector<48x1xf32>
      %29 = arith.divf %27, %28 : vector<48x1xf32>
      %30 = vector.broadcast %22 : vector<48x1xf32> to vector<48x32xf32>
      %31 = arith.subf %18, %30 : vector<48x32xf32>
      %cst_20 = arith.constant 9.99999974E-6 : f32
      %32 = vector.broadcast %cst_20 : f32 to vector<48x1xf32>
      %33 = arith.addf %29, %32 : vector<48x1xf32>
      %34 = math.rsqrt %33 : vector<48x1xf32>
      %35 = vector.broadcast %34 : vector<48x1xf32> to vector<48x32xf32>
      %36 = arith.mulf %31, %35 : vector<48x32xf32>
      %c0_21 = arith.constant 0 : index
      %c0_22 = arith.constant 0 : index
      %37 = vector.load %arg6[%c0_21, %c0_22] : memref<1x32xf32, #tpu.memory_space<vmem>>, vector<1x32xf32>
      %38 = vector.broadcast %37 : vector<1x32xf32> to vector<48x32xf32>
      %39 = arith.mulf %36, %38 : vector<48x32xf32>
      %c0_23 = arith.constant 0 : index
      %c0_24 = arith.constant 0 : index
      %40 = vector.load %arg7[%c0_23, %c0_24] : memref<1x32xf32, #tpu.memory_space<vmem>>, vector<1x32xf32>
      %41 = vector.broadcast %40 : vector<1x32xf32> to vector<48x32xf32>
      %42 = arith.addf %39, %41 : vector<48x32xf32>
      %43 = arith.truncf %42 : vector<48x32xf32> to vector<48x32xbf16>
      %c0_25 = arith.constant 0 : index
      %c0_26 = arith.constant 0 : index
      %44 = vector.load %arg8[%c0_25, %c0_26] : memref<48x32xbf16, #tpu.memory_space<vmem>>, vector<48x32xbf16>
      tpu.vector_store %arg8[%c0_25, %c0_26], %43 {strides = array<i32>} : memref<48x32xbf16, #tpu.memory_space<vmem>>, vector<48x32xbf16>,
    } else {
    }
    return
  }
  func.func @transform_0(%arg0: i32, %arg1: i32) -> (i32, i32) {
    %c0_i32 = arith.constant 0 : i32
    return %arg0, %arg1 : i32, i32
  }
  func.func @transform_1(%arg0: i32, %arg1: i32) -> (i32, i32) {
    %c0_i32 = arith.constant 0 : i32
    %c0_i32_0 = arith.constant 0 : i32
    return %arg1, %c0_i32 : i32, i32
  }
  func.func @transform_2(%arg0: i32, %arg1: i32) -> (i32, i32) {
    %c0_i32 = arith.constant 0 : i32
    %c0_i32_0 = arith.constant 0 : i32
    %c0_i32_1 = arith.constant 0 : i32
    return %c0_i32, %c0_i32_0 : i32, i32
  }
  func.func @transform_3(%arg0: i32, %arg1: i32) -> (i32, i32) {
    %c0_i32 = arith.constant 0 : i32
    %c0_i32_0 = arith.constant 0 : i32
    return %arg0, %c0_i32 : i32, i32
  }
  func.func @transform_4(%arg0: i32, %arg1: i32) -> (i32, i32) {
    %c0_i32 = arith.constant 0 : i32
    %c0_i32_0 = arith.constant 0 : i32
    %c0_i32_1 = arith.constant 0 : i32
    return %c0_i32, %c0_i32_0 : i32, i32
  }
  func.func @transform_5(%arg0: i32, %arg1: i32) -> (i32, i32) {
    %c0_i32 = arith.constant 0 : i32
    %c0_i32_0 = arith.constant 0 : i32
    %c0_i32_1 = arith.constant 0 : i32
    return %c0_i32, %c0_i32_0 : i32, i32
  }
  func.func @transform_6(%arg0: i32, %arg1: i32) -> (i32, i32) {
    %c0_i32 = arith.constant 0 : i32
    %c0_i32_0 = arith.constant 0 : i32
    return %arg0, %c0_i32 : i32, i32
  }
}

module attributes {stable_mosaic.version = 11 : i64} {
  func.func @_linear_kernel(%arg0: i32, %arg1: i32, %arg2: i32, %arg3: memref<32x32xbf16, #tpu.memory_space<vmem>>, %arg4: memref<32x64xbf16, #tpu.memory_space<vmem>>, %arg5: memref<1x64xf32, #tpu.memory_space<vmem>>, %arg6: memref<32x64xf32, #tpu.memory_space<vmem>>, %arg7: memref<32x64xf32, #tpu.memory_space<vmem>>) attributes {dimension_semantics = [#tpu.dimension_semantics<parallel>, #tpu.dimension_semantics<parallel>, #tpu.dimension_semantics<arbitrary>], iteration_bounds = array<i64: 1, 1, 1>, scalar_prefetch = 0 : i64, scratch_operands = 1 : i64, tpu.core_type = #tpu.core_type<tc>, window_params = [{transform_indices = @transform_0, window_bounds = array<i64: 32, 32>}, {transform_indices = @transform_1, window_bounds = array<i64: 32, 64>}, {transform_indices = @transform_2, window_bounds = array<i64: 1, 64>}, {transform_indices = @transform_3, window_bounds = array<i64: 32, 64>}]} {
    %c0_i32 = arith.constant 0 : i32
    %0 = arith.cmpi eq, %arg2, %c0_i32 : i32
    %1 = arith.extui %0 : i1 to i32
    %c0_i32_0 = arith.constant 0 : i32
    %2 = arith.cmpi ne, %1, %c0_i32_0 : i32
    scf.if %2 {
      %cst_10 = arith.constant 0.000000e+00 : f32
      %12 = vector.broadcast %cst_10 : f32 to vector<32x64xf32>
      %c0_11 = arith.constant 0 : index
      %c0_12 = arith.constant 0 : index
      %13 = vector.load %arg7[%c0_11, %c0_12] : memref<32x64xf32, #tpu.memory_space<vmem>>, vector<32x64xf32>
      tpu.vector_store %arg7[%c0_11, %c0_12], %12 {strides = array<i32>} : memref<32x64xf32, #tpu.memory_space<vmem>>, vector<32x64xf32>,
    } else {
    }
    %c0 = arith.constant 0 : index
    %c0_1 = arith.constant 0 : index
    %3 = vector.load %arg7[%c0, %c0_1] : memref<32x64xf32, #tpu.memory_space<vmem>>, vector<32x64xf32>
    %c0_2 = arith.constant 0 : index
    %c0_3 = arith.constant 0 : index
    %4 = vector.load %arg3[%c0_2, %c0_3] : memref<32x32xbf16, #tpu.memory_space<vmem>>, vector<32x32xbf16>
    %c0_4 = arith.constant 0 : index
    %c0_5 = arith.constant 0 : index
    %5 = vector.load %arg4[%c0_4, %c0_5] : memref<32x64xbf16, #tpu.memory_space<vmem>>, vector<32x64xbf16>
    %cst = arith.constant dense<0.000000e+00> : vector<32x64xf32>
    %6 = tpu.matmul %4, %5, %cst {dimension_numbers = #tpu.dot_dimension_numbers<[1], [0], [0], [1], [0, 0, 1, 1], [], []>} : vector<32x32xbf16>, vector<32x64xbf16>, vector<32x64xf32> -> vector<32x64xf32>
    %7 = arith.addf %3, %6 : vector<32x64xf32>
    %c0_6 = arith.constant 0 : index
    %c0_7 = arith.constant 0 : index
    %8 = vector.load %arg7[%c0_6, %c0_7] : memref<32x64xf32, #tpu.memory_space<vmem>>, vector<32x64xf32>
    tpu.vector_store %arg7[%c0_6, %c0_7], %7 {strides = array<i32>} : memref<32x64xf32, #tpu.memory_space<vmem>>, vector<32x64xf32>,
    %c0_i32_8 = arith.constant 0 : i32
    %9 = arith.cmpi eq, %arg2, %c0_i32_8 : i32
    %10 = arith.extui %9 : i1 to i32
    %c0_i32_9 = arith.constant 0 : i32
    %11 = arith.cmpi ne, %10, %c0_i32_9 : i32
    scf.if %11 {
      %c0_10 = arith.constant 0 : index
      %c0_11 = arith.constant 0 : index
      %12 = vector.load %arg7[%c0_10, %c0_11] : memref<32x64xf32, #tpu.memory_space<vmem>>, vector<32x64xf32>
      %c0_12 = arith.constant 0 : index
      %c0_13 = arith.constant 0 : index
      %13 = vector.load %arg5[%c0_12, %c0_13] : memref<1x64xf32, #tpu.memory_space<vmem>>, vector<1x64xf32>
      %14 = vector.broadcast %13 : vector<1x64xf32> to vector<32x64xf32>
      %15 = arith.addf %12, %14 : vector<32x64xf32>
      %c0_14 = arith.constant 0 : index
      %c0_15 = arith.constant 0 : index
      %16 = vector.load %arg6[%c0_14, %c0_15] : memref<32x64xf32, #tpu.memory_space<vmem>>, vector<32x64xf32>
      tpu.vector_store %arg6[%c0_14, %c0_15], %15 {strides = array<i32>} : memref<32x64xf32, #tpu.memory_space<vmem>>, vector<32x64xf32>,
    } else {
    }
    return
  }
  func.func @transform_0(%arg0: i32, %arg1: i32, %arg2: i32) -> (i32, i32) {
    %c0_i32 = arith.constant 0 : i32
    return %arg0, %arg2 : i32, i32
  }
  func.func @transform_1(%arg0: i32, %arg1: i32, %arg2: i32) -> (i32, i32) {
    %c0_i32 = arith.constant 0 : i32
    return %arg2, %arg1 : i32, i32
  }
  func.func @transform_2(%arg0: i32, %arg1: i32, %arg2: i32) -> (i32, i32) {
    %c0_i32 = arith.constant 0 : i32
    %c0_i32_0 = arith.constant 0 : i32
    return %c0_i32, %arg1 : i32, i32
  }
  func.func @transform_3(%arg0: i32, %arg1: i32, %arg2: i32) -> (i32, i32) {
    %c0_i32 = arith.constant 0 : i32
    return %arg0, %arg1 : i32, i32
  }
}

</mosaic_0001>

<llo_original>
// kernel: vit_bottleneck_forward.10
$region0: #{vit_bottleneck_forward.10}
  #allocation0 [shape = 'u32[]', space=smem, size = 0x4, offset = 0x4, fixed_abs, tag = 'smem constant byte address 0x4 - core index']
  #allocation1 [shape = 'u32[144,128]{1,0:T(1,128)}', space=vmem, size = 0x12000, scoped, tag = 'internal scratch']
  #allocation2 [shape = 'f32[32,32]{1,0:T(8,128)}', space=vmem, size = 0x4000, scoped, tag = 'scratch operand']
  %s0 = inlined_call_operand.hbm [shape: bf16[32,64], index: 0, kind: input, shape index: {}]
  %s1 = inlined_call_operand.hbm [shape: bf16[64,32], index: 1, kind: input, shape index: {}]
  %s2 = inlined_call_operand.hbm [shape: f32[1,32], index: 2, kind: input, shape index: {}]
  %s3 = inlined_call_operand.hbm [shape: bf16[32,32], index: 3, kind: output, shape index: {}]
  %s4 = sld [smem:[#allocation0]]
  $region42: #{vit_bottleneck_forward.10} parent=0
    _
  %s6 = ssub.s32 1, %s4
  %s7 = scalar_select 0, %s6, %s4
  $region1: #{vit_bottleneck_forward.10} parent=0
    #allocation3 [shape = 'u8[8192]{0}', space=vmem, size = 0x2000, scoped, tag = 'input window, operand 0, single buffered']
    #allocation4 [shape = 's32[1]{0}', space=sflag, size = 0x4, scoped, tag = 'scoped memory for vit_bottleneck_forward.10']
    #allocation5 [shape = 's32[1]{0}', space=sflag, size = 0x4, scoped, tag = 'scoped memory for vit_bottleneck_forward.10']
    #allocation6 [shape = 'u8[16384]{0}', space=vmem, size = 0x4000, scoped, tag = 'input window, operand 1, single buffered']
    #allocation7 [shape = 's32[1]{0}', space=sflag, size = 0x4, scoped, tag = 'scoped memory for vit_bottleneck_forward.10']
    #allocation8 [shape = 'u8[512]{0}', space=vmem, size = 0x400, scoped, tag = 'input window, operand 2, single buffered']
    #allocation9 [shape = 'u8[8192]{0}', space=vmem, size = 0x2000, scoped, tag = 'output window, operand 0, single buffered']
    %8 = vsyncpa [#allocation4], 0
    %9 = vsyncpa [#allocation7], 0
    %10 = vsyncpa [#allocation5], 0
    // Predicated region
    $region2: #{vit_bottleneck_forward.10} parent=1 // pred_check
      _
    $region3: #{vit_bottleneck_forward.10} parent=1 // pred_check_branch
      %12 = sbr.rel (0) target = $region5
    $region4: #{vit_bottleneck_forward.10} parent=1 // pred_region
      %s14 = ssub.s32 256, 256
      %15 = vsyncadd [#allocation4], %s14
      %s16 = sshll.u32 [#allocation3], 4
      %s17 = int_to_ptr.vmem [resolvable:$true] %s16
      %22 = dma.hbm_to_vmem [thread:$0]  %s0, 256, %s17, [#allocation4], 64, 64, 4
    $region5: #{vit_bottleneck_forward.10} parent=1 // pred_fallthru
      _
    // Predicated region
    $region6: #{vit_bottleneck_forward.10} parent=1 // pred_check
      _
    $region7: #{vit_bottleneck_forward.10} parent=1 // pred_check_branch
      %24 = sbr.rel (0) target = $region9
    $region8: #{vit_bottleneck_forward.10} parent=1 // pred_region
      %s26 = ssub.s32 512, 512
      %27 = vsyncadd [#allocation7], %s26
      %s28 = sshll.u32 [#allocation6], 4
      %s29 = int_to_ptr.vmem [resolvable:$true] %s28
      %34 = dma.hbm_to_vmem [thread:$0]  %s1, 512, %s29, [#allocation7], 64, 64, 4
    $region9: #{vit_bottleneck_forward.10} parent=1 // pred_fallthru
      _
    // Predicated region
    $region10: #{vit_bottleneck_forward.10} parent=1 // pred_check
      _
    $region11: #{vit_bottleneck_forward.10} parent=1 // pred_check_branch
      %36 = sbr.rel (0) target = $region13
    $region12: #{vit_bottleneck_forward.10} parent=1 // pred_region
      %s38 = ssub.s32 16, 16
      %39 = vsyncadd [#allocation7], %s38
      %s41 = sshll.u32 [#allocation8], 4
      %s42 = int_to_ptr.vmem [resolvable:$true] %s41
      %44 = dma.hbm_to_vmem [thread:$0]  %s2, 16, %s42, [#allocation7]
    $region13: #{vit_bottleneck_forward.10} parent=1 // pred_fallthru
      _
    // Predicated region
    $region14: #{vit_bottleneck_forward.10} parent=1 // pred_check
      _
    $region15: #{vit_bottleneck_forward.10} parent=1 // pred_check_branch
      %46 = sbr.rel (0) target = $region17
    $region16: #{vit_bottleneck_forward.10} parent=1 // pred_region
      %47 = dma.done [#allocation4], 256
    $region17: #{vit_bottleneck_forward.10} parent=1 // pred_fallthru
      _
    // Predicated region
    $region18: #{vit_bottleneck_forward.10} parent=1 // pred_check
      _
    $region19: #{vit_bottleneck_forward.10} parent=1 // pred_check_branch
      %49 = sbr.rel (0) target = $region21
    $region20: #{vit_bottleneck_forward.10} parent=1 // pred_region
      %50 = dma.done [#allocation7], 512
    $region21: #{vit_bottleneck_forward.10} parent=1 // pred_fallthru
      _
    // Predicated region
    $region22: #{vit_bottleneck_forward.10} parent=1 // pred_check
      _
    $region23: #{vit_bottleneck_forward.10} parent=1 // pred_check_branch
      %52 = sbr.rel (0) target = $region25
    $region24: #{vit_bottleneck_forward.10} parent=1 // pred_region
      %53 = dma.done [#allocation7], 16
    $region25: #{vit_bottleneck_forward.10} parent=1 // pred_fallthru
      _
    %p55 = scmp.eq.s32.totalorder 0, 0
    // Predicated region
    $region26: #{vit_bottleneck_forward.10} parent=1 // pred_check
      %p56 = pneg %p55
    $region27: #{vit_bottleneck_forward.10} parent=1 // pred_check_branch
      %58 = sbr.rel (%p56) target = $region29
    $region28: #{vit_bottleneck_forward.10} parent=1 // pred_region
      %vm59 = vcmask 261120
      %60 = vst.msk [vmem:[#allocation2] sm:$0xff] %vm59, 0.0
      %61 = vst.msk [vmem:[#allocation2 + $0x8] sm:$0xff] %vm59, 0.0
      %62 = vst.msk [vmem:[#allocation2 + $0x10] sm:$0xff] %vm59, 0.0
      %63 = vst.msk [vmem:[#allocation2 + $0x18] sm:$0xff] %vm59, 0.0
    $region29: #{vit_bottleneck_forward.10} parent=1 // pred_fallthru
      _
    %v64 = vld [vmem:[#allocation2] sm:$0xff]
    %v65 = vld [vmem:[#allocation2 + $0x8] sm:$0xff]
    %v66 = vld [vmem:[#allocation2 + $0x10] sm:$0xff]
    %v67 = vld [vmem:[#allocation2 + $0x18] sm:$0xff]
    %v68 = vld [vmem:[#allocation3] sm:$0xf]
    %v69 = vld [vmem:[#allocation3 + $0x4] sm:$0xf]
    %v70 = vld [vmem:[#allocation3 + $0x8] sm:$0xf]
    %v71 = vld [vmem:[#allocation3 + $0xc] sm:$0xf]
    %v72 = vld [vmem:[#allocation6] sm:$0xf]
    %v73 = vld [vmem:[#allocation6 + $0x4] sm:$0xf]
    %v74 = vld [vmem:[#allocation6 + $0x8] sm:$0xf]
    %v75 = vld [vmem:[#allocation6 + $0xc] sm:$0xf]
    %v76 = vld [vmem:[#allocation6 + $0x10] sm:$0xf]
    %v77 = vld [vmem:[#allocation6 + $0x14] sm:$0xf]
    %v78 = vld [vmem:[#allocation6 + $0x18] sm:$0xf]
    %v79 = vld [vmem:[#allocation6 + $0x1c] sm:$0xf]
    %v84 = vunpack.c.l.b16 %v68
    %v85 = vunpack.c.l.b16 %v69
    %v86 = vunpack.c.l.b16 %v70
    %v87 = vunpack.c.l.b16 %v71
    %v88 = vpack.c.b16 %v85, %v84
    %v89 = vpack.c.b16 %v87, %v86
    %v98 = vunpack.c.l.b16 %v72
    %v99 = vunpack.c.l.b16 %v73
    %v100 = vunpack.c.l.b16 %v74
    %v101 = vunpack.c.l.b16 %v75
    %v102 = vunpack.c.l.b16 %v76
    %v103 = vunpack.c.l.b16 %v77
    %v104 = vunpack.c.l.b16 %v78
    %v105 = vunpack.c.l.b16 %v79
    %v106 = vpack.c.b16 %v99, %v98
    %v107 = vpack.c.b16 %v101, %v100
    %v108 = vpack.c.b16 %v103, %v102
    %v109 = vpack.c.b16 %v105, %v104
    %vm114 = vcmask 523264
    %v116 = vsel %vm114, %v88, 0
    %v119 = vsel %vm114, %v89, 0
    %121 = vmatprep.subr.bf16.mxu0 0
    %122 = vmatpush1.bf16.msra.mxu0 %v106
    %123 = vmatprep.subr.bf16.mxu0 0
    %124 = vmatpush1.bf16.msra.mxu0 %v107
    %125 = vmatprep.subr.bf16.mxu0 0
    %126 = vmatpush1.bf16.msra.mxu0 %v108
    %127 = vmatprep.subr.bf16.mxu0 0
    %128 = vmatpush1.bf16.msra.mxu0 %v109
    %129 = vmatprep.subr.bf16.mxu0 0
    %130 = vmatpush1.bf16.msra.mxu0 0
    %131 = vmatprep.subr.bf16.mxu0 0
    %132 = vmatpush1.bf16.msra.mxu0 0
    %133 = vmatprep.subr.bf16.mxu0 0
    %134 = vmatpush1.bf16.msra.mxu0 0
    %135 = vmatprep.subr.bf16.mxu0 0
    %136 = vmatpush1.bf16.msra.mxu0 0
    %137 = vmatprep.subr.bf16.mxu0 0
    %138 = vmatpush1.bf16.msra.mxu0 0
    %139 = vmatprep.subr.bf16.mxu0 0
    %140 = vmatpush1.bf16.msra.mxu0 0
    %141 = vmatprep.subr.bf16.mxu0 0
    %142 = vmatpush1.bf16.msra.mxu0 0
    %143 = vmatprep.subr.bf16.mxu0 0
    %144 = vmatpush1.bf16.msra.mxu0 0
    %145 = vmatprep.subr.bf16.mxu0 0
    %146 = vmatpush1.bf16.msra.mxu0 0
    %147 = vmatprep.subr.bf16.mxu0 0
    %148 = vmatpush1.bf16.msra.mxu0 0
    %149 = vmatprep.subr.bf16.mxu0 0
    %150 = vmatpush1.bf16.msra.mxu0 0
    %151 = vmatprep.subr.bf16.mxu0 0
    %152 = vmatpush1.bf16.msra.mxu0 0
    %153 = vmatprep.mubr.bf16.mxu0 0
    %154 = vmatmul.mubr.bf16.gmra.mrb[0].mxu0 %v116
    %v155 = vpop.f32.mrb[0].mxu0
    %v156 = vadd.f32 0.0, %v155
    %v157 = vpop.f32.mrb[0].mxu0
    %v158 = vpop.f32.mrb[0].mxu0
    %v159 = vadd.f32 0.0, %v158
    %v160 = vpop.f32.mrb[0].mxu0
    %161 = vmatprep.mubr.bf16.mxu0 0
    %162 = vmatmul.mubr.bf16.gmra.mrb[0].mxu0 %v119
    %v163 = vpop.f32.mrb[0].mxu0
    %v164 = vadd.f32 0.0, %v163
    %v165 = vpop.f32.mrb[0].mxu0
    %v166 = vpop.f32.mrb[0].mxu0
    %v167 = vadd.f32 0.0, %v166
    %v168 = vpop.f32.mrb[0].mxu0
    %169 = vdwg.mxu0
    %v170 = vadd.f32 %v64, %v156
    %v171 = vadd.f32 %v65, %v159
    %v172 = vadd.f32 %v66, %v164
    %v173 = vadd.f32 %v67, %v167
    %vm174 = vcmask 261120
    %175 = vst.msk [vmem:[#allocation2] sm:$0xff] %vm174, %v170
    %176 = vst.msk [vmem:[#allocation2 + $0x8] sm:$0xff] %vm174, %v171
    %177 = vst.msk [vmem:[#allocation2 + $0x10] sm:$0xff] %vm174, %v172
    %178 = vst.msk [vmem:[#allocation2 + $0x18] sm:$0xff] %vm174, %v173
    // Predicated region
    $region30: #{vit_bottleneck_forward.10} parent=1 // pred_check
      %p179 = pneg %p55
    $region31: #{vit_bottleneck_forward.10} parent=1 // pred_check_branch
      %181 = sbr.rel (%p179) target = $region33
    $region32: #{vit_bottleneck_forward.10} parent=1 // pred_region
      %v182 = vld [vmem:[#allocation2] sm:$0xff]
      %v183 = vld [vmem:[#allocation2 + $0x8] sm:$0xff]
      %v184 = vld [vmem:[#allocation2 + $0x10] sm:$0xff]
      %v185 = vld [vmem:[#allocation2 + $0x18] sm:$0xff]
      %v186 = vld [vmem:[#allocation8] sm:$0x1]
      %v188 = vlaneseq
      %v189 = vshrl.u32 %v188, 7
      %v190 = vsub.s32 0, %v189
      %v191 = vrot.slane %v186, %v190
      %v193 = vadd.f32 %v182, %v191
      %v194 = vadd.f32 %v183, %v191
      %v195 = vadd.f32 %v184, %v191
      %v196 = vadd.f32 %v185, %v191
      %v197 = vpack.c.bf16 %v194, %v193
      %v198 = vpack.c.bf16 %v196, %v195
      %v201 = vunpack.c.l.b16 %v197
      %v202 = vunpack.c.h.b16 %v197
      %v203 = vunpack.c.l.b16 %v198
      %v204 = vunpack.c.h.b16 %v198
      %v205 = vpack.c.b16 %v201, %v201
      %v206 = vpack.c.b16 %v202, %v202
      %v207 = vpack.c.b16 %v203, %v203
      %v208 = vpack.c.b16 %v204, %v204
      %vm213 = vcmask 257024
      %214 = vst.msk [vmem:[#allocation9] sm:$0xf] %vm213, %v205
      %215 = vst.msk [vmem:[#allocation9 + $0x4] sm:$0xf] %vm213, %v206
      %216 = vst.msk [vmem:[#allocation9 + $0x8] sm:$0xf] %vm213, %v207
      %217 = vst.msk [vmem:[#allocation9 + $0xc] sm:$0xf] %vm213, %v208
    $region33: #{vit_bottleneck_forward.10} parent=1 // pred_fallthru
      _
    // Predicated region
    $region34: #{vit_bottleneck_forward.10} parent=1 // pred_check
      _
    $region35: #{vit_bottleneck_forward.10} parent=1 // pred_check_branch
      %219 = sbr.rel (0) target = $region37
    $region36: #{vit_bottleneck_forward.10} parent=1 // pred_region
      %s221 = ssub.s32 256, 256
      %222 = vsyncadd [#allocation5], %s221
      %s223 = sshll.u32 [#allocation9], 4
      %s224 = int_to_ptr.vmem [resolvable:$true] %s223
      %229 = dma.vmem_to_hbm [thread:$0]  %s224, 256, %s3, [#allocation5], 64, 64, 4
    $region37: #{vit_bottleneck_forward.10} parent=1 // pred_fallthru
      _
    // Predicated region
    $region38: #{vit_bottleneck_forward.10} parent=1 // pred_check
      _
    $region39: #{vit_bottleneck_forward.10} parent=1 // pred_check_branch
      %231 = sbr.rel (0) target = $region41
    $region40: #{vit_bottleneck_forward.10} parent=1 // pred_region
      %232 = dma.done [#allocation5], 256
    $region41: #{vit_bottleneck_forward.10} parent=1 // pred_fallthru
      _
    %233 = vsyncpa [#allocation4], 1
    %234 = vsyncpa [#allocation7], 1
    %235 = vsyncpa [#allocation5], 1

// kernel: vit_bottleneck_forward.11
$region0: #{vit_bottleneck_forward.11}
  #allocation0 [shape = 'u32[]', space=smem, size = 0x4, offset = 0x4, fixed_abs, tag = 'smem constant byte address 0x4 - core index']
  #allocation1 [shape = 'u32[144,128]{1,0:T(1,128)}', space=vmem, size = 0x12000, scoped, tag = 'internal scratch']
  #allocation2 [shape = 'f32[48,96]{1,0:T(8,128)}', space=vmem, size = 0x6000, scoped, tag = 'scratch operand']
  %s0 = inlined_call_operand.hbm [shape: bf16[48,32], index: 0, kind: input, shape index: {}]
  %s1 = inlined_call_operand.hbm [shape: bf16[32,96], index: 1, kind: input, shape index: {}]
  %s2 = inlined_call_operand.hbm [shape: f32[1,96], index: 2, kind: input, shape index: {}]
  %s3 = inlined_call_operand.hbm [shape: bf16[48,96], index: 3, kind: output, shape index: {}]
  %s4 = sld [smem:[#allocation0]]
  $region42: #{vit_bottleneck_forward.11} parent=0
    _
  %s6 = ssub.s32 1, %s4
  %s7 = scalar_select 0, %s6, %s4
  $region1: #{vit_bottleneck_forward.11} parent=0
    #allocation3 [shape = 'u8[12288]{0}', space=vmem, size = 0x3000, scoped, tag = 'input window, operand 0, single buffered']
    #allocation4 [shape = 's32[1]{0}', space=sflag, size = 0x4, scoped, tag = 'scoped memory for vit_bottleneck_forward.11']
    #allocation5 [shape = 's32[1]{0}', space=sflag, size = 0x4, scoped, tag = 'scoped memory for vit_bottleneck_forward.11']
    #allocation6 [shape = 'u8[8192]{0}', space=vmem, size = 0x2000, scoped, tag = 'input window, operand 1, single buffered']
    #allocation7 [shape = 's32[1]{0}', space=sflag, size = 0x4, scoped, tag = 'scoped memory for vit_bottleneck_forward.11']
    #allocation8 [shape = 'u8[512]{0}', space=vmem, size = 0x400, scoped, tag = 'input window, operand 2, single buffered']
    #allocation9 [shape = 'u8[12288]{0}', space=vmem, size = 0x3000, scoped, tag = 'output window, operand 0, single buffered']
    %8 = vsyncpa [#allocation4], 0
    %9 = vsyncpa [#allocation7], 0
    %10 = vsyncpa [#allocation5], 0
    // Predicated region
    $region2: #{vit_bottleneck_forward.11} parent=1 // pred_check
      _
    $region3: #{vit_bottleneck_forward.11} parent=1 // pred_check_branch
      %12 = sbr.rel (0) target = $region5
    $region4: #{vit_bottleneck_forward.11} parent=1 // pred_region
      %s14 = ssub.s32 384, 384
      %15 = vsyncadd [#allocation4], %s14
      %s16 = sshll.u32 [#allocation3], 4
      %s17 = int_to_ptr.vmem [resolvable:$true] %s16
      %22 = dma.hbm_to_vmem [thread:$0]  %s0, 384, %s17, [#allocation4], 64, 64, 4
    $region5: #{vit_bottleneck_forward.11} parent=1 // pred_fallthru
      _
    // Predicated region
    $region6: #{vit_bottleneck_forward.11} parent=1 // pred_check
      _
    $region7: #{vit_bottleneck_forward.11} parent=1 // pred_check_branch
      %24 = sbr.rel (0) target = $region9
    $region8: #{vit_bottleneck_forward.11} parent=1 // pred_region
      %s26 = ssub.s32 256, 256
      %27 = vsyncadd [#allocation7], %s26
      %s28 = sshll.u32 [#allocation6], 4
      %s29 = int_to_ptr.vmem [resolvable:$true] %s28
      %34 = dma.hbm_to_vmem [thread:$0]  %s1, 256, %s29, [#allocation7], 64, 64, 4
    $region9: #{vit_bottleneck_forward.11} parent=1 // pred_fallthru
      _
    // Predicated region
    $region10: #{vit_bottleneck_forward.11} parent=1 // pred_check
      _
    $region11: #{vit_bottleneck_forward.11} parent=1 // pred_check_branch
      %36 = sbr.rel (0) target = $region13
    $region12: #{vit_bottleneck_forward.11} parent=1 // pred_region
      %s38 = ssub.s32 16, 16
      %39 = vsyncadd [#allocation7], %s38
      %s41 = sshll.u32 [#allocation8], 4
      %s42 = int_to_ptr.vmem [resolvable:$true] %s41
      %44 = dma.hbm_to_vmem [thread:$0]  %s2, 16, %s42, [#allocation7]
    $region13: #{vit_bottleneck_forward.11} parent=1 // pred_fallthru
      _
    // Predicated region
    $region14: #{vit_bottleneck_forward.11} parent=1 // pred_check
      _
    $region15: #{vit_bottleneck_forward.11} parent=1 // pred_check_branch
      %46 = sbr.rel (0) target = $region17
    $region16: #{vit_bottleneck_forward.11} parent=1 // pred_region
      %47 = dma.done [#allocation4], 384
    $region17: #{vit_bottleneck_forward.11} parent=1 // pred_fallthru
      _
    // Predicated region
    $region18: #{vit_bottleneck_forward.11} parent=1 // pred_check
      _
    $region19: #{vit_bottleneck_forward.11} parent=1 // pred_check_branch
      %49 = sbr.rel (0) target = $region21
    $region20: #{vit_bottleneck_forward.11} parent=1 // pred_region
      %50 = dma.done [#allocation7], 256
    $region21: #{vit_bottleneck_forward.11} parent=1 // pred_fallthru
      _
    // Predicated region
    $region22: #{vit_bottleneck_forward.11} parent=1 // pred_check
      _
    $region23: #{vit_bottleneck_forward.11} parent=1 // pred_check_branch
      %52 = sbr.rel (0) target = $region25
    $region24: #{vit_bottleneck_forward.11} parent=1 // pred_region
      %53 = dma.done [#allocation7], 16
    $region25: #{vit_bottleneck_forward.11} parent=1 // pred_fallthru
      _
    %p55 = scmp.eq.s32.totalorder 0, 0
    // Predicated region
    $region26: #{vit_bottleneck_forward.11} parent=1 // pred_check
      %p56 = pneg %p55
    $region27: #{vit_bottleneck_forward.11} parent=1 // pred_check_branch
      %58 = sbr.rel (%p56) target = $region29
    $region28: #{vit_bottleneck_forward.11} parent=1 // pred_region
      %vm59 = vcmask 785408
      %60 = vst.msk [vmem:[#allocation2] sm:$0xff] %vm59, 0.0
      %61 = vst.msk [vmem:[#allocation2 + $0x8] sm:$0xff] %vm59, 0.0
      %62 = vst.msk [vmem:[#allocation2 + $0x10] sm:$0xff] %vm59, 0.0
      %63 = vst.msk [vmem:[#allocation2 + $0x18] sm:$0xff] %vm59, 0.0
      %64 = vst.msk [vmem:[#allocation2 + $0x20] sm:$0xff] %vm59, 0.0
      %65 = vst.msk [vmem:[#allocation2 + $0x28] sm:$0xff] %vm59, 0.0
    $region29: #{vit_bottleneck_forward.11} parent=1 // pred_fallthru
      _
    %v66 = vld [vmem:[#allocation2] sm:$0xff]
    %v67 = vld [vmem:[#allocation2 + $0x8] sm:$0xff]
    %v68 = vld [vmem:[#allocation2 + $0x10] sm:$0xff]
    %v69 = vld [vmem:[#allocation2 + $0x18] sm:$0xff]
    %v70 = vld [vmem:[#allocation2 + $0x20] sm:$0xff]
    %v71 = vld [vmem:[#allocation2 + $0x28] sm:$0xff]
    %v72 = vld [vmem:[#allocation3] sm:$0xf]
    %v73 = vld [vmem:[#allocation3 + $0x4] sm:$0xf]
    %v74 = vld [vmem:[#allocation3 + $0x8] sm:$0xf]
    %v75 = vld [vmem:[#allocation3 + $0xc] sm:$0xf]
    %v76 = vld [vmem:[#allocation3 + $0x10] sm:$0xf]
    %v77 = vld [vmem:[#allocation3 + $0x14] sm:$0xf]
    %v78 = vld [vmem:[#allocation6] sm:$0xf]
    %v79 = vld [vmem:[#allocation6 + $0x4] sm:$0xf]
    %v80 = vld [vmem:[#allocation6 + $0x8] sm:$0xf]
    %v81 = vld [vmem:[#allocation6 + $0xc] sm:$0xf]
    %v88 = vunpack.c.l.b16 %v72
    %v89 = vunpack.c.l.b16 %v73
    %v90 = vunpack.c.l.b16 %v74
    %v91 = vunpack.c.l.b16 %v75
    %v92 = vunpack.c.l.b16 %v76
    %v93 = vunpack.c.l.b16 %v77
    %v94 = vpack.c.b16 %v89, %v88
    %v95 = vpack.c.b16 %v91, %v90
    %v96 = vpack.c.b16 %v93, %v92
    %v101 = vunpack.c.l.b16 %v78
    %v102 = vunpack.c.l.b16 %v79
    %v103 = vunpack.c.l.b16 %v80
    %v104 = vunpack.c.l.b16 %v81
    %v105 = vpack.c.b16 %v102, %v101
    %v106 = vpack.c.b16 %v104, %v103
    %vm109 = vcmask 261120
    %v111 = vsel %vm109, %v94, 0
    %v114 = vsel %vm109, %v95, 0
    %v117 = vsel %vm109, %v96, 0
    %119 = vmatprep.subr.bf16.mxu0 0
    %120 = vmatpush1.bf16.msra.mxu0 %v105
    %121 = vmatprep.subr.bf16.mxu0 0
    %122 = vmatpush1.bf16.msra.mxu0 %v106
    %123 = vmatprep.subr.bf16.mxu0 0
    %124 = vmatpush1.bf16.msra.mxu0 0
    %125 = vmatprep.subr.bf16.mxu0 0
    %126 = vmatpush1.bf16.msra.mxu0 0
    %127 = vmatprep.subr.bf16.mxu0 0
    %128 = vmatpush1.bf16.msra.mxu0 0
    %129 = vmatprep.subr.bf16.mxu0 0
    %130 = vmatpush1.bf16.msra.mxu0 0
    %131 = vmatprep.subr.bf16.mxu0 0
    %132 = vmatpush1.bf16.msra.mxu0 0
    %133 = vmatprep.subr.bf16.mxu0 0
    %134 = vmatpush1.bf16.msra.mxu0 0
    %135 = vmatprep.subr.bf16.mxu0 0
    %136 = vmatpush1.bf16.msra.mxu0 0
    %137 = vmatprep.subr.bf16.mxu0 0
    %138 = vmatpush1.bf16.msra.mxu0 0
    %139 = vmatprep.subr.bf16.mxu0 0
    %140 = vmatpush1.bf16.msra.mxu0 0
    %141 = vmatprep.subr.bf16.mxu0 0
    %142 = vmatpush1.bf16.msra.mxu0 0
    %143 = vmatprep.subr.bf16.mxu0 0
    %144 = vmatpush1.bf16.msra.mxu0 0
    %145 = vmatprep.subr.bf16.mxu0 0
    %146 = vmatpush1.bf16.msra.mxu0 0
    %147 = vmatprep.subr.bf16.mxu0 0
    %148 = vmatpush1.bf16.msra.mxu0 0
    %149 = vmatprep.subr.bf16.mxu0 0
    %150 = vmatpush1.bf16.msra.mxu0 0
    %151 = vmatprep.mubr.bf16.mxu0 0
    %152 = vmatmul.mubr.bf16.gmra.mrb[0].mxu0 %v111
    %v153 = vpop.f32.mrb[0].mxu0
    %v154 = vadd.f32 0.0, %v153
    %v155 = vpop.f32.mrb[0].mxu0
    %v156 = vpop.f32.mrb[0].mxu0
    %v157 = vadd.f32 0.0, %v156
    %v158 = vpop.f32.mrb[0].mxu0
    %159 = vmatprep.mubr.bf16.mxu0 0
    %160 = vmatmul.mubr.bf16.gmra.mrb[0].mxu0 %v114
    %v161 = vpop.f32.mrb[0].mxu0
    %v162 = vadd.f32 0.0, %v161
    %v163 = vpop.f32.mrb[0].mxu0
    %v164 = vpop.f32.mrb[0].mxu0
    %v165 = vadd.f32 0.0, %v164
    %v166 = vpop.f32.mrb[0].mxu0
    %167 = vmatprep.mubr.bf16.mxu0 0
    %168 = vmatmul.mubr.bf16.gmra.mrb[0].mxu0 %v117
    %v169 = vpop.f32.mrb[0].mxu0
    %v170 = vadd.f32 0.0, %v169
    %v171 = vpop.f32.mrb[0].mxu0
    %v172 = vpop.f32.mrb[0].mxu0
    %v173 = vadd.f32 0.0, %v172
    %v174 = vpop.f32.mrb[0].mxu0
    %175 = vdwg.mxu0
    %v176 = vadd.f32 %v66, %v154
    %v177 = vadd.f32 %v67, %v157
    %v178 = vadd.f32 %v68, %v162
    %v179 = vadd.f32 %v69, %v165
    %v180 = vadd.f32 %v70, %v170
    %v181 = vadd.f32 %v71, %v173
    %vm182 = vcmask 785408
    %183 = vst.msk [vmem:[#allocation2] sm:$0xff] %vm182, %v176
    %184 = vst.msk [vmem:[#allocation2 + $0x8] sm:$0xff] %vm182, %v177
    %185 = vst.msk [vmem:[#allocation2 + $0x10] sm:$0xff] %vm182, %v178
    %186 = vst.msk [vmem:[#allocation2 + $0x18] sm:$0xff] %vm182, %v179
    %187 = vst.msk [vmem:[#allocation2 + $0x20] sm:$0xff] %vm182, %v180
    %188 = vst.msk [vmem:[#allocation2 + $0x28] sm:$0xff] %vm182, %v181
    // Predicated region
    $region30: #{vit_bottleneck_forward.11} parent=1 // pred_check
      %p189 = pneg %p55
    $region31: #{vit_bottleneck_forward.11} parent=1 // pred_check_branch
      %191 = sbr.rel (%p189) target = $region33
    $region32: #{vit_bottleneck_forward.11} parent=1 // pred_region
      %v192 = vld [vmem:[#allocation2] sm:$0xff]
      %v193 = vld [vmem:[#allocation2 + $0x8] sm:$0xff]
      %v194 = vld [vmem:[#allocation2 + $0x10] sm:$0xff]
      %v195 = vld [vmem:[#allocation2 + $0x18] sm:$0xff]
      %v196 = vld [vmem:[#allocation2 + $0x20] sm:$0xff]
      %v197 = vld [vmem:[#allocation2 + $0x28] sm:$0xff]
      %v198 = vld [vmem:[#allocation8] sm:$0x1]
      %v200 = vlaneseq
      %v201 = vshrl.u32 %v200, 7
      %v202 = vsub.s32 0, %v201
      %v203 = vrot.slane %v198, %v202
      %v205 = vadd.f32 %v192, %v203
      %v206 = vadd.f32 %v193, %v203
      %v207 = vadd.f32 %v194, %v203
      %v208 = vadd.f32 %v195, %v203
      %v209 = vadd.f32 %v196, %v203
      %v210 = vadd.f32 %v197, %v203
      %v211 = vpack.c.bf16 %v206, %v205
      %v212 = vpack.c.bf16 %v208, %v207
      %v213 = vpack.c.bf16 %v210, %v209
      %v217 = vunpack.c.l.b16 %v211
      %v218 = vunpack.c.h.b16 %v211
      %v219 = vunpack.c.l.b16 %v212
      %v220 = vunpack.c.h.b16 %v212
      %v221 = vunpack.c.l.b16 %v213
      %v222 = vunpack.c.h.b16 %v213
      %v223 = vpack.c.b16 %v217, %v217
      %v224 = vpack.c.b16 %v218, %v218
      %v225 = vpack.c.b16 %v219, %v219
      %v226 = vpack.c.b16 %v220, %v220
      %v227 = vpack.c.b16 %v221, %v221
      %v228 = vpack.c.b16 %v222, %v222
      %vm235 = vcmask 781312
      %236 = vst.msk [vmem:[#allocation9] sm:$0xf] %vm235, %v223
      %237 = vst.msk [vmem:[#allocation9 + $0x4] sm:$0xf] %vm235, %v224
      %238 = vst.msk [vmem:[#allocation9 + $0x8] sm:$0xf] %vm235, %v225
      %239 = vst.msk [vmem:[#allocation9 + $0xc] sm:$0xf] %vm235, %v226
      %240 = vst.msk [vmem:[#allocation9 + $0x10] sm:$0xf] %vm235, %v227
      %241 = vst.msk [vmem:[#allocation9 + $0x14] sm:$0xf] %vm235, %v228
    $region33: #{vit_bottleneck_forward.11} parent=1 // pred_fallthru
      _
    // Predicated region
    $region34: #{vit_bottleneck_forward.11} parent=1 // pred_check
      _
    $region35: #{vit_bottleneck_forward.11} parent=1 // pred_check_branch
      %243 = sbr.rel (0) target = $region37
    $region36: #{vit_bottleneck_forward.11} parent=1 // pred_region
      %s245 = ssub.s32 384, 384
      %246 = vsyncadd [#allocation5], %s245
      %s247 = sshll.u32 [#allocation9], 4
      %s248 = int_to_ptr.vmem [resolvable:$true] %s247
      %253 = dma.vmem_to_hbm [thread:$0]  %s248, 384, %s3, [#allocation5], 64, 64, 4
    $region37: #{vit_bottleneck_forward.11} parent=1 // pred_fallthru
      _
    // Predicated region
    $region38: #{vit_bottleneck_forward.11} parent=1 // pred_check
      _
    $region39: #{vit_bottleneck_forward.11} parent=1 // pred_check_branch
      %255 = sbr.rel (0) target = $region41
    $region40: #{vit_bottleneck_forward.11} parent=1 // pred_region
      %256 = dma.done [#allocation5], 384
    $region41: #{vit_bottleneck_forward.11} parent=1 // pred_fallthru
      _
    %257 = vsyncpa [#allocation4], 1
    %258 = vsyncpa [#allocation7], 1
    %259 = vsyncpa [#allocation5], 1

// kernel: vit_bottleneck_forward.12
$region0: #{vit_bottleneck_forward.12}
  #allocation0 [shape = 'u32[]', space=smem, size = 0x4, offset = 0x4, fixed_abs, tag = 'smem constant byte address 0x4 - core index']
  #allocation1 [shape = 'u32[144,128]{1,0:T(1,128)}', space=vmem, size = 0x12000, scoped, tag = 'internal scratch']
  #allocation2 [shape = 'f32[24,1]{1,0:T(8,128)}', space=vmem, size = 0x3000, scoped, tag = 'scratch operand']
  #allocation3 [shape = 'f32[24,1]{1,0:T(8,128)}', space=vmem, size = 0x3000, scoped, tag = 'scratch operand']
  #allocation4 [shape = 'f32[24,8]{1,0:T(8,128)}', space=vmem, size = 0x3000, scoped, tag = 'scratch operand']
  %s0 = inlined_call_operand.hbm [shape: bf16[3,2,4,24,8], index: 0, kind: input, shape index: {}, may-alias: {0,1,2}]
  %s1 = inlined_call_operand.hbm [shape: bf16[3,2,4,24,8], index: 1, kind: input, shape index: {}, may-alias: {0,1,2}]
  %s2 = inlined_call_operand.hbm [shape: bf16[3,2,4,24,8], index: 2, kind: input, shape index: {}, may-alias: {0,1,2}]
  %s3 = inlined_call_operand.hbm [shape: bf16[2,4,24,8], index: 3, kind: output, shape index: {}]
  %s4 = sld [smem:[#allocation0]]
  $region65: #{vit_bottleneck_forward.12} parent=0
    _
  %s6 = ssub.s32 1, %s4
  %s7 = scalar_select 0, %s6, %s4
  $region1: #{vit_bottleneck_forward.12} parent=0
    #allocation5 [shape = 'u8[12288]{0}', space=vmem, size = 0x3000, scoped, tag = 'input window, operand 0']
    #allocation6 [shape = 's32[2]{0}', space=sflag, size = 0x8, scoped, tag = 'scoped memory for vit_bottleneck_forward.12']
    #allocation7 [shape = 's32[2]{0}', space=sflag, size = 0x8, scoped, tag = 'scoped memory for vit_bottleneck_forward.12']
    #allocation8 [shape = 'u8[12288]{0}', space=vmem, size = 0x3000, scoped, tag = 'input window, operand 1']
    #allocation9 [shape = 's32[2]{0}', space=sflag, size = 0x8, scoped, tag = 'scoped memory for vit_bottleneck_forward.12']
    #allocation10 [shape = 'u8[12288]{0}', space=vmem, size = 0x3000, scoped, tag = 'input window, operand 2']
    #allocation11 [shape = 'u8[12288]{0}', space=vmem, size = 0x3000, scoped, tag = 'output window, operand 0']
    %8 = vsyncpa [#allocation6], 0
    %s9 = scalar_lea.sflag [#allocation6], 1
    %10 = vsyncpa %s9, 0
    %11 = vsyncpa [#allocation9], 0
    %s12 = scalar_lea.sflag [#allocation9], 1
    %13 = vsyncpa %s12, 0
    %14 = vsyncpa [#allocation7], 0
    %s15 = scalar_lea.sflag [#allocation7], 1
    %16 = vsyncpa %s15, 0
    loop: start=0, step=1, limit=10
    $region2: #{vit_bottleneck_forward.12} parent=1 // loop_pre_header
      _
    $region3: #{vit_bottleneck_forward.12} parent=1 // loop_header
      %s18 = sphi 0, %s22
      %p19 = scmp.ge.s32.totalorder %s18, 10
      %s25 = sphi 0, %s51
      %s26 = sphi 0, %s47
      %s27 = sphi 0, %s43
      %s28 = sphi 0, %s39
      %s29 = sphi 0, %s25
      %s30 = sphi 0, %s26
      %s31 = sphi 0, %s27
      %s32 = sphi 0, %s28
      %s33 = sphi 0, %s29
      %s34 = sphi 0, %s30
      %s35 = sphi 0, %s31
      %s36 = sphi 0, %s32
      %s58 = sphi 0, %s60
      %s61 = sphi 0, %s58
      %s62 = sphi 0, %s61
      %s78 = sphi 0, %s62
      %s88 = sphi 0, %s90
      %s91 = sphi 0, %s88
      %s92 = sphi 0, %s91
      %s108 = sphi 0, %s92
      %s118 = sphi 0, %s120
      %s121 = sphi 0, %s118
      %s122 = sphi 0, %s121
      %s138 = sphi 0, %s122
      %s148 = sphi 0, %s150
      %s151 = sphi 0, %s148
      %s152 = sphi 0, %s151
      %s168 = sphi 0, %s152
    $region4: #{vit_bottleneck_forward.12} parent=1 // loop_header_branch
      %21 = sbr.rel (%p19) target = $region8
    $region5: #{vit_bottleneck_forward.12} parent=1 // loop_body
      %s23 = ssub.s32 %s18, 1
      %s24 = ssub.s32 %s18, 2
      %s37 = sadd.s32 1, %s28
      %p38 = scmp.ge.s32.totalorder %s37, 1
      %s39 = scalar_select %p38, 0, %s37
      %s40 = sadd.s32 1, %s27
      %s41 = scalar_select %p38, %s40, %s27
      %p42 = scmp.ge.s32.totalorder %s41, 1
      %s43 = scalar_select %p42, 0, %s41
      %s44 = sadd.s32 1, %s26
      %s45 = scalar_select %p42, %s44, %s26
      %p46 = scmp.ge.s32.totalorder %s45, 4
      %s47 = scalar_select %p46, 0, %s45
      %s48 = sadd.s32 1, %s25
      %s49 = scalar_select %p46, %s48, %s25
      %p50 = scmp.ge.s32.totalorder %s49, 2
      %s51 = scalar_select %p50, 0, %s49
      %s52 = ssub.s32 %s25, %s51
      %s53 = ssub.s32 %s26, %s47
      %s54 = sor.u32 %s52, %s53
      %s55 = ssub.s32 %s27, %s43
      %s56 = sor.u32 %s54, %s55
      %p57 = scmp.eq.s32.totalorder %s56, 0
      %s59 = sadd.s32 %s58, 1
      %s60 = scalar_select %p57, %s58, %s59
      %p63 = pneg %p57
      %p64 = scmp.eq.s32.totalorder %s18, 7
      %p65 = por %p63, %p64
      %p66 = scmp.ne.s32.totalorder %s58, %s61
      %p67 = scmp.eq.s32.totalorder %s18, 0
      %p68 = por %p66, %p67
      %p69 = scmp.ne.s32.totalorder %s58, %s61
      %p70 = scmp.eq.s32.totalorder %s23, 7
      %p71 = por %p69, %p70
      %p72 = scmp.ne.s32.totalorder %s61, %s62
      %p73 = scmp.eq.s32.totalorder %s23, 0
      %p74 = por %p72, %p73
      %p75 = scmp.ne.s32.totalorder %s61, %s62
      %p76 = scmp.eq.s32.totalorder %s24, 7
      %p77 = por %p75, %p76
      %p79 = scmp.ne.s32.totalorder %s62, %s78
      %p80 = scmp.eq.s32.totalorder %s24, 0
      %p81 = por %p79, %p80
      %s82 = ssub.s32 %s25, %s51
      %s83 = ssub.s32 %s26, %s47
      %s84 = sor.u32 %s82, %s83
      %s85 = ssub.s32 %s28, %s39
      %s86 = sor.u32 %s84, %s85
      %p87 = scmp.eq.s32.totalorder %s86, 0
      %s89 = sadd.s32 %s88, 1
      %s90 = scalar_select %p87, %s88, %s89
      %p93 = pneg %p87
      %p94 = scmp.eq.s32.totalorder %s18, 7
      %p95 = por %p93, %p94
      %p96 = scmp.ne.s32.totalorder %s88, %s91
      %p97 = scmp.eq.s32.totalorder %s18, 0
      %p98 = por %p96, %p97
      %p99 = scmp.ne.s32.totalorder %s88, %s91
      %p100 = scmp.eq.s32.totalorder %s23, 7
      %p101 = por %p99, %p100
      %p102 = scmp.ne.s32.totalorder %s91, %s92
      %p103 = scmp.eq.s32.totalorder %s23, 0
      %p104 = por %p102, %p103
      %p105 = scmp.ne.s32.totalorder %s91, %s92
      %p106 = scmp.eq.s32.totalorder %s24, 7
      %p107 = por %p105, %p106
      %p109 = scmp.ne.s32.totalorder %s92, %s108
      %p110 = scmp.eq.s32.totalorder %s24, 0
      %p111 = por %p109, %p110
      %s112 = ssub.s32 %s25, %s51
      %s113 = ssub.s32 %s26, %s47
      %s114 = sor.u32 %s112, %s113
      %s115 = ssub.s32 %s28, %s39
      %s116 = sor.u32 %s114, %s115
      %p117 = scmp.eq.s32.totalorder %s116, 0
      %s119 = sadd.s32 %s118, 1
      %s120 = scalar_select %p117, %s118, %s119
      %p123 = pneg %p117
      %p124 = scmp.eq.s32.totalorder %s18, 7
      %p125 = por %p123, %p124
      %p126 = scmp.ne.s32.totalorder %s118, %s121
      %p127 = scmp.eq.s32.totalorder %s18, 0
      %p128 = por %p126, %p127
      %p129 = scmp.ne.s32.totalorder %s118, %s121
      %p130 = scmp.eq.s32.totalorder %s23, 7
      %p131 = por %p129, %p130
      %p132 = scmp.ne.s32.totalorder %s121, %s122
      %p133 = scmp.eq.s32.totalorder %s23, 0
      %p134 = por %p132, %p133
      %p135 = scmp.ne.s32.totalorder %s121, %s122
      %p136 = scmp.eq.s32.totalorder %s24, 7
      %p137 = por %p135, %p136
      %p139 = scmp.ne.s32.totalorder %s122, %s138
      %p140 = scmp.eq.s32.totalorder %s24, 0
      %p141 = por %p139, %p140
      %s142 = ssub.s32 %s25, %s51
      %s143 = ssub.s32 %s26, %s47
      %s144 = sor.u32 %s142, %s143
      %s145 = ssub.s32 %s27, %s43
      %s146 = sor.u32 %s144, %s145
      %p147 = scmp.eq.s32.totalorder %s146, 0
      %s149 = sadd.s32 %s148, 1
      %s150 = scalar_select %p147, %s148, %s149
      %p153 = pneg %p147
      %p154 = scmp.eq.s32.totalorder %s18, 7
      %p155 = por %p153, %p154
      %p156 = scmp.ne.s32.totalorder %s148, %s151
      %p157 = scmp.eq.s32.totalorder %s18, 0
      %p158 = por %p156, %p157
      %p159 = scmp.ne.s32.totalorder %s148, %s151
      %p160 = scmp.eq.s32.totalorder %s23, 7
      %p161 = por %p159, %p160
      %p162 = scmp.ne.s32.totalorder %s151, %s152
      %p163 = scmp.eq.s32.totalorder %s23, 0
      %p164 = por %p162, %p163
      %p165 = scmp.ne.s32.totalorder %s151, %s152
      %p166 = scmp.eq.s32.totalorder %s24, 7
      %p167 = por %p165, %p166
      %p169 = scmp.ne.s32.totalorder %s152, %s168
      %p170 = scmp.eq.s32.totalorder %s24, 0
      %p171 = por %p169, %p170
      %p172 = scmp.le.s32.totalorder 1, %s18
      %p173 = scmp.lt.s32.totalorder %s18, 9
      %p174 = pnand %p172, %p173
      %p175 = pneg %p174
      // Predicated region
      $region9: #{vit_bottleneck_forward.12} parent=5 // pred_check
        _
      $region10: #{vit_bottleneck_forward.12} parent=5 // pred_check_branch
        %177 = sbr.rel (%p174) target = $region12
      $region11: #{vit_bottleneck_forward.12} parent=5 // pred_region
        %s178 = ssub.s32 %s18, 1
      $region12: #{vit_bottleneck_forward.12} parent=5 // pred_fallthru
        _
      %p179 = scmp.lt.s32.totalorder %s18, 8
      // Predicated region
      $region13: #{vit_bottleneck_forward.12} parent=5 // pred_check
        %p180 = pneg %p179
      $region14: #{vit_bottleneck_forward.12} parent=5 // pred_check_branch
        %182 = sbr.rel (%p180) target = $region16
      $region15: #{vit_bottleneck_forward.12} parent=5 // pred_region
        // Predicated region
        $region17: #{vit_bottleneck_forward.12} parent=15 // pred_check
          %p183 = pneg %p68
        $region18: #{vit_bottleneck_forward.12} parent=15 // pred_check_branch
          %185 = sbr.rel (%p183) target = $region20
        $region19: #{vit_bottleneck_forward.12} parent=15 // pred_region
          %s186 = sand.u32 %s58, 1
          %s187 = scalar_lea.sflag [#allocation6], %s186
          %s188 = sand.u32 %s58, 1
          %s189 = smul.addr %s188, 12
          %s190 = scalar_lea.vmem [#allocation5], %s189
          %s191 = smul.u32 3, %s27
          %s193 = ssub.s32 192, 192
          %194 = vsyncadd %s187, %s193
          %s195 = smul.addr %s26, 3
          %s196 = sadd.s32 %s191, %s195
          %s197 = smul.addr %s25, 12
          %s198 = sadd.s32 %s196, %s197
          %s199 = smul.addr %s198, 64
          %s200 = scalar_lea.hbm %s0, %s199
          %s201 = sshll.u32 %s190, 4
          %s202 = int_to_ptr.vmem [resolvable:$true] %s201
          %207 = dma.hbm_to_vmem [thread:$0]  %s200, 192, %s202, %s187, 64, 64, 4
        $region20: #{vit_bottleneck_forward.12} parent=15 // pred_fallthru
          _
        // Predicated region
        $region21: #{vit_bottleneck_forward.12} parent=15 // pred_check
          %p208 = pneg %p98
        $region22: #{vit_bottleneck_forward.12} parent=15 // pred_check_branch
          %210 = sbr.rel (%p208) target = $region24
        $region23: #{vit_bottleneck_forward.12} parent=15 // pred_region
          %s211 = sand.u32 %s18, 1
          %s212 = scalar_lea.sflag [#allocation9], %s211
          %s213 = sand.u32 %s88, 1
          %s214 = smul.addr %s213, 12
          %s215 = scalar_lea.vmem [#allocation8], %s214
          %s216 = smul.u32 3, %s28
          %s218 = ssub.s32 192, 192
          %219 = vsyncadd %s212, %s218
          %s220 = smul.addr %s26, 3
          %s221 = sadd.s32 %s216, %s220
          %s222 = smul.addr %s25, 12
          %s223 = sadd.s32 %s221, %s222
          %s224 = sadd.s32 %s223, 24
          %s225 = smul.addr %s224, 64
          %s226 = scalar_lea.hbm %s1, %s225
          %s227 = sshll.u32 %s215, 4
          %s228 = int_to_ptr.vmem [resolvable:$true] %s227
          %233 = dma.hbm_to_vmem [thread:$0]  %s226, 192, %s228, %s212, 64, 64, 4
        $region24: #{vit_bottleneck_forward.12} parent=15 // pred_fallthru
          _
        // Predicated region
        $region25: #{vit_bottleneck_forward.12} parent=15 // pred_check
          %p234 = pneg %p128
        $region26: #{vit_bottleneck_forward.12} parent=15 // pred_check_branch
          %236 = sbr.rel (%p234) target = $region28
        $region27: #{vit_bottleneck_forward.12} parent=15 // pred_region
          %s237 = sand.u32 %s18, 1
          %s238 = scalar_lea.sflag [#allocation9], %s237
          %s239 = sand.u32 %s118, 1
          %s240 = smul.addr %s239, 12
          %s241 = scalar_lea.vmem [#allocation10], %s240
          %s242 = smul.u32 3, %s28
          %s244 = ssub.s32 192, 192
          %245 = vsyncadd %s238, %s244
          %s246 = smul.addr %s26, 3
          %s247 = sadd.s32 %s242, %s246
          %s248 = smul.addr %s25, 12
          %s249 = sadd.s32 %s247, %s248
          %s250 = sadd.s32 %s249, 48
          %s251 = smul.addr %s250, 64
          %s252 = scalar_lea.hbm %s2, %s251
          %s253 = sshll.u32 %s241, 4
          %s254 = int_to_ptr.vmem [resolvable:$true] %s253
          %259 = dma.hbm_to_vmem [thread:$0]  %s252, 192, %s254, %s238, 64, 64, 4
        $region28: #{vit_bottleneck_forward.12} parent=15 // pred_fallthru
          _
      $region16: #{vit_bottleneck_forward.12} parent=5 // pred_fallthru
        _
      %p260 = scmp.le.s32.totalorder 1, %s18
      %p261 = scmp.lt.s32.totalorder %s18, 9
      %p262 = pnand %p260, %p261
      %p263 = pneg %p262
      // Predicated region
      $region29: #{vit_bottleneck_forward.12} parent=5 // pred_check
        _
      $region30: #{vit_bottleneck_forward.12} parent=5 // pred_check_branch
        %265 = sbr.rel (%p262) target = $region32
      $region31: #{vit_bottleneck_forward.12} parent=5 // pred_region
        %s266 = ssub.s32 %s18, 1
        %s267 = sand.u32 %s61, 1
        %s268 = scalar_lea.sflag [#allocation6], %s267
        %s269 = sand.u32 %s61, 1
        %s270 = smul.addr %s269, 12
        %s271 = scalar_lea.vmem [#allocation5], %s270
        // Predicated region
        $region33: #{vit_bottleneck_forward.12} parent=31 // pred_check
          %p272 = pneg %p74
        $region34: #{vit_bottleneck_forward.12} parent=31 // pred_check_branch
          %274 = sbr.rel (%p272) target = $region36
        $region35: #{vit_bottleneck_forward.12} parent=31 // pred_region
          %275 = dma.done %s268, 192
        $region36: #{vit_bottleneck_forward.12} parent=31 // pred_fallthru
          _
        %s276 = sand.u32 %s23, 1
        %s277 = scalar_lea.sflag [#allocation9], %s276
        %s278 = sand.u32 %s91, 1
        %s279 = smul.addr %s278, 12
        %s280 = scalar_lea.vmem [#allocation8], %s279
        // Predicated region
        $region37: #{vit_bottleneck_forward.12} parent=31 // pred_check
          %p281 = pneg %p104
        $region38: #{vit_bottleneck_forward.12} parent=31 // pred_check_branch
          %283 = sbr.rel (%p281) target = $region40
        $region39: #{vit_bottleneck_forward.12} parent=31 // pred_region
          %284 = dma.done %s277, 192
        $region40: #{vit_bottleneck_forward.12} parent=31 // pred_fallthru
          _
        %s285 = sand.u32 %s23, 1
        %s286 = scalar_lea.sflag [#allocation9], %s285
        %s287 = sand.u32 %s121, 1
        %s288 = smul.addr %s287, 12
        %s289 = scalar_lea.vmem [#allocation10], %s288
        // Predicated region
        $region41: #{vit_bottleneck_forward.12} parent=31 // pred_check
          %p290 = pneg %p134
        $region42: #{vit_bottleneck_forward.12} parent=31 // pred_check_branch
          %292 = sbr.rel (%p290) target = $region44
        $region43: #{vit_bottleneck_forward.12} parent=31 // pred_region
          %293 = dma.done %s286, 192
        $region44: #{vit_bottleneck_forward.12} parent=31 // pred_fallthru
          _
        %s294 = sand.u32 %s61, 1
        %s295 = scalar_lea.sflag [#allocation6], %s294
        %s296 = sand.u32 %s61, 1
        %s297 = smul.addr %s296, 12
        %s298 = scalar_lea.vmem [#allocation5], %s297
        %p299 = pneg %p74
        %p300 = pneg %p71
        %s301 = sand.u32 %s23, 1
        %s302 = scalar_lea.sflag [#allocation9], %s301
        %s303 = sand.u32 %s91, 1
        %s304 = smul.addr %s303, 12
        %s305 = scalar_lea.vmem [#allocation8], %s304
        %p306 = pneg %p104
        %p307 = pneg %p101
        %s308 = sand.u32 %s23, 1
        %s309 = scalar_lea.sflag [#allocation9], %s308
        %s310 = sand.u32 %s121, 1
        %s311 = smul.addr %s310, 12
        %s312 = scalar_lea.vmem [#allocation10], %s311
        %p313 = pneg %p134
        %p314 = pneg %p131
        %p315 = pneg %p164
        %p316 = pneg %p161
        %s317 = sand.u32 %s151, 1
        %s318 = scalar_lea.sflag [#allocation7], %s317
        %s319 = sand.u32 %s151, 1
        %s320 = smul.addr %s319, 12
        %s321 = scalar_lea.vmem [#allocation11], %s320
        %s322 = smul.u32 3, %s31
        %s323 = smul.u32 3, %s32
        %s324 = smul.u32 3, %s32
        %s325 = smul.u32 3, %s31
        %p327 = scmp.eq.s32.totalorder %s32, 0
        // Predicated region
        $region45: #{vit_bottleneck_forward.12} parent=31 // pred_check
          %p328 = pneg %p327
        $region46: #{vit_bottleneck_forward.12} parent=31 // pred_check_branch
          %330 = sbr.rel (%p328) target = $region48
        $region47: #{vit_bottleneck_forward.12} parent=31 // pred_region
          %vm331 = vcmask 7168
          %332 = vst.msk [vmem:[#allocation2] sm:$0xff] %vm331, -inf
          %333 = vst.msk [vmem:[#allocation2 + $0x8] sm:$0xff] %vm331, -inf
          %334 = vst.msk [vmem:[#allocation2 + $0x10] sm:$0xff] %vm331, -inf
          %335 = vst.msk [vmem:[#allocation3] sm:$0xff] %vm331, 0.0
          %336 = vst.msk [vmem:[#allocation3 + $0x8] sm:$0xff] %vm331, 0.0
          %337 = vst.msk [vmem:[#allocation3 + $0x10] sm:$0xff] %vm331, 0.0
          %vm338 = vcmask 64512
          %339 = vst.msk [vmem:[#allocation4] sm:$0xff] %vm338, 0.0
          %340 = vst.msk [vmem:[#allocation4 + $0x8] sm:$0xff] %vm338, 0.0
          %341 = vst.msk [vmem:[#allocation4 + $0x10] sm:$0xff] %vm338, 0.0
        $region48: #{vit_bottleneck_forward.12} parent=31 // pred_fallthru
          _
        %v342 = vld [vmem:[%s271] sm:$0xf]
        %v343 = vld [vmem:[%s271 + $0x4] sm:$0xf]
        %v344 = vld [vmem:[%s271 + $0x8] sm:$0xf]
        %v345 = vld [vmem:[%s280] sm:$0xf]
        %v346 = vld [vmem:[%s280 + $0x4] sm:$0xf]
        %v347 = vld [vmem:[%s280 + $0x8] sm:$0xf]
        %v351 = vunpack.c.l.b16 %v342
        %v352 = vunpack.c.l.b16 %v343
        %v353 = vunpack.c.l.b16 %v344
        %v354 = vpack.c.b16 %v352, %v351
        %v355 = vpack.c.b16 %v353, %v353
        %v359 = vunpack.c.l.b16 %v345
        %v360 = vunpack.c.l.b16 %v346
        %v361 = vunpack.c.l.b16 %v347
        %v362 = vpack.c.b16 %v360, %v359
        %v363 = vpack.c.b16 %v361, %v361
        %vm364 = vcmask 64512
        %v366 = vsel %vm364, %v354, 0
        %v369 = vsel %vm364, %v355, 0
        %v372 = vsel %vm364, %v362, 0
        %v375 = vsel %vm364, %v363, 0
        %377 = vmatprep.subr.bf16.mxu0 0
        %378 = vmatpush1.bf16.xpose.msra.mxu0 %v372
        %379 = vmatprep.subr.bf16.mxu0 0
        %380 = vmatpush1.bf16.xpose.msra.mxu0 %v375
        %381 = vmatprep.subr.bf16.mxu0 0
        %382 = vmatpush1.bf16.xpose.msra.mxu0 0
        %383 = vmatprep.subr.bf16.mxu0 0
        %384 = vmatpush1.bf16.xpose.msra.mxu0 0
        %385 = vmatprep.subr.bf16.mxu0 0
        %386 = vmatpush1.bf16.xpose.msra.mxu0 0
        %387 = vmatprep.subr.bf16.mxu0 0
        %388 = vmatpush1.bf16.xpose.msra.mxu0 0
        %389 = vmatprep.subr.bf16.mxu0 0
        %390 = vmatpush1.bf16.xpose.msra.mxu0 0
        %391 = vmatprep.subr.bf16.mxu0 0
        %392 = vmatpush1.bf16.xpose.msra.mxu0 0
        %393 = vmatprep.subr.bf16.mxu0 0
        %394 = vmatpush1.bf16.xpose.msra.mxu0 0
        %395 = vmatprep.subr.bf16.mxu0 0
        %396 = vmatpush1.bf16.xpose.msra.mxu0 0
        %397 = vmatprep.subr.bf16.mxu0 0
        %398 = vmatpush1.bf16.xpose.msra.mxu0 0
        %399 = vmatprep.subr.bf16.mxu0 0
        %400 = vmatpush1.bf16.xpose.msra.mxu0 0
        %401 = vmatprep.subr.bf16.mxu0 0
        %402 = vmatpush1.bf16.xpose.msra.mxu0 0
        %403 = vmatprep.subr.bf16.mxu0 0
        %404 = vmatpush1.bf16.xpose.msra.mxu0 0
        %405 = vmatprep.subr.bf16.mxu0 0
        %406 = vmatpush1.bf16.xpose.msra.mxu0 0
        %407 = vmatprep.subr.bf16.mxu0 0
        %408 = vmatpush1.bf16.xpose.msra.mxu0 0
        %409 = vmatprep.mubr.bf16.mxu0 0
        %410 = vmatmul.mubr.bf16.gmra.mrb[0].mxu0 %v366
        %v411 = vpop.f32.mrb[0].mxu0
        %v412 = vadd.f32 0.0, %v411
        %v413 = vpop.f32.mrb[0].mxu0
        %v414 = vpop.f32.mrb[0].mxu0
        %v415 = vadd.f32 0.0, %v414
        %v416 = vpop.f32.mrb[0].mxu0
        %417 = vmatprep.mubr.bf16.mxu0 0
        %418 = vmatmul.mubr.bf16.gmra.mrb[0].mxu0 %v369
        %v419 = vpop.f32.mrb[0].mxu0
        %v420 = vadd.f32 0.0, %v419
        %v421 = vpop.f32.mrb[0].mxu0
        %v422 = vpop.f32.mrb[0].mxu0
        %v423 = vpop.f32.mrb[0].mxu0
        %424 = vdwg.mxu0
        %s425 = smul.u32 %s32, 24
        %v426 = vlaneseq
        %v427 = vand.u32 %v426, 127
        %v428 = vstv %s425
        %v429 = vadd.s32 %v428, %v427
        %vm430 = vcmp.lt.s32.totalorder %v429, 17
        %v431 = vsel %vm430, 1, 0
        %vm432 = vcmp.eq.s32.totalorder %v431, 1
        %v433 = vsel %vm432, %v412, -1e+30
        %v434 = vsel %vm432, %v415, -1e+30
        %v435 = vsel %vm432, %v420, -1e+30
        %v436 = vld [vmem:[#allocation2] sm:$0xff]
        %v437 = vld [vmem:[#allocation2 + $0x8] sm:$0xff]
        %v438 = vld [vmem:[#allocation2 + $0x10] sm:$0xff]
        %vm439 = vcmask 195584
        %v440 = vsel %vm439, %v433, -inf
        %441 = vmax.xlane.f32.xlu0 %v440
        %v442 = vpop.xlane.xlu0 %441
        %v443 = vsel %vm439, %v434, -inf
        %444 = vmax.xlane.f32.xlu0 %v443
        %v445 = vpop.xlane.xlu0 %444
        %v446 = vsel %vm439, %v435, -inf
        %447 = vmax.xlane.f32.xlu0 %v446
        %v448 = vpop.xlane.xlu0 %447
        %v449 = vmax.f32 %v436, %v442
        %v450 = vmax.f32 %v437, %v445
        %v451 = vmax.f32 %v438, %v448
        %v452 = vsub.f32 %v436, %v449
        %v453 = vsub.f32 %v437, %v450
        %v454 = vsub.f32 %v438, %v451
        %v455 = vmul.f32 %v452, 1.442695
        %v456 = vpow.pop %v455
        %v457 = vmul.f32 %v453, 1.442695
        %v458 = vpow.pop %v457
        %v459 = vmul.f32 %v454, 1.442695
        %v460 = vpow.pop %v459
        %462 = vset.pattern.permute.xlu0 0
        %463 = vperm.xlu0 %462, %v449
        %v464 = vpop.permute.xlu0 %463
        %467 = vset.pattern.permute.xlu0 0
        %468 = vperm.xlu0 %467, %v450
        %v469 = vpop.permute.xlu0 %468
        %472 = vset.pattern.permute.xlu0 0
        %473 = vperm.xlu0 %472, %v451
        %v474 = vpop.permute.xlu0 %473
        %v476 = vsub.f32 %v433, %v464
        %v477 = vsub.f32 %v434, %v469
        %v478 = vsub.f32 %v435, %v474
        %v479 = vmul.f32 %v476, 1.442695
        %v480 = vpow.pop %v479
        %v481 = vmul.f32 %v477, 1.442695
        %v482 = vpow.pop %v481
        %v483 = vmul.f32 %v478, 1.442695
        %v484 = vpow.pop %v483
        %v485 = vld [vmem:[#allocation3] sm:$0xff]
        %v486 = vld [vmem:[#allocation3 + $0x8] sm:$0xff]
        %v487 = vld [vmem:[#allocation3 + $0x10] sm:$0xff]
        %v488 = vmul.f32 %v456, %v485
        %v489 = vmul.f32 %v458, %v486
        %v490 = vmul.f32 %v460, %v487
        %v491 = vsel %vm439, %v480, 0.0
        %492 = vadd.xlane.f32.xlu0 %v491
        %v493 = vpop.xlane.xlu0 %492
        %v494 = vsel %vm439, %v482, 0.0
        %495 = vadd.xlane.f32.xlu0 %v494
        %v496 = vpop.xlane.xlu0 %495
        %v497 = vsel %vm439, %v484, 0.0
        %498 = vadd.xlane.f32.xlu0 %v497
        %v499 = vpop.xlane.xlu0 %498
        %v500 = vadd.f32 %v488, %v493
        %v501 = vadd.f32 %v489, %v496
        %v502 = vadd.f32 %v490, %v499
        %vm503 = vcmask 7168
        %504 = vst.msk [vmem:[#allocation3] sm:$0xff] %vm503, %v500
        %505 = vst.msk [vmem:[#allocation3 + $0x8] sm:$0xff] %vm503, %v501
        %506 = vst.msk [vmem:[#allocation3 + $0x10] sm:$0xff] %vm503, %v502
        %v507 = vld [vmem:[#allocation4] sm:$0xff]
        %v508 = vld [vmem:[#allocation4 + $0x8] sm:$0xff]
        %v509 = vld [vmem:[#allocation4 + $0x10] sm:$0xff]
        %511 = vset.pattern.permute.xlu0 0
        %512 = vperm.xlu0 %511, %v456
        %v513 = vpop.permute.xlu0 %512
        %516 = vset.pattern.permute.xlu0 0
        %517 = vperm.xlu0 %516, %v458
        %v518 = vpop.permute.xlu0 %517
        %521 = vset.pattern.permute.xlu0 0
        %522 = vperm.xlu0 %521, %v460
        %v523 = vpop.permute.xlu0 %522
        %v525 = vmul.f32 %v513, %v507
        %v526 = vmul.f32 %v518, %v508
        %v527 = vmul.f32 %v523, %v509
        %v528 = vpack.c.bf16 %v482, %v480
        %v529 = vpack.c.bf16 %v484, %v484
        %v530 = vld [vmem:[%s289] sm:$0xf]
        %v531 = vld [vmem:[%s289 + $0x4] sm:$0xf]
        %v532 = vld [vmem:[%s289 + $0x8] sm:$0xf]
        %v536 = vunpack.c.l.b16 %v530
        %v537 = vunpack.c.l.b16 %v531
        %v538 = vunpack.c.l.b16 %v532
        %v539 = vpack.c.b16 %v537, %v536
        %v540 = vpack.c.b16 %v538, %v538
        %v543 = vsel %vm439, %v528, 0
        %v546 = vsel %vm439, %v529, 0
        %vm548 = vcmask 1043456
        %v550 = vsel %vm548, %v540, 0
        %552 = vmatprep.subr.bf16.mxu0 0
        %553 = vmatpush1.bf16.msra.mxu0 %v539
        %554 = vmatprep.subr.bf16.mxu0 0
        %555 = vmatpush1.bf16.msra.mxu0 %v550
        %556 = vmatprep.subr.bf16.mxu0 0
        %557 = vmatpush1.bf16.msra.mxu0 0
        %558 = vmatprep.subr.bf16.mxu0 0
        %559 = vmatpush1.bf16.msra.mxu0 0
        %560 = vmatprep.subr.bf16.mxu0 0
        %561 = vmatpush1.bf16.msra.mxu0 0
        %562 = vmatprep.subr.bf16.mxu0 0
        %563 = vmatpush1.bf16.msra.mxu0 0
        %564 = vmatprep.subr.bf16.mxu0 0
        %565 = vmatpush1.bf16.msra.mxu0 0
        %566 = vmatprep.subr.bf16.mxu0 0
        %567 = vmatpush1.bf16.msra.mxu0 0
        %568 = vmatprep.subr.bf16.mxu0 0
        %569 = vmatpush1.bf16.msra.mxu0 0
        %570 = vmatprep.subr.bf16.mxu0 0
        %571 = vmatpush1.bf16.msra.mxu0 0
        %572 = vmatprep.subr.bf16.mxu0 0
        %573 = vmatpush1.bf16.msra.mxu0 0
        %574 = vmatprep.subr.bf16.mxu0 0
        %575 = vmatpush1.bf16.msra.mxu0 0
        %576 = vmatprep.subr.bf16.mxu0 0
        %577 = vmatpush1.bf16.msra.mxu0 0
        %578 = vmatprep.subr.bf16.mxu0 0
        %579 = vmatpush1.bf16.msra.mxu0 0
        %580 = vmatprep.subr.bf16.mxu0 0
        %581 = vmatpush1.bf16.msra.mxu0 0
        %582 = vmatprep.subr.bf16.mxu0 0
        %583 = vmatpush1.bf16.msra.mxu0 0
        %584 = vmatprep.mubr.bf16.mxu0 0
        %585 = vmatmul.mubr.bf16.gmra.mrb[0].mxu0 %v543
        %v586 = vpop.f32.mrb[0].mxu0
        %v587 = vadd.f32 0.0, %v586
        %v588 = vpop.f32.mrb[0].mxu0
        %v589 = vpop.f32.mrb[0].mxu0
        %v590 = vadd.f32 0.0, %v589
        %v591 = vpop.f32.mrb[0].mxu0
        %592 = vmatprep.mubr.bf16.mxu0 0
        %593 = vmatmul.mubr.bf16.gmra.mrb[0].mxu0 %v546
        %v594 = vpop.f32.mrb[0].mxu0
        %v595 = vadd.f32 0.0, %v594
        %v596 = vpop.f32.mrb[0].mxu0
        %v597 = vpop.f32.mrb[0].mxu0
        %v598 = vpop.f32.mrb[0].mxu0
        %599 = vdwg.mxu0
        %v600 = vadd.f32 %v525, %v587
        %v601 = vadd.f32 %v526, %v590
        %v602 = vadd.f32 %v527, %v595
        %603 = vst.msk [vmem:[#allocation4] sm:$0xff] %vm364, %v600
        %604 = vst.msk [vmem:[#allocation4 + $0x8] sm:$0xff] %vm364, %v601
        %605 = vst.msk [vmem:[#allocation4 + $0x10] sm:$0xff] %vm364, %v602
        %606 = vst.msk [vmem:[#allocation2] sm:$0xff] %vm503, %v449
        %607 = vst.msk [vmem:[#allocation2 + $0x8] sm:$0xff] %vm503, %v450
        %608 = vst.msk [vmem:[#allocation2 + $0x10] sm:$0xff] %vm503, %v451
        // Predicated region
        $region49: #{vit_bottleneck_forward.12} parent=31 // pred_check
          %p609 = pneg %p327
        $region50: #{vit_bottleneck_forward.12} parent=31 // pred_check_branch
          %611 = sbr.rel (%p609) target = $region52
        $region51: #{vit_bottleneck_forward.12} parent=31 // pred_region
          %v612 = vld [vmem:[#allocation4] sm:$0xff]
          %v613 = vld [vmem:[#allocation4 + $0x8] sm:$0xff]
          %v614 = vld [vmem:[#allocation4 + $0x10] sm:$0xff]
          %v615 = vld [vmem:[#allocation3] sm:$0xff]
          %v616 = vld [vmem:[#allocation3 + $0x8] sm:$0xff]
          %v617 = vld [vmem:[#allocation3 + $0x10] sm:$0xff]
          %v618 = vrcp.pop %v615
          %v619 = vrcp.pop %v616
          %v620 = vrcp.pop %v617
          %622 = vset.pattern.permute.xlu0 0
          %623 = vperm.xlu0 %622, %v618
          %v624 = vpop.permute.xlu0 %623
          %627 = vset.pattern.permute.xlu0 0
          %628 = vperm.xlu0 %627, %v619
          %v629 = vpop.permute.xlu0 %628
          %632 = vset.pattern.permute.xlu0 0
          %633 = vperm.xlu0 %632, %v620
          %v634 = vpop.permute.xlu0 %633
          %v636 = vmul.f32 %v612, %v624
          %v637 = vmul.f32 %v613, %v629
          %v638 = vmul.f32 %v614, %v634
          %v639 = vpack.c.bf16 %v637, %v636
          %v640 = vpack.c.bf16 %v638, %v638
          %v643 = vunpack.c.l.b16 %v639
          %v644 = vunpack.c.h.b16 %v639
          %v645 = vunpack.c.l.b16 %v640
          %v646 = vpack.c.b16 %v643, %v643
          %v647 = vpack.c.b16 %v644, %v644
          %v648 = vpack.c.b16 %v645, %v645
          %vm652 = vcmask 60416
          %653 = vst.msk [vmem:[%s321] sm:$0xf] %vm652, %v646
          %654 = vst.msk [vmem:[%s321 + $0x4] sm:$0xf] %vm652, %v647
          %655 = vst.msk [vmem:[%s321 + $0x8] sm:$0xf] %vm652, %v648
        $region52: #{vit_bottleneck_forward.12} parent=31 // pred_fallthru
          _
        %s656 = sand.u32 %s151, 1
        %s657 = scalar_lea.sflag [#allocation7], %s656
        %s658 = sand.u32 %s151, 1
        %s659 = smul.addr %s658, 12
        %s660 = scalar_lea.vmem [#allocation11], %s659
        // Predicated region
        $region53: #{vit_bottleneck_forward.12} parent=31 // pred_check
          %p661 = pneg %p161
        $region54: #{vit_bottleneck_forward.12} parent=31 // pred_check_branch
          %663 = sbr.rel (%p661) target = $region56
        $region55: #{vit_bottleneck_forward.12} parent=31 // pred_region
          %s664 = smul.u32 3, %s31
          %s666 = ssub.s32 192, 192
          %667 = vsyncadd %s657, %s666
          %s668 = smul.addr %s30, 3
          %s669 = sadd.s32 %s664, %s668
          %s670 = smul.addr %s29, 12
          %s671 = sadd.s32 %s669, %s670
          %s672 = smul.addr %s671, 64
          %s673 = scalar_lea.hbm %s3, %s672
          %s674 = sshll.u32 %s660, 4
          %s675 = int_to_ptr.vmem [resolvable:$true] %s674
          %680 = dma.vmem_to_hbm [thread:$0]  %s675, 192, %s673, %s657, 64, 64, 4
        $region56: #{vit_bottleneck_forward.12} parent=31 // pred_fallthru
          _
      $region32: #{vit_bottleneck_forward.12} parent=5 // pred_fallthru
        _
      %p681 = scmp.le.s32.totalorder 2, %s18
      // Predicated region
      $region57: #{vit_bottleneck_forward.12} parent=5 // pred_check
        %p682 = pneg %p681
      $region58: #{vit_bottleneck_forward.12} parent=5 // pred_check_branch
        %684 = sbr.rel (%p682) target = $region60
      $region59: #{vit_bottleneck_forward.12} parent=5 // pred_region
        %s685 = ssub.s32 %s18, 2
        // Predicated region
        $region61: #{vit_bottleneck_forward.12} parent=59 // pred_check
          %p686 = pneg %p167
        $region62: #{vit_bottleneck_forward.12} parent=59 // pred_check_branch
          %688 = sbr.rel (%p686) target = $region64
        $region63: #{vit_bottleneck_forward.12} parent=59 // pred_region
          %s689 = sand.u32 %s152, 1
          %s690 = scalar_lea.sflag [#allocation7], %s689
          %s691 = sand.u32 %s152, 1
          %s692 = smul.addr %s691, 12
          %s693 = scalar_lea.vmem [#allocation11], %s692
          %694 = dma.done %s690, 192
        $region64: #{vit_bottleneck_forward.12} parent=59 // pred_fallthru
          _
      $region60: #{vit_bottleneck_forward.12} parent=5 // pred_fallthru
        _
    $region6: #{vit_bottleneck_forward.12} parent=1 // loop_footer
      %s22 = sadd.s32 1, %s18
    $region7: #{vit_bottleneck_forward.12} parent=1 // loop_footer_branch
      %17 = sbr.rel target = $region3
    $region8: #{vit_bottleneck_forward.12} parent=1 // loop_exit
      _
    %695 = vsyncpa [#allocation6], 1
    %s696 = scalar_lea.sflag [#allocation6], 1
    %697 = vsyncpa %s696, 1
    %698 = vsyncpa [#allocation9], 1
    %s699 = scalar_lea.sflag [#allocation9], 1
    %700 = vsyncpa %s699, 1
    %701 = vsyncpa [#allocation7], 1
    %s702 = scalar_lea.sflag [#allocation7], 1
    %703 = vsyncpa %s702, 1

// kernel: vit_bottleneck_forward.14
$region0: #{vit_bottleneck_forward.14}
  #allocation0 [shape = 'u32[]', space=smem, size = 0x4, offset = 0x4, fixed_abs, tag = 'smem constant byte address 0x4 - core index']
  #allocation1 [shape = 'u32[144,128]{1,0:T(1,128)}', space=vmem, size = 0x12000, scoped, tag = 'internal scratch']
  #allocation2 [shape = 'f32[48,32]{1,0:T(8,128)}', space=vmem, size = 0x6000, scoped, tag = 'scratch operand']
  %s0 = inlined_call_operand.hbm [shape: bf16[48,32], index: 0, kind: input, shape index: {}]
  %s1 = inlined_call_operand.hbm [shape: bf16[32,64], index: 1, kind: input, shape index: {}]
  %s2 = inlined_call_operand.hbm [shape: f32[1,64], index: 2, kind: input, shape index: {}]
  %s3 = inlined_call_operand.hbm [shape: bf16[64,32], index: 3, kind: input, shape index: {}]
  %s4 = inlined_call_operand.hbm [shape: f32[1,32], index: 4, kind: input, shape index: {}]
  %s5 = inlined_call_operand.hbm [shape: f32[1,32], index: 5, kind: input, shape index: {}]
  %s6 = inlined_call_operand.hbm [shape: f32[1,32], index: 6, kind: input, shape index: {}]
  %s7 = inlined_call_operand.hbm [shape: bf16[48,32], index: 7, kind: output, shape index: {}]
  %s8 = sld [smem:[#allocation0]]
  $region74: #{vit_bottleneck_forward.14} parent=0
    _
  %s10 = ssub.s32 1, %s8
  %s11 = scalar_select 0, %s10, %s8
  $region1: #{vit_bottleneck_forward.14} parent=0
    #allocation3 [shape = 'u8[12288]{0}', space=vmem, size = 0x3000, scoped, tag = 'input window, operand 0, single buffered']
    #allocation4 [shape = 's32[1]{0}', space=sflag, size = 0x4, scoped, tag = 'scoped memory for vit_bottleneck_forward.14']
    #allocation5 [shape = 's32[1]{0}', space=sflag, size = 0x4, scoped, tag = 'scoped memory for vit_bottleneck_forward.14']
    #allocation6 [shape = 'u8[8192]{0}', space=vmem, size = 0x2000, scoped, tag = 'input window, operand 1, single buffered']
    #allocation7 [shape = 's32[1]{0}', space=sflag, size = 0x4, scoped, tag = 'scoped memory for vit_bottleneck_forward.14']
    #allocation8 [shape = 'u8[512]{0}', space=vmem, size = 0x400, scoped, tag = 'input window, operand 2, single buffered']
    #allocation9 [shape = 'u8[16384]{0}', space=vmem, size = 0x4000, scoped, tag = 'input window, operand 3, single buffered']
    #allocation10 [shape = 's32[1]{0}', space=sflag, size = 0x4, scoped, tag = 'scoped memory for vit_bottleneck_forward.14']
    #allocation11 [shape = 'u8[512]{0}', space=vmem, size = 0x400, scoped, tag = 'input window, operand 4, single buffered']
    #allocation12 [shape = 'u8[512]{0}', space=vmem, size = 0x400, scoped, tag = 'input window, operand 5, single buffered']
    #allocation13 [shape = 's32[1]{0}', space=sflag, size = 0x4, scoped, tag = 'scoped memory for vit_bottleneck_forward.14']
    #allocation14 [shape = 'u8[512]{0}', space=vmem, size = 0x400, scoped, tag = 'input window, operand 6, single buffered']
    #allocation15 [shape = 'u8[12288]{0}', space=vmem, size = 0x3000, scoped, tag = 'output window, operand 0, single buffered']
    %12 = vsyncpa [#allocation4], 0
    %13 = vsyncpa [#allocation7], 0
    %14 = vsyncpa [#allocation10], 0
    %15 = vsyncpa [#allocation13], 0
    %16 = vsyncpa [#allocation5], 0
    // Predicated region
    $region2: #{vit_bottleneck_forward.14} parent=1 // pred_check
      _
    $region3: #{vit_bottleneck_forward.14} parent=1 // pred_check_branch
      %18 = sbr.rel (0) target = $region5
    $region4: #{vit_bottleneck_forward.14} parent=1 // pred_region
      %s20 = ssub.s32 384, 384
      %21 = vsyncadd [#allocation4], %s20
      %s22 = sshll.u32 [#allocation3], 4
      %s23 = int_to_ptr.vmem [resolvable:$true] %s22
      %28 = dma.hbm_to_vmem [thread:$0]  %s0, 384, %s23, [#allocation4], 64, 64, 4
    $region5: #{vit_bottleneck_forward.14} parent=1 // pred_fallthru
      _
    // Predicated region
    $region6: #{vit_bottleneck_forward.14} parent=1 // pred_check
      _
    $region7: #{vit_bottleneck_forward.14} parent=1 // pred_check_branch
      %30 = sbr.rel (0) target = $region9
    $region8: #{vit_bottleneck_forward.14} parent=1 // pred_region
      %s32 = ssub.s32 256, 256
      %33 = vsyncadd [#allocation7], %s32
      %s34 = sshll.u32 [#allocation6], 4
      %s35 = int_to_ptr.vmem [resolvable:$true] %s34
      %40 = dma.hbm_to_vmem [thread:$0]  %s1, 256, %s35, [#allocation7], 64, 64, 4
    $region9: #{vit_bottleneck_forward.14} parent=1 // pred_fallthru
      _
    // Predicated region
    $region10: #{vit_bottleneck_forward.14} parent=1 // pred_check
      _
    $region11: #{vit_bottleneck_forward.14} parent=1 // pred_check_branch
      %42 = sbr.rel (0) target = $region13
    $region12: #{vit_bottleneck_forward.14} parent=1 // pred_region
      %s44 = ssub.s32 16, 16
      %45 = vsyncadd [#allocation7], %s44
      %s47 = sshll.u32 [#allocation8], 4
      %s48 = int_to_ptr.vmem [resolvable:$true] %s47
      %50 = dma.hbm_to_vmem [thread:$0]  %s2, 16, %s48, [#allocation7]
    $region13: #{vit_bottleneck_forward.14} parent=1 // pred_fallthru
      _
    // Predicated region
    $region14: #{vit_bottleneck_forward.14} parent=1 // pred_check
      _
    $region15: #{vit_bottleneck_forward.14} parent=1 // pred_check_branch
      %52 = sbr.rel (0) target = $region17
    $region16: #{vit_bottleneck_forward.14} parent=1 // pred_region
      %s54 = ssub.s32 512, 512
      %55 = vsyncadd [#allocation10], %s54
      %s56 = sshll.u32 [#allocation9], 4
      %s57 = int_to_ptr.vmem [resolvable:$true] %s56
      %62 = dma.hbm_to_vmem [thread:$0]  %s3, 512, %s57, [#allocation10], 64, 64, 4
    $region17: #{vit_bottleneck_forward.14} parent=1 // pred_fallthru
      _
    // Predicated region
    $region18: #{vit_bottleneck_forward.14} parent=1 // pred_check
      _
    $region19: #{vit_bottleneck_forward.14} parent=1 // pred_check_branch
      %64 = sbr.rel (0) target = $region21
    $region20: #{vit_bottleneck_forward.14} parent=1 // pred_region
      %s66 = ssub.s32 16, 16
      %67 = vsyncadd [#allocation10], %s66
      %s69 = sshll.u32 [#allocation11], 4
      %s70 = int_to_ptr.vmem [resolvable:$true] %s69
      %72 = dma.hbm_to_vmem [thread:$0]  %s4, 16, %s70, [#allocation10]
    $region21: #{vit_bottleneck_forward.14} parent=1 // pred_fallthru
      _
    // Predicated region
    $region22: #{vit_bottleneck_forward.14} parent=1 // pred_check
      _
    $region23: #{vit_bottleneck_forward.14} parent=1 // pred_check_branch
      %74 = sbr.rel (0) target = $region25
    $region24: #{vit_bottleneck_forward.14} parent=1 // pred_region
      %s76 = ssub.s32 16, 16
      %77 = vsyncadd [#allocation13], %s76
      %s79 = sshll.u32 [#allocation12], 4
      %s80 = int_to_ptr.vmem [resolvable:$true] %s79
      %82 = dma.hbm_to_vmem [thread:$0]  %s5, 16, %s80, [#allocation13]
    $region25: #{vit_bottleneck_forward.14} parent=1 // pred_fallthru
      _
    // Predicated region
    $region26: #{vit_bottleneck_forward.14} parent=1 // pred_check
      _
    $region27: #{vit_bottleneck_forward.14} parent=1 // pred_check_branch
      %84 = sbr.rel (0) target = $region29
    $region28: #{vit_bottleneck_forward.14} parent=1 // pred_region
      %s86 = ssub.s32 16, 16
      %87 = vsyncadd [#allocation13], %s86
      %s89 = sshll.u32 [#allocation14], 4
      %s90 = int_to_ptr.vmem [resolvable:$true] %s89
      %92 = dma.hbm_to_vmem [thread:$0]  %s6, 16, %s90, [#allocation13]
    $region29: #{vit_bottleneck_forward.14} parent=1 // pred_fallthru
      _
    // Predicated region
    $region30: #{vit_bottleneck_forward.14} parent=1 // pred_check
      _
    $region31: #{vit_bottleneck_forward.14} parent=1 // pred_check_branch
      %94 = sbr.rel (0) target = $region33
    $region32: #{vit_bottleneck_forward.14} parent=1 // pred_region
      %95 = dma.done [#allocation4], 384
    $region33: #{vit_bottleneck_forward.14} parent=1 // pred_fallthru
      _
    // Predicated region
    $region34: #{vit_bottleneck_forward.14} parent=1 // pred_check
      _
    $region35: #{vit_bottleneck_forward.14} parent=1 // pred_check_branch
      %97 = sbr.rel (0) target = $region37
    $region36: #{vit_bottleneck_forward.14} parent=1 // pred_region
      %98 = dma.done [#allocation7], 256
    $region37: #{vit_bottleneck_forward.14} parent=1 // pred_fallthru
      _
    // Predicated region
    $region38: #{vit_bottleneck_forward.14} parent=1 // pred_check
      _
    $region39: #{vit_bottleneck_forward.14} parent=1 // pred_check_branch
      %100 = sbr.rel (0) target = $region41
    $region40: #{vit_bottleneck_forward.14} parent=1 // pred_region
      %101 = dma.done [#allocation7], 16
    $region41: #{vit_bottleneck_forward.14} parent=1 // pred_fallthru
      _
    // Predicated region
    $region42: #{vit_bottleneck_forward.14} parent=1 // pred_check
      _
    $region43: #{vit_bottleneck_forward.14} parent=1 // pred_check_branch
      %103 = sbr.rel (0) target = $region45
    $region44: #{vit_bottleneck_forward.14} parent=1 // pred_region
      %104 = dma.done [#allocation10], 512
    $region45: #{vit_bottleneck_forward.14} parent=1 // pred_fallthru
      _
    // Predicated region
    $region46: #{vit_bottleneck_forward.14} parent=1 // pred_check
      _
    $region47: #{vit_bottleneck_forward.14} parent=1 // pred_check_branch
      %106 = sbr.rel (0) target = $region49
    $region48: #{vit_bottleneck_forward.14} parent=1 // pred_region
      %107 = dma.done [#allocation10], 16
    $region49: #{vit_bottleneck_forward.14} parent=1 // pred_fallthru
      _
    // Predicated region
    $region50: #{vit_bottleneck_forward.14} parent=1 // pred_check
      _
    $region51: #{vit_bottleneck_forward.14} parent=1 // pred_check_branch
      %109 = sbr.rel (0) target = $region53
    $region52: #{vit_bottleneck_forward.14} parent=1 // pred_region
      %110 = dma.done [#allocation13], 16
    $region53: #{vit_bottleneck_forward.14} parent=1 // pred_fallthru
      _
    // Predicated region
    $region54: #{vit_bottleneck_forward.14} parent=1 // pred_check
      _
    $region55: #{vit_bottleneck_forward.14} parent=1 // pred_check_branch
      %112 = sbr.rel (0) target = $region57
    $region56: #{vit_bottleneck_forward.14} parent=1 // pred_region
      %113 = dma.done [#allocation13], 16
    $region57: #{vit_bottleneck_forward.14} parent=1 // pred_fallthru
      _
    %p115 = scmp.eq.s32.totalorder 0, 0
    // Predicated region
    $region58: #{vit_bottleneck_forward.14} parent=1 // pred_check
      %p116 = pneg %p115
    $region59: #{vit_bottleneck_forward.14} parent=1 // pred_check_branch
      %118 = sbr.rel (%p116) target = $region61
    $region60: #{vit_bottleneck_forward.14} parent=1 // pred_region
      %vm119 = vcmask 261120
      %120 = vst.msk [vmem:[#allocation2] sm:$0xff] %vm119, 0.0
      %121 = vst.msk [vmem:[#allocation2 + $0x8] sm:$0xff] %vm119, 0.0
      %122 = vst.msk [vmem:[#allocation2 + $0x10] sm:$0xff] %vm119, 0.0
      %123 = vst.msk [vmem:[#allocation2 + $0x18] sm:$0xff] %vm119, 0.0
      %124 = vst.msk [vmem:[#allocation2 + $0x20] sm:$0xff] %vm119, 0.0
      %125 = vst.msk [vmem:[#allocation2 + $0x28] sm:$0xff] %vm119, 0.0
    $region61: #{vit_bottleneck_forward.14} parent=1 // pred_fallthru
      _
    %v126 = vld [vmem:[#allocation3] sm:$0xf]
    %v127 = vld [vmem:[#allocation3 + $0x4] sm:$0xf]
    %v128 = vld [vmem:[#allocation3 + $0x8] sm:$0xf]
    %v129 = vld [vmem:[#allocation3 + $0xc] sm:$0xf]
    %v130 = vld [vmem:[#allocation3 + $0x10] sm:$0xf]
    %v131 = vld [vmem:[#allocation3 + $0x14] sm:$0xf]
    %v132 = vld [vmem:[#allocation6] sm:$0xf]
    %v133 = vld [vmem:[#allocation6 + $0x4] sm:$0xf]
    %v134 = vld [vmem:[#allocation6 + $0x8] sm:$0xf]
    %v135 = vld [vmem:[#allocation6 + $0xc] sm:$0xf]
    %v136 = vld [vmem:[#allocation8] sm:$0x1]
    %v138 = vlaneseq
    %v139 = vshrl.u32 %v138, 7
    %v140 = vsub.s32 0, %v139
    %v141 = vrot.slane %v136, %v140
    %v149 = vunpack.c.l.b16 %v126
    %v150 = vunpack.c.l.b16 %v127
    %v151 = vunpack.c.l.b16 %v128
    %v152 = vunpack.c.l.b16 %v129
    %v153 = vunpack.c.l.b16 %v130
    %v154 = vunpack.c.l.b16 %v131
    %v155 = vpack.c.b16 %v150, %v149
    %v156 = vpack.c.b16 %v152, %v151
    %v157 = vpack.c.b16 %v154, %v153
    %v162 = vunpack.c.l.b16 %v132
    %v163 = vunpack.c.l.b16 %v133
    %v164 = vunpack.c.l.b16 %v134
    %v165 = vunpack.c.l.b16 %v135
    %v166 = vpack.c.b16 %v163, %v162
    %v167 = vpack.c.b16 %v165, %v164
    %vm170 = vcmask 261120
    %v172 = vsel %vm170, %v155, 0
    %v175 = vsel %vm170, %v156, 0
    %v178 = vsel %vm170, %v157, 0
    %180 = vmatprep.subr.bf16.mxu0 0
    %181 = vmatpush1.bf16.msra.mxu0 %v166
    %182 = vmatprep.subr.bf16.mxu0 0
    %183 = vmatpush1.bf16.msra.mxu0 %v167
    %184 = vmatprep.subr.bf16.mxu0 0
    %185 = vmatpush1.bf16.msra.mxu0 0
    %186 = vmatprep.subr.bf16.mxu0 0
    %187 = vmatpush1.bf16.msra.mxu0 0
    %188 = vmatprep.subr.bf16.mxu0 0
    %189 = vmatpush1.bf16.msra.mxu0 0
    %190 = vmatprep.subr.bf16.mxu0 0
    %191 = vmatpush1.bf16.msra.mxu0 0
    %192 = vmatprep.subr.bf16.mxu0 0
    %193 = vmatpush1.bf16.msra.mxu0 0
    %194 = vmatprep.subr.bf16.mxu0 0
    %195 = vmatpush1.bf16.msra.mxu0 0
    %196 = vmatprep.subr.bf16.mxu0 0
    %197 = vmatpush1.bf16.msra.mxu0 0
    %198 = vmatprep.subr.bf16.mxu0 0
    %199 = vmatpush1.bf16.msra.mxu0 0
    %200 = vmatprep.subr.bf16.mxu0 0
    %201 = vmatpush1.bf16.msra.mxu0 0
    %202 = vmatprep.subr.bf16.mxu0 0
    %203 = vmatpush1.bf16.msra.mxu0 0
    %204 = vmatprep.subr.bf16.mxu0 0
    %205 = vmatpush1.bf16.msra.mxu0 0
    %206 = vmatprep.subr.bf16.mxu0 0
    %207 = vmatpush1.bf16.msra.mxu0 0
    %208 = vmatprep.subr.bf16.mxu0 0
    %209 = vmatpush1.bf16.msra.mxu0 0
    %210 = vmatprep.subr.bf16.mxu0 0
    %211 = vmatpush1.bf16.msra.mxu0 0
    %212 = vmatprep.mubr.bf16.mxu0 0
    %213 = vmatmul.mubr.bf16.gmra.mrb[0].mxu0 %v172
    %v214 = vpop.f32.mrb[0].mxu0
    %v215 = vadd.f32 %v141, %v214
    %v216 = vpop.f32.mrb[0].mxu0
    %v217 = vpop.f32.mrb[0].mxu0
    %v218 = vadd.f32 %v141, %v217
    %v219 = vpop.f32.mrb[0].mxu0
    %220 = vmatprep.mubr.bf16.mxu0 0
    %221 = vmatmul.mubr.bf16.gmra.mrb[0].mxu0 %v175
    %v222 = vpop.f32.mrb[0].mxu0
    %v223 = vadd.f32 %v141, %v222
    %v224 = vpop.f32.mrb[0].mxu0
    %v225 = vpop.f32.mrb[0].mxu0
    %v226 = vadd.f32 %v141, %v225
    %v227 = vpop.f32.mrb[0].mxu0
    %228 = vmatprep.mubr.bf16.mxu0 0
    %229 = vmatmul.mubr.bf16.gmra.mrb[0].mxu0 %v178
    %v230 = vpop.f32.mrb[0].mxu0
    %v231 = vadd.f32 %v141, %v230
    %v232 = vpop.f32.mrb[0].mxu0
    %v233 = vpop.f32.mrb[0].mxu0
    %v234 = vadd.f32 %v141, %v233
    %v235 = vpop.f32.mrb[0].mxu0
    %236 = vdwg.mxu0
    %v237 = vmax.f32 %v215, 0.0
    %v238 = vmax.f32 %v218, 0.0
    %v239 = vmax.f32 %v223, 0.0
    %v240 = vmax.f32 %v226, 0.0
    %v241 = vmax.f32 %v231, 0.0
    %v242 = vmax.f32 %v234, 0.0
    %v243 = vld [vmem:[#allocation2] sm:$0xff]
    %v244 = vld [vmem:[#allocation2 + $0x8] sm:$0xff]
    %v245 = vld [vmem:[#allocation2 + $0x10] sm:$0xff]
    %v246 = vld [vmem:[#allocation2 + $0x18] sm:$0xff]
    %v247 = vld [vmem:[#allocation2 + $0x20] sm:$0xff]
    %v248 = vld [vmem:[#allocation2 + $0x28] sm:$0xff]
    %v249 = vpack.c.bf16 %v238, %v237
    %v250 = vpack.c.bf16 %v240, %v239
    %v251 = vpack.c.bf16 %v242, %v241
    %v252 = vld [vmem:[#allocation9] sm:$0xf]
    %v253 = vld [vmem:[#allocation9 + $0x4] sm:$0xf]
    %v254 = vld [vmem:[#allocation9 + $0x8] sm:$0xf]
    %v255 = vld [vmem:[#allocation9 + $0xc] sm:$0xf]
    %v256 = vld [vmem:[#allocation9 + $0x10] sm:$0xf]
    %v257 = vld [vmem:[#allocation9 + $0x14] sm:$0xf]
    %v258 = vld [vmem:[#allocation9 + $0x18] sm:$0xf]
    %v259 = vld [vmem:[#allocation9 + $0x1c] sm:$0xf]
    %v268 = vunpack.c.l.b16 %v252
    %v269 = vunpack.c.l.b16 %v253
    %v270 = vunpack.c.l.b16 %v254
    %v271 = vunpack.c.l.b16 %v255
    %v272 = vunpack.c.l.b16 %v256
    %v273 = vunpack.c.l.b16 %v257
    %v274 = vunpack.c.l.b16 %v258
    %v275 = vunpack.c.l.b16 %v259
    %v276 = vpack.c.b16 %v269, %v268
    %v277 = vpack.c.b16 %v271, %v270
    %v278 = vpack.c.b16 %v273, %v272
    %v279 = vpack.c.b16 %v275, %v274
    %vm284 = vcmask 523264
    %v286 = vsel %vm284, %v249, 0
    %v289 = vsel %vm284, %v250, 0
    %v292 = vsel %vm284, %v251, 0
    %294 = vmatprep.subr.bf16.mxu0 0
    %295 = vmatpush1.bf16.msra.mxu0 %v276
    %296 = vmatprep.subr.bf16.mxu0 0
    %297 = vmatpush1.bf16.msra.mxu0 %v277
    %298 = vmatprep.subr.bf16.mxu0 0
    %299 = vmatpush1.bf16.msra.mxu0 %v278
    %300 = vmatprep.subr.bf16.mxu0 0
    %301 = vmatpush1.bf16.msra.mxu0 %v279
    %302 = vmatprep.subr.bf16.mxu0 0
    %303 = vmatpush1.bf16.msra.mxu0 0
    %304 = vmatprep.subr.bf16.mxu0 0
    %305 = vmatpush1.bf16.msra.mxu0 0
    %306 = vmatprep.subr.bf16.mxu0 0
    %307 = vmatpush1.bf16.msra.mxu0 0
    %308 = vmatprep.subr.bf16.mxu0 0
    %309 = vmatpush1.bf16.msra.mxu0 0
    %310 = vmatprep.subr.bf16.mxu0 0
    %311 = vmatpush1.bf16.msra.mxu0 0
    %312 = vmatprep.subr.bf16.mxu0 0
    %313 = vmatpush1.bf16.msra.mxu0 0
    %314 = vmatprep.subr.bf16.mxu0 0
    %315 = vmatpush1.bf16.msra.mxu0 0
    %316 = vmatprep.subr.bf16.mxu0 0
    %317 = vmatpush1.bf16.msra.mxu0 0
    %318 = vmatprep.subr.bf16.mxu0 0
    %319 = vmatpush1.bf16.msra.mxu0 0
    %320 = vmatprep.subr.bf16.mxu0 0
    %321 = vmatpush1.bf16.msra.mxu0 0
    %322 = vmatprep.subr.bf16.mxu0 0
    %323 = vmatpush1.bf16.msra.mxu0 0
    %324 = vmatprep.subr.bf16.mxu0 0
    %325 = vmatpush1.bf16.msra.mxu0 0
    %326 = vmatprep.mubr.bf16.mxu0 0
    %327 = vmatmul.mubr.bf16.gmra.mrb[0].mxu0 %v286
    %v328 = vpop.f32.mrb[0].mxu0
    %v329 = vadd.f32 0.0, %v328
    %v330 = vpop.f32.mrb[0].mxu0
    %v331 = vpop.f32.mrb[0].mxu0
    %v332 = vadd.f32 0.0, %v331
    %v333 = vpop.f32.mrb[0].mxu0
    %334 = vmatprep.mubr.bf16.mxu0 0
    %335 = vmatmul.mubr.bf16.gmra.mrb[0].mxu0 %v289
    %v336 = vpop.f32.mrb[0].mxu0
    %v337 = vadd.f32 0.0, %v336
    %v338 = vpop.f32.mrb[0].mxu0
    %v339 = vpop.f32.mrb[0].mxu0
    %v340 = vadd.f32 0.0, %v339
    %v341 = vpop.f32.mrb[0].mxu0
    %342 = vmatprep.mubr.bf16.mxu0 0
    %343 = vmatmul.mubr.bf16.gmra.mrb[0].mxu0 %v292
    %v344 = vpop.f32.mrb[0].mxu0
    %v345 = vadd.f32 0.0, %v344
    %v346 = vpop.f32.mrb[0].mxu0
    %v347 = vpop.f32.mrb[0].mxu0
    %v348 = vadd.f32 0.0, %v347
    %v349 = vpop.f32.mrb[0].mxu0
    %350 = vdwg.mxu0
    %v351 = vadd.f32 %v243, %v329
    %v352 = vadd.f32 %v244, %v332
    %v353 = vadd.f32 %v245, %v337
    %v354 = vadd.f32 %v246, %v340
    %v355 = vadd.f32 %v247, %v345
    %v356 = vadd.f32 %v248, %v348
    %357 = vst.msk [vmem:[#allocation2] sm:$0xff] %vm170, %v351
    %358 = vst.msk [vmem:[#allocation2 + $0x8] sm:$0xff] %vm170, %v352
    %359 = vst.msk [vmem:[#allocation2 + $0x10] sm:$0xff] %vm170, %v353
    %360 = vst.msk [vmem:[#allocation2 + $0x18] sm:$0xff] %vm170, %v354
    %361 = vst.msk [vmem:[#allocation2 + $0x20] sm:$0xff] %vm170, %v355
    %362 = vst.msk [vmem:[#allocation2 + $0x28] sm:$0xff] %vm170, %v356
    // Predicated region
    $region62: #{vit_bottleneck_forward.14} parent=1 // pred_check
      %p363 = pneg %p115
    $region63: #{vit_bottleneck_forward.14} parent=1 // pred_check_branch
      %365 = sbr.rel (%p363) target = $region65
    $region64: #{vit_bottleneck_forward.14} parent=1 // pred_region
      %v366 = vld [vmem:[#allocation2] sm:$0xff]
      %v367 = vld [vmem:[#allocation2 + $0x8] sm:$0xff]
      %v368 = vld [vmem:[#allocation2 + $0x10] sm:$0xff]
      %v369 = vld [vmem:[#allocation2 + $0x18] sm:$0xff]
      %v370 = vld [vmem:[#allocation2 + $0x20] sm:$0xff]
      %v371 = vld [vmem:[#allocation2 + $0x28] sm:$0xff]
      %v372 = vld [vmem:[#allocation11] sm:$0x1]
      %v374 = vlaneseq
      %v375 = vshrl.u32 %v374, 7
      %v376 = vsub.s32 0, %v375
      %v377 = vrot.slane %v372, %v376
      %v379 = vadd.f32 %v366, %v377
      %v380 = vadd.f32 %v367, %v377
      %v381 = vadd.f32 %v368, %v377
      %v382 = vadd.f32 %v369, %v377
      %v383 = vadd.f32 %v370, %v377
      %v384 = vadd.f32 %v371, %v377
      %v385 = vunpack.c.l.bf16 %v126
      %v386 = vunpack.c.l.bf16 %v127
      %v387 = vunpack.c.l.bf16 %v128
      %v388 = vunpack.c.l.bf16 %v129
      %v389 = vunpack.c.l.bf16 %v130
      %v390 = vunpack.c.l.bf16 %v131
      %v391 = vadd.f32 %v379, %v385
      %v392 = vadd.f32 %v380, %v386
      %v393 = vadd.f32 %v381, %v387
      %v394 = vadd.f32 %v382, %v388
      %v395 = vadd.f32 %v383, %v389
      %v396 = vadd.f32 %v384, %v390
      %v397 = vsel %vm170, %v391, 0.0
      %398 = vadd.xlane.f32.xlu0 %v397
      %v399 = vpop.xlane.xlu0 %398
      %v400 = vsel %vm170, %v392, 0.0
      %401 = vadd.xlane.f32.xlu0 %v400
      %v402 = vpop.xlane.xlu0 %401
      %v403 = vsel %vm170, %v393, 0.0
      %404 = vadd.xlane.f32.xlu0 %v403
      %v405 = vpop.xlane.xlu0 %404
      %v406 = vsel %vm170, %v394, 0.0
      %407 = vadd.xlane.f32.xlu0 %v406
      %v408 = vpop.xlane.xlu0 %407
      %v409 = vsel %vm170, %v395, 0.0
      %410 = vadd.xlane.f32.xlu0 %v409
      %v411 = vpop.xlane.xlu0 %410
      %v412 = vsel %vm170, %v396, 0.0
      %413 = vadd.xlane.f32.xlu0 %v412
      %v414 = vpop.xlane.xlu0 %413
      %v415 = vrcp.pop 32.0
      %v416 = vmul.f32 %v399, %v415
      %v417 = vmul.f32 %v402, %v415
      %v418 = vmul.f32 %v405, %v415
      %v419 = vmul.f32 %v408, %v415
      %v420 = vmul.f32 %v411, %v415
      %v421 = vmul.f32 %v414, %v415
      %v422 = vsub.f32 %v391, %v416
      %v423 = vsub.f32 %v392, %v417
      %v424 = vsub.f32 %v393, %v418
      %v425 = vsub.f32 %v394, %v419
      %v426 = vsub.f32 %v395, %v420
      %v427 = vsub.f32 %v396, %v421
      %v428 = vmul.f32 %v422, %v422
      %v429 = vmul.f32 %v423, %v423
      %v430 = vmul.f32 %v424, %v424
      %v431 = vmul.f32 %v425, %v425
      %v432 = vmul.f32 %v426, %v426
      %v433 = vmul.f32 %v427, %v427
      %v434 = vsel %vm170, %v428, 0.0
      %435 = vadd.xlane.f32.xlu0 %v434
      %v436 = vpop.xlane.xlu0 %435
      %v437 = vsel %vm170, %v429, 0.0
      %438 = vadd.xlane.f32.xlu0 %v437
      %v439 = vpop.xlane.xlu0 %438
      %v440 = vsel %vm170, %v430, 0.0
      %441 = vadd.xlane.f32.xlu0 %v440
      %v442 = vpop.xlane.xlu0 %441
      %v443 = vsel %vm170, %v431, 0.0
      %444 = vadd.xlane.f32.xlu0 %v443
      %v445 = vpop.xlane.xlu0 %444
      %v446 = vsel %vm170, %v432, 0.0
      %447 = vadd.xlane.f32.xlu0 %v446
      %v448 = vpop.xlane.xlu0 %447
      %v449 = vsel %vm170, %v433, 0.0
      %450 = vadd.xlane.f32.xlu0 %v449
      %v451 = vpop.xlane.xlu0 %450
      %v452 = vmul.f32 %v436, %v415
      %v453 = vmul.f32 %v439, %v415
      %v454 = vmul.f32 %v442, %v415
      %v455 = vmul.f32 %v445, %v415
      %v456 = vmul.f32 %v448, %v415
      %v457 = vmul.f32 %v451, %v415
      %v458 = vadd.f32 %v452, 1e-05
      %v459 = vadd.f32 %v453, 1e-05
      %v460 = vadd.f32 %v454, 1e-05
      %v461 = vadd.f32 %v455, 1e-05
      %v462 = vadd.f32 %v456, 1e-05
      %v463 = vadd.f32 %v457, 1e-05
      %v464 = vrsqrt.pop %v458
      %v465 = vrsqrt.pop %v459
      %v466 = vrsqrt.pop %v460
      %v467 = vrsqrt.pop %v461
      %v468 = vrsqrt.pop %v462
      %v469 = vrsqrt.pop %v463
      %v470 = vmul.f32 %v422, %v464
      %v471 = vmul.f32 %v423, %v465
      %v472 = vmul.f32 %v424, %v466
      %v473 = vmul.f32 %v425, %v467
      %v474 = vmul.f32 %v426, %v468
      %v475 = vmul.f32 %v427, %v469
      %v476 = vld [vmem:[#allocation12] sm:$0x1]
      %v478 = vlaneseq
      %v479 = vshrl.u32 %v478, 7
      %v480 = vsub.s32 0, %v479
      %v481 = vrot.slane %v476, %v480
      %v483 = vmul.f32 %v470, %v481
      %v484 = vmul.f32 %v471, %v481
      %v485 = vmul.f32 %v472, %v481
      %v486 = vmul.f32 %v473, %v481
      %v487 = vmul.f32 %v474, %v481
      %v488 = vmul.f32 %v475, %v481
      %v489 = vld [vmem:[#allocation14] sm:$0x1]
      %v491 = vlaneseq
      %v492 = vshrl.u32 %v491, 7
      %v493 = vsub.s32 0, %v492
      %v494 = vrot.slane %v489, %v493
      %v496 = vadd.f32 %v483, %v494
      %v497 = vadd.f32 %v484, %v494
      %v498 = vadd.f32 %v485, %v494
      %v499 = vadd.f32 %v486, %v494
      %v500 = vadd.f32 %v487, %v494
      %v501 = vadd.f32 %v488, %v494
      %v502 = vpack.c.bf16 %v497, %v496
      %v503 = vpack.c.bf16 %v499, %v498
      %v504 = vpack.c.bf16 %v501, %v500
      %v508 = vunpack.c.l.b16 %v502
      %v509 = vunpack.c.h.b16 %v502
      %v510 = vunpack.c.l.b16 %v503
      %v511 = vunpack.c.h.b16 %v503
      %v512 = vunpack.c.l.b16 %v504
      %v513 = vunpack.c.h.b16 %v504
      %v514 = vpack.c.b16 %v508, %v508
      %v515 = vpack.c.b16 %v509, %v509
      %v516 = vpack.c.b16 %v510, %v510
      %v517 = vpack.c.b16 %v511, %v511
      %v518 = vpack.c.b16 %v512, %v512
      %v519 = vpack.c.b16 %v513, %v513
      %vm526 = vcmask 257024
      %527 = vst.msk [vmem:[#allocation15] sm:$0xf] %vm526, %v514
      %528 = vst.msk [vmem:[#allocation15 + $0x4] sm:$0xf] %vm526, %v515
      %529 = vst.msk [vmem:[#allocation15 + $0x8] sm:$0xf] %vm526, %v516
      %530 = vst.msk [vmem:[#allocation15 + $0xc] sm:$0xf] %vm526, %v517
      %531 = vst.msk [vmem:[#allocation15 + $0x10] sm:$0xf] %vm526, %v518
      %532 = vst.msk [vmem:[#allocation15 + $0x14] sm:$0xf] %vm526, %v519
    $region65: #{vit_bottleneck_forward.14} parent=1 // pred_fallthru
      _
    // Predicated region
    $region66: #{vit_bottleneck_forward.14} parent=1 // pred_check
      _
    $region67: #{vit_bottleneck_forward.14} parent=1 // pred_check_branch
      %534 = sbr.rel (0) target = $region69
    $region68: #{vit_bottleneck_forward.14} parent=1 // pred_region
      %s536 = ssub.s32 384, 384
      %537 = vsyncadd [#allocation5], %s536
      %s538 = sshll.u32 [#allocation15], 4
      %s539 = int_to_ptr.vmem [resolvable:$true] %s538
      %544 = dma.vmem_to_hbm [thread:$0]  %s539, 384, %s7, [#allocation5], 64, 64, 4
    $region69: #{vit_bottleneck_forward.14} parent=1 // pred_fallthru
      _
    // Predicated region
    $region70: #{vit_bottleneck_forward.14} parent=1 // pred_check
      _
    $region71: #{vit_bottleneck_forward.14} parent=1 // pred_check_branch
      %546 = sbr.rel (0) target = $region73
    $region72: #{vit_bottleneck_forward.14} parent=1 // pred_region
      %547 = dma.done [#allocation5], 384
    $region73: #{vit_bottleneck_forward.14} parent=1 // pred_fallthru
      _
    %548 = vsyncpa [#allocation4], 1
    %549 = vsyncpa [#allocation7], 1
    %550 = vsyncpa [#allocation10], 1
    %551 = vsyncpa [#allocation13], 1
    %552 = vsyncpa [#allocation5], 1

// kernel: vit_bottleneck_forward.13
$region0: #{vit_bottleneck_forward.13}
  #allocation0 [shape = 'u32[]', space=smem, size = 0x4, offset = 0x4, fixed_abs, tag = 'smem constant byte address 0x4 - core index']
  #allocation1 [shape = 'u32[144,128]{1,0:T(1,128)}', space=vmem, size = 0x12000, scoped, tag = 'internal scratch']
  #allocation2 [shape = 'f32[48,32]{1,0:T(8,128)}', space=vmem, size = 0x6000, scoped, tag = 'scratch operand']
  %s0 = inlined_call_operand.hbm [shape: bf16[48,32], index: 0, kind: input, shape index: {}]
  %s1 = inlined_call_operand.hbm [shape: bf16[32,32], index: 1, kind: input, shape index: {}]
  %s2 = inlined_call_operand.hbm [shape: f32[1,32], index: 2, kind: input, shape index: {}]
  %s3 = inlined_call_operand.hbm [shape: bf16[48,32], index: 3, kind: input, shape index: {}]
  %s4 = inlined_call_operand.hbm [shape: f32[1,32], index: 4, kind: input, shape index: {}]
  %s5 = inlined_call_operand.hbm [shape: f32[1,32], index: 5, kind: input, shape index: {}]
  %s6 = inlined_call_operand.hbm [shape: bf16[48,32], index: 6, kind: output, shape index: {}]
  %s7 = sld [smem:[#allocation0]]
  $region66: #{vit_bottleneck_forward.13} parent=0
    _
  %s9 = ssub.s32 1, %s7
  %s10 = scalar_select 0, %s9, %s7
  $region1: #{vit_bottleneck_forward.13} parent=0
    #allocation3 [shape = 'u8[12288]{0}', space=vmem, size = 0x3000, scoped, tag = 'input window, operand 0, single buffered']
    #allocation4 [shape = 's32[1]{0}', space=sflag, size = 0x4, scoped, tag = 'scoped memory for vit_bottleneck_forward.13']
    #allocation5 [shape = 's32[1]{0}', space=sflag, size = 0x4, scoped, tag = 'scoped memory for vit_bottleneck_forward.13']
    #allocation6 [shape = 'u8[8192]{0}', space=vmem, size = 0x2000, scoped, tag = 'input window, operand 1, single buffered']
    #allocation7 [shape = 's32[1]{0}', space=sflag, size = 0x4, scoped, tag = 'scoped memory for vit_bottleneck_forward.13']
    #allocation8 [shape = 'u8[512]{0}', space=vmem, size = 0x400, scoped, tag = 'input window, operand 2, single buffered']
    #allocation9 [shape = 'u8[12288]{0}', space=vmem, size = 0x3000, scoped, tag = 'input window, operand 3, single buffered']
    #allocation10 [shape = 's32[1]{0}', space=sflag, size = 0x4, scoped, tag = 'scoped memory for vit_bottleneck_forward.13']
    #allocation11 [shape = 'u8[512]{0}', space=vmem, size = 0x400, scoped, tag = 'input window, operand 4, single buffered']
    #allocation12 [shape = 'u8[512]{0}', space=vmem, size = 0x400, scoped, tag = 'input window, operand 5, single buffered']
    #allocation13 [shape = 's32[1]{0}', space=sflag, size = 0x4, scoped, tag = 'scoped memory for vit_bottleneck_forward.13']
    #allocation14 [shape = 'u8[12288]{0}', space=vmem, size = 0x3000, scoped, tag = 'output window, operand 0, single buffered']
    %11 = vsyncpa [#allocation4], 0
    %12 = vsyncpa [#allocation7], 0
    %13 = vsyncpa [#allocation10], 0
    %14 = vsyncpa [#allocation13], 0
    %15 = vsyncpa [#allocation5], 0
    // Predicated region
    $region2: #{vit_bottleneck_forward.13} parent=1 // pred_check
      _
    $region3: #{vit_bottleneck_forward.13} parent=1 // pred_check_branch
      %17 = sbr.rel (0) target = $region5
    $region4: #{vit_bottleneck_forward.13} parent=1 // pred_region
      %s19 = ssub.s32 384, 384
      %20 = vsyncadd [#allocation4], %s19
      %s21 = sshll.u32 [#allocation3], 4
      %s22 = int_to_ptr.vmem [resolvable:$true] %s21
      %27 = dma.hbm_to_vmem [thread:$0]  %s0, 384, %s22, [#allocation4], 64, 64, 4
    $region5: #{vit_bottleneck_forward.13} parent=1 // pred_fallthru
      _
    // Predicated region
    $region6: #{vit_bottleneck_forward.13} parent=1 // pred_check
      _
    $region7: #{vit_bottleneck_forward.13} parent=1 // pred_check_branch
      %29 = sbr.rel (0) target = $region9
    $region8: #{vit_bottleneck_forward.13} parent=1 // pred_region
      %s31 = ssub.s32 256, 256
      %32 = vsyncadd [#allocation7], %s31
      %s33 = sshll.u32 [#allocation6], 4
      %s34 = int_to_ptr.vmem [resolvable:$true] %s33
      %39 = dma.hbm_to_vmem [thread:$0]  %s1, 256, %s34, [#allocation7], 64, 64, 4
    $region9: #{vit_bottleneck_forward.13} parent=1 // pred_fallthru
      _
    // Predicated region
    $region10: #{vit_bottleneck_forward.13} parent=1 // pred_check
      _
    $region11: #{vit_bottleneck_forward.13} parent=1 // pred_check_branch
      %41 = sbr.rel (0) target = $region13
    $region12: #{vit_bottleneck_forward.13} parent=1 // pred_region
      %s43 = ssub.s32 16, 16
      %44 = vsyncadd [#allocation7], %s43
      %s46 = sshll.u32 [#allocation8], 4
      %s47 = int_to_ptr.vmem [resolvable:$true] %s46
      %49 = dma.hbm_to_vmem [thread:$0]  %s2, 16, %s47, [#allocation7]
    $region13: #{vit_bottleneck_forward.13} parent=1 // pred_fallthru
      _
    // Predicated region
    $region14: #{vit_bottleneck_forward.13} parent=1 // pred_check
      _
    $region15: #{vit_bottleneck_forward.13} parent=1 // pred_check_branch
      %51 = sbr.rel (0) target = $region17
    $region16: #{vit_bottleneck_forward.13} parent=1 // pred_region
      %s53 = ssub.s32 384, 384
      %54 = vsyncadd [#allocation10], %s53
      %s55 = sshll.u32 [#allocation9], 4
      %s56 = int_to_ptr.vmem [resolvable:$true] %s55
      %61 = dma.hbm_to_vmem [thread:$0]  %s3, 384, %s56, [#allocation10], 64, 64, 4
    $region17: #{vit_bottleneck_forward.13} parent=1 // pred_fallthru
      _
    // Predicated region
    $region18: #{vit_bottleneck_forward.13} parent=1 // pred_check
      _
    $region19: #{vit_bottleneck_forward.13} parent=1 // pred_check_branch
      %63 = sbr.rel (0) target = $region21
    $region20: #{vit_bottleneck_forward.13} parent=1 // pred_region
      %s65 = ssub.s32 16, 16
      %66 = vsyncadd [#allocation10], %s65
      %s68 = sshll.u32 [#allocation11], 4
      %s69 = int_to_ptr.vmem [resolvable:$true] %s68
      %71 = dma.hbm_to_vmem [thread:$0]  %s4, 16, %s69, [#allocation10]
    $region21: #{vit_bottleneck_forward.13} parent=1 // pred_fallthru
      _
    // Predicated region
    $region22: #{vit_bottleneck_forward.13} parent=1 // pred_check
      _
    $region23: #{vit_bottleneck_forward.13} parent=1 // pred_check_branch
      %73 = sbr.rel (0) target = $region25
    $region24: #{vit_bottleneck_forward.13} parent=1 // pred_region
      %s75 = ssub.s32 16, 16
      %76 = vsyncadd [#allocation13], %s75
      %s78 = sshll.u32 [#allocation12], 4
      %s79 = int_to_ptr.vmem [resolvable:$true] %s78
      %81 = dma.hbm_to_vmem [thread:$0]  %s5, 16, %s79, [#allocation13]
    $region25: #{vit_bottleneck_forward.13} parent=1 // pred_fallthru
      _
    // Predicated region
    $region26: #{vit_bottleneck_forward.13} parent=1 // pred_check
      _
    $region27: #{vit_bottleneck_forward.13} parent=1 // pred_check_branch
      %83 = sbr.rel (0) target = $region29
    $region28: #{vit_bottleneck_forward.13} parent=1 // pred_region
      %84 = dma.done [#allocation4], 384
    $region29: #{vit_bottleneck_forward.13} parent=1 // pred_fallthru
      _
    // Predicated region
    $region30: #{vit_bottleneck_forward.13} parent=1 // pred_check
      _
    $region31: #{vit_bottleneck_forward.13} parent=1 // pred_check_branch
      %86 = sbr.rel (0) target = $region33
    $region32: #{vit_bottleneck_forward.13} parent=1 // pred_region
      %87 = dma.done [#allocation7], 256
    $region33: #{vit_bottleneck_forward.13} parent=1 // pred_fallthru
      _
    // Predicated region
    $region34: #{vit_bottleneck_forward.13} parent=1 // pred_check
      _
    $region35: #{vit_bottleneck_forward.13} parent=1 // pred_check_branch
      %89 = sbr.rel (0) target = $region37
    $region36: #{vit_bottleneck_forward.13} parent=1 // pred_region
      %90 = dma.done [#allocation7], 16
    $region37: #{vit_bottleneck_forward.13} parent=1 // pred_fallthru
      _
    // Predicated region
    $region38: #{vit_bottleneck_forward.13} parent=1 // pred_check
      _
    $region39: #{vit_bottleneck_forward.13} parent=1 // pred_check_branch
      %92 = sbr.rel (0) target = $region41
    $region40: #{vit_bottleneck_forward.13} parent=1 // pred_region
      %93 = dma.done [#allocation10], 384
    $region41: #{vit_bottleneck_forward.13} parent=1 // pred_fallthru
      _
    // Predicated region
    $region42: #{vit_bottleneck_forward.13} parent=1 // pred_check
      _
    $region43: #{vit_bottleneck_forward.13} parent=1 // pred_check_branch
      %95 = sbr.rel (0) target = $region45
    $region44: #{vit_bottleneck_forward.13} parent=1 // pred_region
      %96 = dma.done [#allocation10], 16
    $region45: #{vit_bottleneck_forward.13} parent=1 // pred_fallthru
      _
    // Predicated region
    $region46: #{vit_bottleneck_forward.13} parent=1 // pred_check
      _
    $region47: #{vit_bottleneck_forward.13} parent=1 // pred_check_branch
      %98 = sbr.rel (0) target = $region49
    $region48: #{vit_bottleneck_forward.13} parent=1 // pred_region
      %99 = dma.done [#allocation13], 16
    $region49: #{vit_bottleneck_forward.13} parent=1 // pred_fallthru
      _
    %p101 = scmp.eq.s32.totalorder 0, 0
    // Predicated region
    $region50: #{vit_bottleneck_forward.13} parent=1 // pred_check
      %p102 = pneg %p101
    $region51: #{vit_bottleneck_forward.13} parent=1 // pred_check_branch
      %104 = sbr.rel (%p102) target = $region53
    $region52: #{vit_bottleneck_forward.13} parent=1 // pred_region
      %vm105 = vcmask 261120
      %106 = vst.msk [vmem:[#allocation2] sm:$0xff] %vm105, 0.0
      %107 = vst.msk [vmem:[#allocation2 + $0x8] sm:$0xff] %vm105, 0.0
      %108 = vst.msk [vmem:[#allocation2 + $0x10] sm:$0xff] %vm105, 0.0
      %109 = vst.msk [vmem:[#allocation2 + $0x18] sm:$0xff] %vm105, 0.0
      %110 = vst.msk [vmem:[#allocation2 + $0x20] sm:$0xff] %vm105, 0.0
      %111 = vst.msk [vmem:[#allocation2 + $0x28] sm:$0xff] %vm105, 0.0
    $region53: #{vit_bottleneck_forward.13} parent=1 // pred_fallthru
      _
    %v112 = vld [vmem:[#allocation2] sm:$0xff]
    %v113 = vld [vmem:[#allocation2 + $0x8] sm:$0xff]
    %v114 = vld [vmem:[#allocation2 + $0x10] sm:$0xff]
    %v115 = vld [vmem:[#allocation2 + $0x18] sm:$0xff]
    %v116 = vld [vmem:[#allocation2 + $0x20] sm:$0xff]
    %v117 = vld [vmem:[#allocation2 + $0x28] sm:$0xff]
    %v118 = vld [vmem:[#allocation3] sm:$0xf]
    %v119 = vld [vmem:[#allocation3 + $0x4] sm:$0xf]
    %v120 = vld [vmem:[#allocation3 + $0x8] sm:$0xf]
    %v121 = vld [vmem:[#allocation3 + $0xc] sm:$0xf]
    %v122 = vld [vmem:[#allocation3 + $0x10] sm:$0xf]
    %v123 = vld [vmem:[#allocation3 + $0x14] sm:$0xf]
    %v124 = vld [vmem:[#allocation6] sm:$0xf]
    %v125 = vld [vmem:[#allocation6 + $0x4] sm:$0xf]
    %v126 = vld [vmem:[#allocation6 + $0x8] sm:$0xf]
    %v127 = vld [vmem:[#allocation6 + $0xc] sm:$0xf]
    %v134 = vunpack.c.l.b16 %v118
    %v135 = vunpack.c.l.b16 %v119
    %v136 = vunpack.c.l.b16 %v120
    %v137 = vunpack.c.l.b16 %v121
    %v138 = vunpack.c.l.b16 %v122
    %v139 = vunpack.c.l.b16 %v123
    %v140 = vpack.c.b16 %v135, %v134
    %v141 = vpack.c.b16 %v137, %v136
    %v142 = vpack.c.b16 %v139, %v138
    %v147 = vunpack.c.l.b16 %v124
    %v148 = vunpack.c.l.b16 %v125
    %v149 = vunpack.c.l.b16 %v126
    %v150 = vunpack.c.l.b16 %v127
    %v151 = vpack.c.b16 %v148, %v147
    %v152 = vpack.c.b16 %v150, %v149
    %vm155 = vcmask 261120
    %v157 = vsel %vm155, %v140, 0
    %v160 = vsel %vm155, %v141, 0
    %v163 = vsel %vm155, %v142, 0
    %165 = vmatprep.subr.bf16.mxu0 0
    %166 = vmatpush1.bf16.msra.mxu0 %v151
    %167 = vmatprep.subr.bf16.mxu0 0
    %168 = vmatpush1.bf16.msra.mxu0 %v152
    %169 = vmatprep.subr.bf16.mxu0 0
    %170 = vmatpush1.bf16.msra.mxu0 0
    %171 = vmatprep.subr.bf16.mxu0 0
    %172 = vmatpush1.bf16.msra.mxu0 0
    %173 = vmatprep.subr.bf16.mxu0 0
    %174 = vmatpush1.bf16.msra.mxu0 0
    %175 = vmatprep.subr.bf16.mxu0 0
    %176 = vmatpush1.bf16.msra.mxu0 0
    %177 = vmatprep.subr.bf16.mxu0 0
    %178 = vmatpush1.bf16.msra.mxu0 0
    %179 = vmatprep.subr.bf16.mxu0 0
    %180 = vmatpush1.bf16.msra.mxu0 0
    %181 = vmatprep.subr.bf16.mxu0 0
    %182 = vmatpush1.bf16.msra.mxu0 0
    %183 = vmatprep.subr.bf16.mxu0 0
    %184 = vmatpush1.bf16.msra.mxu0 0
    %185 = vmatprep.subr.bf16.mxu0 0
    %186 = vmatpush1.bf16.msra.mxu0 0
    %187 = vmatprep.subr.bf16.mxu0 0
    %188 = vmatpush1.bf16.msra.mxu0 0
    %189 = vmatprep.subr.bf16.mxu0 0
    %190 = vmatpush1.bf16.msra.mxu0 0
    %191 = vmatprep.subr.bf16.mxu0 0
    %192 = vmatpush1.bf16.msra.mxu0 0
    %193 = vmatprep.subr.bf16.mxu0 0
    %194 = vmatpush1.bf16.msra.mxu0 0
    %195 = vmatprep.subr.bf16.mxu0 0
    %196 = vmatpush1.bf16.msra.mxu0 0
    %197 = vmatprep.mubr.bf16.mxu0 0
    %198 = vmatmul.mubr.bf16.gmra.mrb[0].mxu0 %v157
    %v199 = vpop.f32.mrb[0].mxu0
    %v200 = vadd.f32 0.0, %v199
    %v201 = vpop.f32.mrb[0].mxu0
    %v202 = vpop.f32.mrb[0].mxu0
    %v203 = vadd.f32 0.0, %v202
    %v204 = vpop.f32.mrb[0].mxu0
    %205 = vmatprep.mubr.bf16.mxu0 0
    %206 = vmatmul.mubr.bf16.gmra.mrb[0].mxu0 %v160
    %v207 = vpop.f32.mrb[0].mxu0
    %v208 = vadd.f32 0.0, %v207
    %v209 = vpop.f32.mrb[0].mxu0
    %v210 = vpop.f32.mrb[0].mxu0
    %v211 = vadd.f32 0.0, %v210
    %v212 = vpop.f32.mrb[0].mxu0
    %213 = vmatprep.mubr.bf16.mxu0 0
    %214 = vmatmul.mubr.bf16.gmra.mrb[0].mxu0 %v163
    %v215 = vpop.f32.mrb[0].mxu0
    %v216 = vadd.f32 0.0, %v215
    %v217 = vpop.f32.mrb[0].mxu0
    %v218 = vpop.f32.mrb[0].mxu0
    %v219 = vadd.f32 0.0, %v218
    %v220 = vpop.f32.mrb[0].mxu0
    %221 = vdwg.mxu0
    %v222 = vadd.f32 %v112, %v200
    %v223 = vadd.f32 %v113, %v203
    %v224 = vadd.f32 %v114, %v208
    %v225 = vadd.f32 %v115, %v211
    %v226 = vadd.f32 %v116, %v216
    %v227 = vadd.f32 %v117, %v219
    %228 = vst.msk [vmem:[#allocation2] sm:$0xff] %vm155, %v222
    %229 = vst.msk [vmem:[#allocation2 + $0x8] sm:$0xff] %vm155, %v223
    %230 = vst.msk [vmem:[#allocation2 + $0x10] sm:$0xff] %vm155, %v224
    %231 = vst.msk [vmem:[#allocation2 + $0x18] sm:$0xff] %vm155, %v225
    %232 = vst.msk [vmem:[#allocation2 + $0x20] sm:$0xff] %vm155, %v226
    %233 = vst.msk [vmem:[#allocation2 + $0x28] sm:$0xff] %vm155, %v227
    // Predicated region
    $region54: #{vit_bottleneck_forward.13} parent=1 // pred_check
      %p234 = pneg %p101
    $region55: #{vit_bottleneck_forward.13} parent=1 // pred_check_branch
      %236 = sbr.rel (%p234) target = $region57
    $region56: #{vit_bottleneck_forward.13} parent=1 // pred_region
      %v237 = vld [vmem:[#allocation2] sm:$0xff]
      %v238 = vld [vmem:[#allocation2 + $0x8] sm:$0xff]
      %v239 = vld [vmem:[#allocation2 + $0x10] sm:$0xff]
      %v240 = vld [vmem:[#allocation2 + $0x18] sm:$0xff]
      %v241 = vld [vmem:[#allocation2 + $0x20] sm:$0xff]
      %v242 = vld [vmem:[#allocation2 + $0x28] sm:$0xff]
      %v243 = vld [vmem:[#allocation8] sm:$0x1]
      %v245 = vlaneseq
      %v246 = vshrl.u32 %v245, 7
      %v247 = vsub.s32 0, %v246
      %v248 = vrot.slane %v243, %v247
      %v250 = vadd.f32 %v237, %v248
      %v251 = vadd.f32 %v238, %v248
      %v252 = vadd.f32 %v239, %v248
      %v253 = vadd.f32 %v240, %v248
      %v254 = vadd.f32 %v241, %v248
      %v255 = vadd.f32 %v242, %v248
      %v256 = vld [vmem:[#allocation9] sm:$0xf]
      %v257 = vld [vmem:[#allocation9 + $0x4] sm:$0xf]
      %v258 = vld [vmem:[#allocation9 + $0x8] sm:$0xf]
      %v259 = vld [vmem:[#allocation9 + $0xc] sm:$0xf]
      %v260 = vld [vmem:[#allocation9 + $0x10] sm:$0xf]
      %v261 = vld [vmem:[#allocation9 + $0x14] sm:$0xf]
      %v262 = vunpack.c.l.bf16 %v256
      %v263 = vunpack.c.l.bf16 %v257
      %v264 = vunpack.c.l.bf16 %v258
      %v265 = vunpack.c.l.bf16 %v259
      %v266 = vunpack.c.l.bf16 %v260
      %v267 = vunpack.c.l.bf16 %v261
      %v268 = vadd.f32 %v250, %v262
      %v269 = vadd.f32 %v251, %v263
      %v270 = vadd.f32 %v252, %v264
      %v271 = vadd.f32 %v253, %v265
      %v272 = vadd.f32 %v254, %v266
      %v273 = vadd.f32 %v255, %v267
      %v274 = vsel %vm155, %v268, 0.0
      %275 = vadd.xlane.f32.xlu0 %v274
      %v276 = vpop.xlane.xlu0 %275
      %v277 = vsel %vm155, %v269, 0.0
      %278 = vadd.xlane.f32.xlu0 %v277
      %v279 = vpop.xlane.xlu0 %278
      %v280 = vsel %vm155, %v270, 0.0
      %281 = vadd.xlane.f32.xlu0 %v280
      %v282 = vpop.xlane.xlu0 %281
      %v283 = vsel %vm155, %v271, 0.0
      %284 = vadd.xlane.f32.xlu0 %v283
      %v285 = vpop.xlane.xlu0 %284
      %v286 = vsel %vm155, %v272, 0.0
      %287 = vadd.xlane.f32.xlu0 %v286
      %v288 = vpop.xlane.xlu0 %287
      %v289 = vsel %vm155, %v273, 0.0
      %290 = vadd.xlane.f32.xlu0 %v289
      %v291 = vpop.xlane.xlu0 %290
      %v292 = vrcp.pop 32.0
      %v293 = vmul.f32 %v276, %v292
      %v294 = vmul.f32 %v279, %v292
      %v295 = vmul.f32 %v282, %v292
      %v296 = vmul.f32 %v285, %v292
      %v297 = vmul.f32 %v288, %v292
      %v298 = vmul.f32 %v291, %v292
      %v299 = vsub.f32 %v268, %v293
      %v300 = vsub.f32 %v269, %v294
      %v301 = vsub.f32 %v270, %v295
      %v302 = vsub.f32 %v271, %v296
      %v303 = vsub.f32 %v272, %v297
      %v304 = vsub.f32 %v273, %v298
      %v305 = vmul.f32 %v299, %v299
      %v306 = vmul.f32 %v300, %v300
      %v307 = vmul.f32 %v301, %v301
      %v308 = vmul.f32 %v302, %v302
      %v309 = vmul.f32 %v303, %v303
      %v310 = vmul.f32 %v304, %v304
      %v311 = vsel %vm155, %v305, 0.0
      %312 = vadd.xlane.f32.xlu0 %v311
      %v313 = vpop.xlane.xlu0 %312
      %v314 = vsel %vm155, %v306, 0.0
      %315 = vadd.xlane.f32.xlu0 %v314
      %v316 = vpop.xlane.xlu0 %315
      %v317 = vsel %vm155, %v307, 0.0
      %318 = vadd.xlane.f32.xlu0 %v317
      %v319 = vpop.xlane.xlu0 %318
      %v320 = vsel %vm155, %v308, 0.0
      %321 = vadd.xlane.f32.xlu0 %v320
      %v322 = vpop.xlane.xlu0 %321
      %v323 = vsel %vm155, %v309, 0.0
      %324 = vadd.xlane.f32.xlu0 %v323
      %v325 = vpop.xlane.xlu0 %324
      %v326 = vsel %vm155, %v310, 0.0
      %327 = vadd.xlane.f32.xlu0 %v326
      %v328 = vpop.xlane.xlu0 %327
      %v329 = vmul.f32 %v313, %v292
      %v330 = vmul.f32 %v316, %v292
      %v331 = vmul.f32 %v319, %v292
      %v332 = vmul.f32 %v322, %v292
      %v333 = vmul.f32 %v325, %v292
      %v334 = vmul.f32 %v328, %v292
      %v335 = vadd.f32 %v329, 1e-05
      %v336 = vadd.f32 %v330, 1e-05
      %v337 = vadd.f32 %v331, 1e-05
      %v338 = vadd.f32 %v332, 1e-05
      %v339 = vadd.f32 %v333, 1e-05
      %v340 = vadd.f32 %v334, 1e-05
      %v341 = vrsqrt.pop %v335
      %v342 = vrsqrt.pop %v336
      %v343 = vrsqrt.pop %v337
      %v344 = vrsqrt.pop %v338
      %v345 = vrsqrt.pop %v339
      %v346 = vrsqrt.pop %v340
      %v347 = vmul.f32 %v299, %v341
      %v348 = vmul.f32 %v300, %v342
      %v349 = vmul.f32 %v301, %v343
      %v350 = vmul.f32 %v302, %v344
      %v351 = vmul.f32 %v303, %v345
      %v352 = vmul.f32 %v304, %v346
      %v353 = vld [vmem:[#allocation11] sm:$0x1]
      %v355 = vlaneseq
      %v356 = vshrl.u32 %v355, 7
      %v357 = vsub.s32 0, %v356
      %v358 = vrot.slane %v353, %v357
      %v360 = vmul.f32 %v347, %v358
      %v361 = vmul.f32 %v348, %v358
      %v362 = vmul.f32 %v349, %v358
      %v363 = vmul.f32 %v350, %v358
      %v364 = vmul.f32 %v351, %v358
      %v365 = vmul.f32 %v352, %v358
      %v366 = vld [vmem:[#allocation12] sm:$0x1]
      %v368 = vlaneseq
      %v369 = vshrl.u32 %v368, 7
      %v370 = vsub.s32 0, %v369
      %v371 = vrot.slane %v366, %v370
      %v373 = vadd.f32 %v360, %v371
      %v374 = vadd.f32 %v361, %v371
      %v375 = vadd.f32 %v362, %v371
      %v376 = vadd.f32 %v363, %v371
      %v377 = vadd.f32 %v364, %v371
      %v378 = vadd.f32 %v365, %v371
      %v379 = vpack.c.bf16 %v374, %v373
      %v380 = vpack.c.bf16 %v376, %v375
      %v381 = vpack.c.bf16 %v378, %v377
      %v385 = vunpack.c.l.b16 %v379
      %v386 = vunpack.c.h.b16 %v379
      %v387 = vunpack.c.l.b16 %v380
      %v388 = vunpack.c.h.b16 %v380
      %v389 = vunpack.c.l.b16 %v381
      %v390 = vunpack.c.h.b16 %v381
      %v391 = vpack.c.b16 %v385, %v385
      %v392 = vpack.c.b16 %v386, %v386
      %v393 = vpack.c.b16 %v387, %v387
      %v394 = vpack.c.b16 %v388, %v388
      %v395 = vpack.c.b16 %v389, %v389
      %v396 = vpack.c.b16 %v390, %v390
      %vm403 = vcmask 257024
      %404 = vst.msk [vmem:[#allocation14] sm:$0xf] %vm403, %v391
      %405 = vst.msk [vmem:[#allocation14 + $0x4] sm:$0xf] %vm403, %v392
      %406 = vst.msk [vmem:[#allocation14 + $0x8] sm:$0xf] %vm403, %v393
      %407 = vst.msk [vmem:[#allocation14 + $0xc] sm:$0xf] %vm403, %v394
      %408 = vst.msk [vmem:[#allocation14 + $0x10] sm:$0xf] %vm403, %v395
      %409 = vst.msk [vmem:[#allocation14 + $0x14] sm:$0xf] %vm403, %v396
    $region57: #{vit_bottleneck_forward.13} parent=1 // pred_fallthru
      _
    // Predicated region
    $region58: #{vit_bottleneck_forward.13} parent=1 // pred_check
      _
    $region59: #{vit_bottleneck_forward.13} parent=1 // pred_check_branch
      %411 = sbr.rel (0) target = $region61
    $region60: #{vit_bottleneck_forward.13} parent=1 // pred_region
      %s413 = ssub.s32 384, 384
      %414 = vsyncadd [#allocation5], %s413
      %s415 = sshll.u32 [#allocation14], 4
      %s416 = int_to_ptr.vmem [resolvable:$true] %s415
      %421 = dma.vmem_to_hbm [thread:$0]  %s416, 384, %s6, [#allocation5], 64, 64, 4
    $region61: #{vit_bottleneck_forward.13} parent=1 // pred_fallthru
      _
    // Predicated region
    $region62: #{vit_bottleneck_forward.13} parent=1 // pred_check
      _
    $region63: #{vit_bottleneck_forward.13} parent=1 // pred_check_branch
      %423 = sbr.rel (0) target = $region65
    $region64: #{vit_bottleneck_forward.13} parent=1 // pred_region
      %424 = dma.done [#allocation5], 384
    $region65: #{vit_bottleneck_forward.13} parent=1 // pred_fallthru
      _
    %425 = vsyncpa [#allocation4], 1
    %426 = vsyncpa [#allocation7], 1
    %427 = vsyncpa [#allocation10], 1
    %428 = vsyncpa [#allocation13], 1
    %429 = vsyncpa [#allocation5], 1

// kernel: vit_bottleneck_forward.19
$region0: #{vit_bottleneck_forward.19}
  #allocation0 [shape = 'u32[]', space=smem, size = 0x4, offset = 0x4, fixed_abs, tag = 'smem constant byte address 0x4 - core index']
  #allocation1 [shape = 'u32[144,128]{1,0:T(1,128)}', space=vmem, size = 0x12000, scoped, tag = 'internal scratch']
  #allocation2 [shape = 'f32[32,64]{1,0:T(8,128)}', space=vmem, size = 0x4000, scoped, tag = 'scratch operand']
  %s0 = inlined_call_operand.hbm [shape: bf16[32,32], index: 0, kind: input, shape index: {}]
  %s1 = inlined_call_operand.hbm [shape: bf16[32,64], index: 1, kind: input, shape index: {}]
  %s2 = inlined_call_operand.hbm [shape: f32[1,64], index: 2, kind: input, shape index: {}]
  %s3 = inlined_call_operand.hbm [shape: f32[32,64], index: 3, kind: output, shape index: {}]
  %s4 = sld [smem:[#allocation0]]
  $region42: #{vit_bottleneck_forward.19} parent=0
    _
  %s6 = ssub.s32 1, %s4
  %s7 = scalar_select 0, %s6, %s4
  $region1: #{vit_bottleneck_forward.19} parent=0
    #allocation3 [shape = 'u8[8192]{0}', space=vmem, size = 0x2000, scoped, tag = 'input window, operand 0, single buffered']
    #allocation4 [shape = 's32[1]{0}', space=sflag, size = 0x4, scoped, tag = 'scoped memory for vit_bottleneck_forward.19']
    #allocation5 [shape = 's32[1]{0}', space=sflag, size = 0x4, scoped, tag = 'scoped memory for vit_bottleneck_forward.19']
    #allocation6 [shape = 'u8[8192]{0}', space=vmem, size = 0x2000, scoped, tag = 'input window, operand 1, single buffered']
    #allocation7 [shape = 's32[1]{0}', space=sflag, size = 0x4, scoped, tag = 'scoped memory for vit_bottleneck_forward.19']
    #allocation8 [shape = 'u8[512]{0}', space=vmem, size = 0x400, scoped, tag = 'input window, operand 2, single buffered']
    #allocation9 [shape = 'u8[16384]{0}', space=vmem, size = 0x4000, scoped, tag = 'output window, operand 0, single buffered']
    %8 = vsyncpa [#allocation4], 0
    %9 = vsyncpa [#allocation7], 0
    %10 = vsyncpa [#allocation5], 0
    // Predicated region
    $region2: #{vit_bottleneck_forward.19} parent=1 // pred_check
      _
    $region3: #{vit_bottleneck_forward.19} parent=1 // pred_check_branch
      %12 = sbr.rel (0) target = $region5
    $region4: #{vit_bottleneck_forward.19} parent=1 // pred_region
      %s14 = ssub.s32 256, 256
      %15 = vsyncadd [#allocation4], %s14
      %s16 = sshll.u32 [#allocation3], 4
      %s17 = int_to_ptr.vmem [resolvable:$true] %s16
      %22 = dma.hbm_to_vmem [thread:$0]  %s0, 256, %s17, [#allocation4], 64, 64, 4
    $region5: #{vit_bottleneck_forward.19} parent=1 // pred_fallthru
      _
    // Predicated region
    $region6: #{vit_bottleneck_forward.19} parent=1 // pred_check
      _
    $region7: #{vit_bottleneck_forward.19} parent=1 // pred_check_branch
      %24 = sbr.rel (0) target = $region9
    $region8: #{vit_bottleneck_forward.19} parent=1 // pred_region
      %s26 = ssub.s32 256, 256
      %27 = vsyncadd [#allocation7], %s26
      %s28 = sshll.u32 [#allocation6], 4
      %s29 = int_to_ptr.vmem [resolvable:$true] %s28
      %34 = dma.hbm_to_vmem [thread:$0]  %s1, 256, %s29, [#allocation7], 64, 64, 4
    $region9: #{vit_bottleneck_forward.19} parent=1 // pred_fallthru
      _
    // Predicated region
    $region10: #{vit_bottleneck_forward.19} parent=1 // pred_check
      _
    $region11: #{vit_bottleneck_forward.19} parent=1 // pred_check_branch
      %36 = sbr.rel (0) target = $region13
    $region12: #{vit_bottleneck_forward.19} parent=1 // pred_region
      %s38 = ssub.s32 16, 16
      %39 = vsyncadd [#allocation7], %s38
      %s41 = sshll.u32 [#allocation8], 4
      %s42 = int_to_ptr.vmem [resolvable:$true] %s41
      %44 = dma.hbm_to_vmem [thread:$0]  %s2, 16, %s42, [#allocation7]
    $region13: #{vit_bottleneck_forward.19} parent=1 // pred_fallthru
      _
    // Predicated region
    $region14: #{vit_bottleneck_forward.19} parent=1 // pred_check
      _
    $region15: #{vit_bottleneck_forward.19} parent=1 // pred_check_branch
      %46 = sbr.rel (0) target = $region17
    $region16: #{vit_bottleneck_forward.19} parent=1 // pred_region
      %47 = dma.done [#allocation4], 256
    $region17: #{vit_bottleneck_forward.19} parent=1 // pred_fallthru
      _
    // Predicated region
    $region18: #{vit_bottleneck_forward.19} parent=1 // pred_check
      _
    $region19: #{vit_bottleneck_forward.19} parent=1 // pred_check_branch
      %49 = sbr.rel (0) target = $region21
    $region20: #{vit_bottleneck_forward.19} parent=1 // pred_region
      %50 = dma.done [#allocation7], 256
    $region21: #{vit_bottleneck_forward.19} parent=1 // pred_fallthru
      _
    // Predicated region
    $region22: #{vit_bottleneck_forward.19} parent=1 // pred_check
      _
    $region23: #{vit_bottleneck_forward.19} parent=1 // pred_check_branch
      %52 = sbr.rel (0) target = $region25
    $region24: #{vit_bottleneck_forward.19} parent=1 // pred_region
      %53 = dma.done [#allocation7], 16
    $region25: #{vit_bottleneck_forward.19} parent=1 // pred_fallthru
      _
    %p55 = scmp.eq.s32.totalorder 0, 0
    // Predicated region
    $region26: #{vit_bottleneck_forward.19} parent=1 // pred_check
      %p56 = pneg %p55
    $region27: #{vit_bottleneck_forward.19} parent=1 // pred_check_branch
      %58 = sbr.rel (%p56) target = $region29
    $region28: #{vit_bottleneck_forward.19} parent=1 // pred_region
      %vm59 = vcmask 523264
      %60 = vst.msk [vmem:[#allocation2] sm:$0xff] %vm59, 0.0
      %61 = vst.msk [vmem:[#allocation2 + $0x8] sm:$0xff] %vm59, 0.0
      %62 = vst.msk [vmem:[#allocation2 + $0x10] sm:$0xff] %vm59, 0.0
      %63 = vst.msk [vmem:[#allocation2 + $0x18] sm:$0xff] %vm59, 0.0
    $region29: #{vit_bottleneck_forward.19} parent=1 // pred_fallthru
      _
    %v64 = vld [vmem:[#allocation2] sm:$0xff]
    %v65 = vld [vmem:[#allocation2 + $0x8] sm:$0xff]
    %v66 = vld [vmem:[#allocation2 + $0x10] sm:$0xff]
    %v67 = vld [vmem:[#allocation2 + $0x18] sm:$0xff]
    %v68 = vld [vmem:[#allocation3] sm:$0xf]
    %v69 = vld [vmem:[#allocation3 + $0x4] sm:$0xf]
    %v70 = vld [vmem:[#allocation3 + $0x8] sm:$0xf]
    %v71 = vld [vmem:[#allocation3 + $0xc] sm:$0xf]
    %v72 = vld [vmem:[#allocation6] sm:$0xf]
    %v73 = vld [vmem:[#allocation6 + $0x4] sm:$0xf]
    %v74 = vld [vmem:[#allocation6 + $0x8] sm:$0xf]
    %v75 = vld [vmem:[#allocation6 + $0xc] sm:$0xf]
    %v80 = vunpack.c.l.b16 %v68
    %v81 = vunpack.c.l.b16 %v69
    %v82 = vunpack.c.l.b16 %v70
    %v83 = vunpack.c.l.b16 %v71
    %v84 = vpack.c.b16 %v81, %v80
    %v85 = vpack.c.b16 %v83, %v82
    %v90 = vunpack.c.l.b16 %v72
    %v91 = vunpack.c.l.b16 %v73
    %v92 = vunpack.c.l.b16 %v74
    %v93 = vunpack.c.l.b16 %v75
    %v94 = vpack.c.b16 %v91, %v90
    %v95 = vpack.c.b16 %v93, %v92
    %vm98 = vcmask 261120
    %v100 = vsel %vm98, %v84, 0
    %v103 = vsel %vm98, %v85, 0
    %105 = vmatprep.subr.bf16.mxu0 0
    %106 = vmatpush1.bf16.msra.mxu0 %v94
    %107 = vmatprep.subr.bf16.mxu0 0
    %108 = vmatpush1.bf16.msra.mxu0 %v95
    %109 = vmatprep.subr.bf16.mxu0 0
    %110 = vmatpush1.bf16.msra.mxu0 0
    %111 = vmatprep.subr.bf16.mxu0 0
    %112 = vmatpush1.bf16.msra.mxu0 0
    %113 = vmatprep.subr.bf16.mxu0 0
    %114 = vmatpush1.bf16.msra.mxu0 0
    %115 = vmatprep.subr.bf16.mxu0 0
    %116 = vmatpush1.bf16.msra.mxu0 0
    %117 = vmatprep.subr.bf16.mxu0 0
    %118 = vmatpush1.bf16.msra.mxu0 0
    %119 = vmatprep.subr.bf16.mxu0 0
    %120 = vmatpush1.bf16.msra.mxu0 0
    %121 = vmatprep.subr.bf16.mxu0 0
    %122 = vmatpush1.bf16.msra.mxu0 0
    %123 = vmatprep.subr.bf16.mxu0 0
    %124 = vmatpush1.bf16.msra.mxu0 0
    %125 = vmatprep.subr.bf16.mxu0 0
    %126 = vmatpush1.bf16.msra.mxu0 0
    %127 = vmatprep.subr.bf16.mxu0 0
    %128 = vmatpush1.bf16.msra.mxu0 0
    %129 = vmatprep.subr.bf16.mxu0 0
    %130 = vmatpush1.bf16.msra.mxu0 0
    %131 = vmatprep.subr.bf16.mxu0 0
    %132 = vmatpush1.bf16.msra.mxu0 0
    %133 = vmatprep.subr.bf16.mxu0 0
    %134 = vmatpush1.bf16.msra.mxu0 0
    %135 = vmatprep.subr.bf16.mxu0 0
    %136 = vmatpush1.bf16.msra.mxu0 0
    %137 = vmatprep.mubr.bf16.mxu0 0
    %138 = vmatmul.mubr.bf16.gmra.mrb[0].mxu0 %v100
    %v139 = vpop.f32.mrb[0].mxu0
    %v140 = vadd.f32 0.0, %v139
    %v141 = vpop.f32.mrb[0].mxu0
    %v142 = vpop.f32.mrb[0].mxu0
    %v143 = vadd.f32 0.0, %v142
    %v144 = vpop.f32.mrb[0].mxu0
    %145 = vmatprep.mubr.bf16.mxu0 0
    %146 = vmatmul.mubr.bf16.gmra.mrb[0].mxu0 %v103
    %v147 = vpop.f32.mrb[0].mxu0
    %v148 = vadd.f32 0.0, %v147
    %v149 = vpop.f32.mrb[0].mxu0
    %v150 = vpop.f32.mrb[0].mxu0
    %v151 = vadd.f32 0.0, %v150
    %v152 = vpop.f32.mrb[0].mxu0
    %153 = vdwg.mxu0
    %v154 = vadd.f32 %v64, %v140
    %v155 = vadd.f32 %v65, %v143
    %v156 = vadd.f32 %v66, %v148
    %v157 = vadd.f32 %v67, %v151
    %vm158 = vcmask 523264
    %159 = vst.msk [vmem:[#allocation2] sm:$0xff] %vm158, %v154
    %160 = vst.msk [vmem:[#allocation2 + $0x8] sm:$0xff] %vm158, %v155
    %161 = vst.msk [vmem:[#allocation2 + $0x10] sm:$0xff] %vm158, %v156
    %162 = vst.msk [vmem:[#allocation2 + $0x18] sm:$0xff] %vm158, %v157
    // Predicated region
    $region30: #{vit_bottleneck_forward.19} parent=1 // pred_check
      %p163 = pneg %p55
    $region31: #{vit_bottleneck_forward.19} parent=1 // pred_check_branch
      %165 = sbr.rel (%p163) target = $region33
    $region32: #{vit_bottleneck_forward.19} parent=1 // pred_region
      %v166 = vld [vmem:[#allocation2] sm:$0xff]
      %v167 = vld [vmem:[#allocation2 + $0x8] sm:$0xff]
      %v168 = vld [vmem:[#allocation2 + $0x10] sm:$0xff]
      %v169 = vld [vmem:[#allocation2 + $0x18] sm:$0xff]
      %v170 = vld [vmem:[#allocation8] sm:$0x1]
      %v172 = vlaneseq
      %v173 = vshrl.u32 %v172, 7
      %v174 = vsub.s32 0, %v173
      %v175 = vrot.slane %v170, %v174
      %v177 = vadd.f32 %v166, %v175
      %v178 = vadd.f32 %v167, %v175
      %v179 = vadd.f32 %v168, %v175
      %v180 = vadd.f32 %v169, %v175
      %181 = vst.msk [vmem:[#allocation9] sm:$0xff] %vm158, %v177
      %182 = vst.msk [vmem:[#allocation9 + $0x8] sm:$0xff] %vm158, %v178
      %183 = vst.msk [vmem:[#allocation9 + $0x10] sm:$0xff] %vm158, %v179
      %184 = vst.msk [vmem:[#allocation9 + $0x18] sm:$0xff] %vm158, %v180
    $region33: #{vit_bottleneck_forward.19} parent=1 // pred_fallthru
      _
    // Predicated region
    $region34: #{vit_bottleneck_forward.19} parent=1 // pred_check
      _
    $region35: #{vit_bottleneck_forward.19} parent=1 // pred_check_branch
      %186 = sbr.rel (0) target = $region37
    $region36: #{vit_bottleneck_forward.19} parent=1 // pred_region
      %s188 = ssub.s32 512, 512
      %189 = vsyncadd [#allocation5], %s188
      %s190 = sshll.u32 [#allocation9], 4
      %s191 = int_to_ptr.vmem [resolvable:$true] %s190
      %196 = dma.vmem_to_hbm [thread:$0]  %s191, 512, %s3, [#allocation5], 128, 128, 8
    $region37: #{vit_bottleneck_forward.19} parent=1 // pred_fallthru
      _
    // Predicated region
    $region38: #{vit_bottleneck_forward.19} parent=1 // pred_check
      _
    $region39: #{vit_bottleneck_forward.19} parent=1 // pred_check_branch
      %198 = sbr.rel (0) target = $region41
    $region40: #{vit_bottleneck_forward.19} parent=1 // pred_region
      %199 = dma.done [#allocation5], 512
    $region41: #{vit_bottleneck_forward.19} parent=1 // pred_fallthru
      _
    %200 = vsyncpa [#allocation4], 1
    %201 = vsyncpa [#allocation7], 1
    %202 = vsyncpa [#allocation5], 1

</llo_original>
